<compile_context>
chip_gen: v7x
topology: tpu7x:2x2x1
jax: 0.10.0
libtpu: 0.0.40
codegen_flags: <defaults>
</compile_context>

<pallas_src>
import functools
import math

import jax
import jax.numpy as jnp
from jax import lax
from jax.experimental import pallas as pl
from jax.experimental.pallas import tpu as pltpu

LN_EPS = 1e-5  # torch.nn.LayerNorm default eps


# ----------------------------- in-kernel helpers -----------------------------

def _layernorm(x, gamma, beta):
    # x: (T, C) f32; gamma/beta: (1, C) f32
    mean = jnp.mean(x, axis=-1, keepdims=True)
    var = jnp.mean(jnp.square(x - mean), axis=-1, keepdims=True)
    return (x - mean) * lax.rsqrt(var + LN_EPS) * gamma + beta


def _gelu_exact(x):
    # matches torch.nn.functional.gelu (approximate='none'): 0.5*x*(1+erf(x/sqrt(2)))
    return 0.5 * x * (1.0 + lax.erf(x * (1.0 / math.sqrt(2.0))))


def _mha(q_rows, kv_rows, wq_t, wk_t, wv_t, wo_t, bo, ctx_scr, *,
         num_heads, head_dim):
    """Multi-head attention of q_rows (TQ,H) against kv_rows (S,Ckv).

    Returns (TQ, H) f32 = softmax(QK^T/sqrt(D)) V @ Wo + bo.
    All matmuls use bf16 operands with f32 accumulation; weights come in
    pre-transposed.  Per-head contexts are written into the (TQ, E) VMEM
    scratch `ctx_scr` and projected with a single full-width Wo matmul.
    """
    bf16 = jnp.bfloat16
    scale = 1.0 / math.sqrt(head_dim)

    # QKV projections: one wide matmul each (K = hidden / context_dim).
    q = jnp.dot((q_rows * scale).astype(bf16), wq_t,
                preferred_element_type=jnp.float32)           # (TQ, E)
    k = jnp.dot(kv_rows.astype(bf16), wk_t,
                preferred_element_type=jnp.float32)           # (S, E)
    v = jnp.dot(kv_rows.astype(bf16), wv_t,
                preferred_element_type=jnp.float32)           # (S, E)
    q16, k16, v16 = q.astype(bf16), k.astype(bf16), v.astype(bf16)

    for h in range(num_heads):                                # static unroll
        sl = slice(h * head_dim, (h + 1) * head_dim)
        # scores = q_h @ k_h^T  (contraction over head_dim, no explicit .T)
        s = lax.dot_general(q16[:, sl], k16[:, sl],
                            dimension_numbers=(((1,), (1,)), ((), ())),
                            preferred_element_type=jnp.float32)   # (TQ, S)
        m = jnp.max(s, axis=-1, keepdims=True)
        p = jnp.exp(s - m)                                        # unnormalized
        l = jnp.sum(p, axis=-1, keepdims=True)
        ch = jnp.dot(p.astype(bf16), v16[:, sl],
                     preferred_element_type=jnp.float32)          # (TQ, D)
        # normalize AFTER p@v (TQ*D elems, EUP reciprocal) and stash per-head.
        ctx_scr[:, sl] = ch * pl.reciprocal(l, approx=True)

    # single fused output projection over the full E contraction
    out = jnp.dot(ctx_scr[...].astype(bf16), wo_t,
                  preferred_element_type=jnp.float32)             # (TQ, H)
    return out + bo


# ------------------------------ fused block kernel ----------------------------

def _tblock_kernel(xq_ref, xf_ref, c_ref,
                   g1_ref, be1_ref, wq1_ref, wk1_ref, wv1_ref, wo1_ref, bo1_ref,
                   g2_ref, be2_ref, wq2_ref, wk2_ref, wv2_ref, wo2_ref, bo2_ref,
                   g3_ref, be3_ref, w1_ref, b1_ref, w2_ref, b2_ref,
                   o_ref, ctx_scr, *, num_heads, head_dim, ff_inner):
    bf16 = jnp.bfloat16
    x = xq_ref[0]           # (TQ, H)  query-tile rows of the activation
    x_full = xf_ref[0]      # (T,  H)  full sequence (self-attn keys/values)
    context = c_ref[0]      # (S,  Cc) cross-attention context

    # ---- 1) self-attention: x = attn1(norm1(x)) + x -------------------------
    qn = _layernorm(x, g1_ref[...], be1_ref[...])
    kvn = _layernorm(x_full, g1_ref[...], be1_ref[...])
    x = x + _mha(qn, kvn, wq1_ref[...], wk1_ref[...], wv1_ref[...], wo1_ref[...],
                 bo1_ref[...], ctx_scr, num_heads=num_heads, head_dim=head_dim)

    # ---- 2) cross-attention: x = attn2(norm2(x), context) + x ---------------
    qn = _layernorm(x, g2_ref[...], be2_ref[...])
    x = x + _mha(qn, context, wq2_ref[...], wk2_ref[...], wv2_ref[...], wo2_ref[...],
                 bo2_ref[...], ctx_scr, num_heads=num_heads, head_dim=head_dim)

    # ---- 3) feed-forward GEGLU: x = ff(norm3(x)) + x -------------------------
    xn = _layernorm(x, g3_ref[...], be3_ref[...])
    h = jnp.dot(xn.astype(bf16), w1_ref[...],
                preferred_element_type=jnp.float32) + b1_ref[...]   # (TQ, 2M)
    a = h[:, :ff_inner]
    gates = h[:, ff_inner:]
    y = a * _gelu_exact(gates)                                       # GEGLU
    x = x + jnp.dot(y.astype(bf16), w2_ref[...],
                    preferred_element_type=jnp.float32) + b2_ref[...]

    o_ref[0] = x


def _const_spec(arr):
    """Full-array block with a constant index map (params resident in VMEM)."""
    nd = arr.ndim
    return pl.BlockSpec(arr.shape, lambda b, t, _nd=nd: (0,) * _nd)


def transformer_block(x, context, P, *, num_heads, q_tile=128):
    """x = attn1(norm1(x)) + x; x = attn2(norm2(x), ctx) + x; x = ff(norm3(x)) + x."""
    B, T, H = x.shape
    S, Cc = context.shape[1], context.shape[2]
    E = P["a1_wq"].shape[0]                 # embed_dim (== hidden in this module)
    head_dim = E // num_heads
    M = P["ff_w2"].shape[1]                 # GEGLU inner dim
    TQ = min(q_tile, T)
    assert T % TQ == 0, "sequence length must be divisible by the query tile"

    bf16 = jnp.bfloat16
    f32 = jnp.float32
    # Pre-transpose weights (and cast to bf16) on the host: kernel does x @ w.
    params = [
        P["g1"].reshape(1, -1).astype(f32), P["be1"].reshape(1, -1).astype(f32),
        P["a1_wq"].T.astype(bf16), P["a1_wk"].T.astype(bf16),
        P["a1_wv"].T.astype(bf16), P["a1_wo"].T.astype(bf16),
        P["a1_bo"].reshape(1, -1).astype(f32),
        P["g2"].reshape(1, -1).astype(f32), P["be2"].reshape(1, -1).astype(f32),
        P["a2_wq"].T.astype(bf16), P["a2_wk"].T.astype(bf16),
        P["a2_wv"].T.astype(bf16), P["a2_wo"].T.astype(bf16),
        P["a2_bo"].reshape(1, -1).astype(f32),
        P["g3"].reshape(1, -1).astype(f32), P["be3"].reshape(1, -1).astype(f32),
        P["ff_w1"].T.astype(bf16), P["ff_b1"].reshape(1, -1).astype(f32),
        P["ff_w2"].T.astype(bf16), P["ff_b2"].reshape(1, -1).astype(f32),
    ]

    in_specs = [
        pl.BlockSpec((1, TQ, H), lambda b, t: (b, t, 0)),   # query tile of x
        pl.BlockSpec((1, T, H), lambda b, t: (b, 0, 0)),    # full x (self-attn KV)
        pl.BlockSpec((1, S, Cc), lambda b, t: (b, 0, 0)),   # cross-attn context
    ] + [_const_spec(p) for p in params]

    kernel = functools.partial(_tblock_kernel, num_heads=num_heads,
                               head_dim=head_dim, ff_inner=M)

    return pl.pallas_call(
        kernel,
        out_shape=jax.ShapeDtypeStruct((B, T, H), jnp.float32),
        grid=(B, T // TQ),
        in_specs=in_specs,
        out_specs=pl.BlockSpec((1, TQ, H), lambda b, t: (b, t, 0)),
        scratch_shapes=[pltpu.VMEM((TQ, E), jnp.float32)],   # per-head ctx buffer
        compiler_params=pltpu.CompilerParams(
            dimension_semantics=("parallel", "parallel"),
            vmem_limit_bytes=48 * 1024 * 1024),
    )(x, x, context, *params)


# ----------------------------- plain-JAX reference ----------------------------

def _ref_ln(x, g, b):
    mean = jnp.mean(x, axis=-1, keepdims=True)
    var = jnp.mean(jnp.square(x - mean), axis=-1, keepdims=True)
    return (x - mean) / jnp.sqrt(var + LN_EPS) * g + b


def _ref_attn(tokens, context, wq, wk, wv, wo, bo, num_heads):
    kv = tokens if context is None else context
    Q = tokens @ wq.T
    K = kv @ wk.T
    V = kv @ wv.T
    B, T, E = Q.shape
    D = E // num_heads

    def split(z):
        return z.reshape(z.shape[0], z.shape[1], num_heads, D).transpose(0, 2, 1, 3)

    q, k, v = split(Q), split(K), split(V)
    s = jnp.einsum("bhtd,bhsd->bhts", q, k) / math.sqrt(D)
    a = jax.nn.softmax(s, axis=-1)
    c = jnp.einsum("bhts,bhsd->bhtd", a, v)
    c = c.transpose(0, 2, 1, 3).reshape(B, T, E)
    return c @ wo.T + bo


def _ref_block(x, context, P, num_heads):
    x = _ref_attn(_ref_ln(x, P["g1"], P["be1"]), None,
                  P["a1_wq"], P["a1_wk"], P["a1_wv"], P["a1_wo"], P["a1_bo"],
                  num_heads) + x
    x = _ref_attn(_ref_ln(x, P["g2"], P["be2"]), context,
                  P["a2_wq"], P["a2_wk"], P["a2_wv"], P["a2_wo"], P["a2_bo"],
                  num_heads) + x
    xn = _ref_ln(x, P["g3"], P["be3"])
    h = xn @ P["ff_w1"].T + P["ff_b1"]
    m = P["ff_w2"].shape[1]
    geglu = h[..., :m] * (0.5 * h[..., m:] * (1.0 + lax.erf(h[..., m:] / math.sqrt(2.0))))
    x = (geglu @ P["ff_w2"].T + P["ff_b2"]) + x
    return x


# --------------------------------- params --------------------------------------

def _linear_w(key, out_f, in_f):
    bound = 1.0 / math.sqrt(in_f)
    return jax.random.uniform(key, (out_f, in_f), jnp.float32, -bound, bound)


def _linear_b(key, out_f, in_f):
    bound = 1.0 / math.sqrt(in_f)
    return jax.random.uniform(key, (out_f,), jnp.float32, -bound, bound)


def init_params(key, hidden, context_dim, mult=4):
    ks = jax.random.split(key, 16)
    M = mult * hidden
    P = {
        # attn1 (self): q,k,v,o all hidden->hidden
        "a1_wq": _linear_w(ks[0], hidden, hidden),
        "a1_wk": _linear_w(ks[1], hidden, hidden),
        "a1_wv": _linear_w(ks[2], hidden, hidden),
        "a1_wo": _linear_w(ks[3], hidden, hidden),
        "a1_bo": _linear_b(ks[4], hidden, hidden),
        # attn2 (cross): k,v take context_dim
        "a2_wq": _linear_w(ks[5], hidden, hidden),
        "a2_wk": _linear_w(ks[6], hidden, context_dim),
        "a2_wv": _linear_w(ks[7], hidden, context_dim),
        "a2_wo": _linear_w(ks[8], hidden, hidden),
        "a2_bo": _linear_b(ks[9], hidden, hidden),
        # layer norms (torch default affine init)
        "g1": jnp.ones((hidden,), jnp.float32), "be1": jnp.zeros((hidden,), jnp.float32),
        "g2": jnp.ones((hidden,), jnp.float32), "be2": jnp.zeros((hidden,), jnp.float32),
        "g3": jnp.ones((hidden,), jnp.float32), "be3": jnp.zeros((hidden,), jnp.float32),
        # feed-forward GEGLU: Linear(hidden, 2*M) then Linear(M, hidden)
        "ff_w1": _linear_w(ks[10], 2 * M, hidden),
        "ff_b1": _linear_b(ks[11], 2 * M, hidden),
        "ff_w2": _linear_w(ks[12], hidden, M),
        "ff_b2": _linear_b(ks[13], hidden, M),
    }
    return P


# ---------------------------------- main ----------------------------------------

if __name__ == "__main__":
    B, T, S = 2, 8, 8
    hidden, context_dim, num_heads = 32, 16, 8

    key = jax.random.PRNGKey(0)
    k_p, k_x, k_c = jax.random.split(key, 3)
    P = init_params(k_p, hidden, context_dim)
    x = jax.random.normal(k_x, (B, T, hidden), jnp.float32)
    context = jax.random.normal(k_c, (B, S, context_dim), jnp.float32)

    out = transformer_block(x, context, P, num_heads=num_heads)
    out = jax.block_until_ready(out)

    ref = _ref_block(x, context, P, num_heads)
    assert out.shape == (B, T, hidden)
    max_err = float(jnp.max(jnp.abs(out - ref)))
    # kernel runs bf16 MXU inputs with f32 accumulation -> tolerance accounts
    # for bf16 rounding vs the pure-f32 reference.
    if not bool(jnp.allclose(out, ref, atol=5e-2, rtol=5e-2)):
        raise AssertionError(f"Pallas kernel mismatch vs reference, max|err|={max_err}")

    print("KERNEL_OK")
</pallas_src>

<mosaic_0001>
module attributes {stable_mosaic.version = 11 : i64} {
  func.func @_tblock_kernel(%arg0: i32, %arg1: i32, %arg2: memref<1x8x32xf32, #tpu.memory_space<vmem>>, %arg3: memref<1x8x32xf32, #tpu.memory_space<vmem>>, %arg4: memref<1x8x16xf32, #tpu.memory_space<vmem>>, %arg5: memref<1x32xf32, #tpu.memory_space<vmem>>, %arg6: memref<1x32xf32, #tpu.memory_space<vmem>>, %arg7: memref<32x32xbf16, #tpu.memory_space<vmem>>, %arg8: memref<32x32xbf16, #tpu.memory_space<vmem>>, %arg9: memref<32x32xbf16, #tpu.memory_space<vmem>>, %arg10: memref<32x32xbf16, #tpu.memory_space<vmem>>, %arg11: memref<1x32xf32, #tpu.memory_space<vmem>>, %arg12: memref<1x32xf32, #tpu.memory_space<vmem>>, %arg13: memref<1x32xf32, #tpu.memory_space<vmem>>, %arg14: memref<32x32xbf16, #tpu.memory_space<vmem>>, %arg15: memref<16x32xbf16, #tpu.memory_space<vmem>>, %arg16: memref<16x32xbf16, #tpu.memory_space<vmem>>, %arg17: memref<32x32xbf16, #tpu.memory_space<vmem>>, %arg18: memref<1x32xf32, #tpu.memory_space<vmem>>, %arg19: memref<1x32xf32, #tpu.memory_space<vmem>>, %arg20: memref<1x32xf32, #tpu.memory_space<vmem>>, %arg21: memref<32x256xbf16, #tpu.memory_space<vmem>>, %arg22: memref<1x256xf32, #tpu.memory_space<vmem>>, %arg23: memref<128x32xbf16, #tpu.memory_space<vmem>>, %arg24: memref<1x32xf32, #tpu.memory_space<vmem>>, %arg25: memref<1x8x32xf32, #tpu.memory_space<vmem>>, %arg26: memref<8x32xf32, #tpu.memory_space<vmem>>) attributes {dimension_semantics = [#tpu.dimension_semantics<parallel>, #tpu.dimension_semantics<parallel>], iteration_bounds = array<i64: 2, 1>, scalar_prefetch = 0 : i64, scratch_operands = 1 : i64, tpu.core_type = #tpu.core_type<tc>, window_params = [{transform_indices = @transform_0, window_bounds = array<i64: 1, 8, 32>}, {transform_indices = @transform_1, window_bounds = array<i64: 1, 8, 32>}, {transform_indices = @transform_2, window_bounds = array<i64: 1, 8, 16>}, {pipeline_mode = #tpu.pipeline_mode<synchronous>, transform_indices = @transform_3, window_bounds = array<i64: 1, 32>}, {pipeline_mode = #tpu.pipeline_mode<synchronous>, transform_indices = @transform_4, window_bounds = array<i64: 1, 32>}, {pipeline_mode = #tpu.pipeline_mode<synchronous>, transform_indices = @transform_5, window_bounds = array<i64: 32, 32>}, {pipeline_mode = #tpu.pipeline_mode<synchronous>, transform_indices = @transform_6, window_bounds = array<i64: 32, 32>}, {pipeline_mode = #tpu.pipeline_mode<synchronous>, transform_indices = @transform_7, window_bounds = array<i64: 32, 32>}, {pipeline_mode = #tpu.pipeline_mode<synchronous>, transform_indices = @transform_8, window_bounds = array<i64: 32, 32>}, {pipeline_mode = #tpu.pipeline_mode<synchronous>, transform_indices = @transform_9, window_bounds = array<i64: 1, 32>}, {pipeline_mode = #tpu.pipeline_mode<synchronous>, transform_indices = @transform_10, window_bounds = array<i64: 1, 32>}, {pipeline_mode = #tpu.pipeline_mode<synchronous>, transform_indices = @transform_11, window_bounds = array<i64: 1, 32>}, {pipeline_mode = #tpu.pipeline_mode<synchronous>, transform_indices = @transform_12, window_bounds = array<i64: 32, 32>}, {pipeline_mode = #tpu.pipeline_mode<synchronous>, transform_indices = @transform_13, window_bounds = array<i64: 16, 32>}, {pipeline_mode = #tpu.pipeline_mode<synchronous>, transform_indices = @transform_14, window_bounds = array<i64: 16, 32>}, {pipeline_mode = #tpu.pipeline_mode<synchronous>, transform_indices = @transform_15, window_bounds = array<i64: 32, 32>}, {pipeline_mode = #tpu.pipeline_mode<synchronous>, transform_indices = @transform_16, window_bounds = array<i64: 1, 32>}, {pipeline_mode = #tpu.pipeline_mode<synchronous>, transform_indices = @transform_17, window_bounds = array<i64: 1, 32>}, {pipeline_mode = #tpu.pipeline_mode<synchronous>, transform_indices = @transform_18, window_bounds = array<i64: 1, 32>}, {pipeline_mode = #tpu.pipeline_mode<synchronous>, transform_indices = @transform_19, window_bounds = array<i64: 32, 256>}, {pipeline_mode = #tpu.pipeline_mode<synchronous>, transform_indices = @transform_20, window_bounds = array<i64: 1, 256>}, {pipeline_mode = #tpu.pipeline_mode<synchronous>, transform_indices = @transform_21, window_bounds = array<i64: 128, 32>}, {pipeline_mode = #tpu.pipeline_mode<synchronous>, transform_indices = @transform_22, window_bounds = array<i64: 1, 32>}, {transform_indices = @transform_23, window_bounds = array<i64: 1, 8, 32>}]} {
    %c0 = arith.constant 0 : index
    %c0_0 = arith.constant 0 : index
    %c0_1 = arith.constant 0 : index
    %0 = vector.load %arg2[%c0, %c0_0, %c0_1] : memref<1x8x32xf32, #tpu.memory_space<vmem>>, vector<1x8x32xf32>
    %1 = vector.shape_cast %0 : vector<1x8x32xf32> to vector<8x32xf32>
    %c0_2 = arith.constant 0 : index
    %c0_3 = arith.constant 0 : index
    %c0_4 = arith.constant 0 : index
    %2 = vector.load %arg3[%c0_2, %c0_3, %c0_4] : memref<1x8x32xf32, #tpu.memory_space<vmem>>, vector<1x8x32xf32>
    %3 = vector.shape_cast %2 : vector<1x8x32xf32> to vector<8x32xf32>
    %c0_5 = arith.constant 0 : index
    %c0_6 = arith.constant 0 : index
    %c0_7 = arith.constant 0 : index
    %4 = vector.load %arg4[%c0_5, %c0_6, %c0_7] : memref<1x8x16xf32, #tpu.memory_space<vmem>>, vector<1x8x16xf32>
    %5 = vector.shape_cast %4 : vector<1x8x16xf32> to vector<8x16xf32>
    %c0_8 = arith.constant 0 : index
    %c0_9 = arith.constant 0 : index
    %6 = vector.load %arg5[%c0_8, %c0_9] : memref<1x32xf32, #tpu.memory_space<vmem>>, vector<1x32xf32>
    %c0_10 = arith.constant 0 : index
    %c0_11 = arith.constant 0 : index
    %7 = vector.load %arg6[%c0_10, %c0_11] : memref<1x32xf32, #tpu.memory_space<vmem>>, vector<1x32xf32>
    %cst = arith.constant dense<0.000000e+00> : vector<8xf32>
    %8 = vector.multi_reduction <add>, %1, %cst [1] : vector<8x32xf32> to vector<8xf32>
    %9 = vector.shape_cast %8 : vector<8xf32> to vector<8x1xf32>
    %cst_12 = arith.constant 3.200000e+01 : f32
    %10 = vector.broadcast %cst_12 : f32 to vector<8x1xf32>
    %11 = arith.divf %9, %10 : vector<8x1xf32>
    %12 = vector.broadcast %11 : vector<8x1xf32> to vector<8x32xf32>
    %13 = arith.subf %1, %12 : vector<8x32xf32>
    %14 = arith.mulf %13, %13 : vector<8x32xf32>
    %cst_13 = arith.constant dense<0.000000e+00> : vector<8xf32>
    %15 = vector.multi_reduction <add>, %14, %cst_13 [1] : vector<8x32xf32> to vector<8xf32>
    %16 = vector.shape_cast %15 : vector<8xf32> to vector<8x1xf32>
    %cst_14 = arith.constant 3.200000e+01 : f32
    %17 = vector.broadcast %cst_14 : f32 to vector<8x1xf32>
    %18 = arith.divf %16, %17 : vector<8x1xf32>
    %19 = vector.broadcast %11 : vector<8x1xf32> to vector<8x32xf32>
    %20 = arith.subf %1, %19 : vector<8x32xf32>
    %cst_15 = arith.constant 9.99999974E-6 : f32
    %21 = vector.broadcast %cst_15 : f32 to vector<8x1xf32>
    %22 = arith.addf %18, %21 : vector<8x1xf32>
    %23 = math.rsqrt %22 : vector<8x1xf32>
    %24 = vector.broadcast %23 : vector<8x1xf32> to vector<8x32xf32>
    %25 = arith.mulf %20, %24 : vector<8x32xf32>
    %26 = vector.broadcast %6 : vector<1x32xf32> to vector<8x32xf32>
    %27 = arith.mulf %25, %26 : vector<8x32xf32>
    %28 = vector.broadcast %7 : vector<1x32xf32> to vector<8x32xf32>
    %29 = arith.addf %27, %28 : vector<8x32xf32>
    %c0_16 = arith.constant 0 : index
    %c0_17 = arith.constant 0 : index
    %30 = vector.load %arg5[%c0_16, %c0_17] : memref<1x32xf32, #tpu.memory_space<vmem>>, vector<1x32xf32>
    %c0_18 = arith.constant 0 : index
    %c0_19 = arith.constant 0 : index
    %31 = vector.load %arg6[%c0_18, %c0_19] : memref<1x32xf32, #tpu.memory_space<vmem>>, vector<1x32xf32>
    %cst_20 = arith.constant dense<0.000000e+00> : vector<8xf32>
    %32 = vector.multi_reduction <add>, %3, %cst_20 [1] : vector<8x32xf32> to vector<8xf32>
    %33 = vector.shape_cast %32 : vector<8xf32> to vector<8x1xf32>
    %cst_21 = arith.constant 3.200000e+01 : f32
    %34 = vector.broadcast %cst_21 : f32 to vector<8x1xf32>
    %35 = arith.divf %33, %34 : vector<8x1xf32>
    %36 = vector.broadcast %35 : vector<8x1xf32> to vector<8x32xf32>
    %37 = arith.subf %3, %36 : vector<8x32xf32>
    %38 = arith.mulf %37, %37 : vector<8x32xf32>
    %cst_22 = arith.constant dense<0.000000e+00> : vector<8xf32>
    %39 = vector.multi_reduction <add>, %38, %cst_22 [1] : vector<8x32xf32> to vector<8xf32>
    %40 = vector.shape_cast %39 : vector<8xf32> to vector<8x1xf32>
    %cst_23 = arith.constant 3.200000e+01 : f32
    %41 = vector.broadcast %cst_23 : f32 to vector<8x1xf32>
    %42 = arith.divf %40, %41 : vector<8x1xf32>
    %43 = vector.broadcast %35 : vector<8x1xf32> to vector<8x32xf32>
    %44 = arith.subf %3, %43 : vector<8x32xf32>
    %cst_24 = arith.constant 9.99999974E-6 : f32
    %45 = vector.broadcast %cst_24 : f32 to vector<8x1xf32>
    %46 = arith.addf %42, %45 : vector<8x1xf32>
    %47 = math.rsqrt %46 : vector<8x1xf32>
    %48 = vector.broadcast %47 : vector<8x1xf32> to vector<8x32xf32>
    %49 = arith.mulf %44, %48 : vector<8x32xf32>
    %50 = vector.broadcast %30 : vector<1x32xf32> to vector<8x32xf32>
    %51 = arith.mulf %49, %50 : vector<8x32xf32>
    %52 = vector.broadcast %31 : vector<1x32xf32> to vector<8x32xf32>
    %53 = arith.addf %51, %52 : vector<8x32xf32>
    %c0_25 = arith.constant 0 : index
    %c0_26 = arith.constant 0 : index
    %54 = vector.load %arg7[%c0_25, %c0_26] : memref<32x32xbf16, #tpu.memory_space<vmem>>, vector<32x32xbf16>
    %c0_27 = arith.constant 0 : index
    %c0_28 = arith.constant 0 : index
    %55 = vector.load %arg8[%c0_27, %c0_28] : memref<32x32xbf16, #tpu.memory_space<vmem>>, vector<32x32xbf16>
    %c0_29 = arith.constant 0 : index
    %c0_30 = arith.constant 0 : index
    %56 = vector.load %arg9[%c0_29, %c0_30] : memref<32x32xbf16, #tpu.memory_space<vmem>>, vector<32x32xbf16>
    %c0_31 = arith.constant 0 : index
    %c0_32 = arith.constant 0 : index
    %57 = vector.load %arg10[%c0_31, %c0_32] : memref<32x32xbf16, #tpu.memory_space<vmem>>, vector<32x32xbf16>
    %c0_33 = arith.constant 0 : index
    %c0_34 = arith.constant 0 : index
    %58 = vector.load %arg11[%c0_33, %c0_34] : memref<1x32xf32, #tpu.memory_space<vmem>>, vector<1x32xf32>
    %cst_35 = arith.constant 5.000000e-01 : f32
    %59 = vector.broadcast %cst_35 : f32 to vector<8x32xf32>
    %60 = arith.mulf %29, %59 : vector<8x32xf32>
    %61 = arith.truncf %60 : vector<8x32xf32> to vector<8x32xbf16>
    %cst_36 = arith.constant dense<0.000000e+00> : vector<8x32xf32>
    %62 = tpu.matmul %61, %54, %cst_36 {dimension_numbers = #tpu.dot_dimension_numbers<[1], [0], [0], [1], [0, 0, 1, 1], [], []>} : vector<8x32xbf16>, vector<32x32xbf16>, vector<8x32xf32> -> vector<8x32xf32>
    %63 = arith.truncf %53 : vector<8x32xf32> to vector<8x32xbf16>
    %cst_37 = arith.constant dense<0.000000e+00> : vector<8x32xf32>
    %64 = tpu.matmul %63, %55, %cst_37 {dimension_numbers = #tpu.dot_dimension_numbers<[1], [0], [0], [1], [0, 0, 1, 1], [], []>} : vector<8x32xbf16>, vector<32x32xbf16>, vector<8x32xf32> -> vector<8x32xf32>
    %65 = arith.truncf %53 : vector<8x32xf32> to vector<8x32xbf16>
    %cst_38 = arith.constant dense<0.000000e+00> : vector<8x32xf32>
    %66 = tpu.matmul %65, %56, %cst_38 {dimension_numbers = #tpu.dot_dimension_numbers<[1], [0], [0], [1], [0, 0, 1, 1], [], []>} : vector<8x32xbf16>, vector<32x32xbf16>, vector<8x32xf32> -> vector<8x32xf32>
    %67 = arith.truncf %62 : vector<8x32xf32> to vector<8x32xbf16>
    %68 = arith.truncf %64 : vector<8x32xf32> to vector<8x32xbf16>
    %69 = arith.truncf %66 : vector<8x32xf32> to vector<8x32xbf16>
    %70 = vector.extract_strided_slice %67 {offsets = [0, 0], sizes = [8, 4], strides = [1, 1]} : vector<8x32xbf16> to vector<8x4xbf16>
    %71 = vector.extract_strided_slice %68 {offsets = [0, 0], sizes = [8, 4], strides = [1, 1]} : vector<8x32xbf16> to vector<8x4xbf16>
    %cst_39 = arith.constant dense<0.000000e+00> : vector<8x8xf32>
    %72 = tpu.matmul %70, %71, %cst_39 {dimension_numbers = #tpu.dot_dimension_numbers<[1], [1], [0], [0], [0, 0, 1, 0], [], []>} : vector<8x4xbf16>, vector<8x4xbf16>, vector<8x8xf32> -> vector<8x8xf32>
    %cst_40 = arith.constant dense<0xFF800000> : vector<8xf32>
    %73 = vector.multi_reduction <maximumf>, %72, %cst_40 [1] : vector<8x8xf32> to vector<8xf32>
    %74 = vector.shape_cast %73 : vector<8xf32> to vector<8x1xf32>
    %75 = vector.broadcast %74 : vector<8x1xf32> to vector<8x8xf32>
    %76 = arith.subf %72, %75 : vector<8x8xf32>
    %77 = math.exp %76 : vector<8x8xf32>
    %cst_41 = arith.constant dense<0.000000e+00> : vector<8xf32>
    %78 = vector.multi_reduction <add>, %77, %cst_41 [1] : vector<8x8xf32> to vector<8xf32>
    %79 = vector.shape_cast %78 : vector<8xf32> to vector<8x1xf32>
    %80 = arith.truncf %77 : vector<8x8xf32> to vector<8x8xbf16>
    %81 = vector.extract_strided_slice %69 {offsets = [0, 0], sizes = [8, 4], strides = [1, 1]} : vector<8x32xbf16> to vector<8x4xbf16>
    %cst_42 = arith.constant dense<0.000000e+00> : vector<8x4xf32>
    %82 = tpu.matmul %80, %81, %cst_42 {dimension_numbers = #tpu.dot_dimension_numbers<[1], [0], [0], [1], [0, 0, 1, 1], [], []>} : vector<8x8xbf16>, vector<8x4xbf16>, vector<8x4xf32> -> vector<8x4xf32>
    %83 = tpu.reciprocal %79 {approx = true} : vector<8x1xf32> -> vector<8x1xf32>
    %84 = vector.broadcast %83 : vector<8x1xf32> to vector<8x4xf32>
    %85 = arith.mulf %82, %84 : vector<8x4xf32>
    %c0_43 = arith.constant 0 : index
    %c0_44 = arith.constant 0 : index
    %86 = vector.load %arg26[%c0_43, %c0_44] : memref<8x32xf32, #tpu.memory_space<vmem>>, vector<8x4xf32>
    tpu.vector_store %arg26[%c0_43, %c0_44], %85 {strides = array<i32>} : memref<8x32xf32, #tpu.memory_space<vmem>>, vector<8x4xf32>,
    %87 = vector.extract_strided_slice %67 {offsets = [0, 4], sizes = [8, 4], strides = [1, 1]} : vector<8x32xbf16> to vector<8x4xbf16>
    %88 = vector.extract_strided_slice %68 {offsets = [0, 4], sizes = [8, 4], strides = [1, 1]} : vector<8x32xbf16> to vector<8x4xbf16>
    %cst_45 = arith.constant dense<0.000000e+00> : vector<8x8xf32>
    %89 = tpu.matmul %87, %88, %cst_45 {dimension_numbers = #tpu.dot_dimension_numbers<[1], [1], [0], [0], [0, 0, 1, 0], [], []>} : vector<8x4xbf16>, vector<8x4xbf16>, vector<8x8xf32> -> vector<8x8xf32>
    %cst_46 = arith.constant dense<0xFF800000> : vector<8xf32>
    %90 = vector.multi_reduction <maximumf>, %89, %cst_46 [1] : vector<8x8xf32> to vector<8xf32>
    %91 = vector.shape_cast %90 : vector<8xf32> to vector<8x1xf32>
    %92 = vector.broadcast %91 : vector<8x1xf32> to vector<8x8xf32>
    %93 = arith.subf %89, %92 : vector<8x8xf32>
    %94 = math.exp %93 : vector<8x8xf32>
    %cst_47 = arith.constant dense<0.000000e+00> : vector<8xf32>
    %95 = vector.multi_reduction <add>, %94, %cst_47 [1] : vector<8x8xf32> to vector<8xf32>
    %96 = vector.shape_cast %95 : vector<8xf32> to vector<8x1xf32>
    %97 = arith.truncf %94 : vector<8x8xf32> to vector<8x8xbf16>
    %98 = vector.extract_strided_slice %69 {offsets = [0, 4], sizes = [8, 4], strides = [1, 1]} : vector<8x32xbf16> to vector<8x4xbf16>
    %cst_48 = arith.constant dense<0.000000e+00> : vector<8x4xf32>
    %99 = tpu.matmul %97, %98, %cst_48 {dimension_numbers = #tpu.dot_dimension_numbers<[1], [0], [0], [1], [0, 0, 1, 1], [], []>} : vector<8x8xbf16>, vector<8x4xbf16>, vector<8x4xf32> -> vector<8x4xf32>
    %100 = tpu.reciprocal %96 {approx = true} : vector<8x1xf32> -> vector<8x1xf32>
    %101 = vector.broadcast %100 : vector<8x1xf32> to vector<8x4xf32>
    %102 = arith.mulf %99, %101 : vector<8x4xf32>
    %c0_49 = arith.constant 0 : index
    %c4 = arith.constant 4 : index
    %103 = vector.load %arg26[%c0_49, %c4] : memref<8x32xf32, #tpu.memory_space<vmem>>, vector<8x4xf32>
    tpu.vector_store %arg26[%c0_49, %c4], %102 {strides = array<i32>} : memref<8x32xf32, #tpu.memory_space<vmem>>, vector<8x4xf32>,
    %104 = vector.extract_strided_slice %67 {offsets = [0, 8], sizes = [8, 4], strides = [1, 1]} : vector<8x32xbf16> to vector<8x4xbf16>
    %105 = vector.extract_strided_slice %68 {offsets = [0, 8], sizes = [8, 4], strides = [1, 1]} : vector<8x32xbf16> to vector<8x4xbf16>
    %cst_50 = arith.constant dense<0.000000e+00> : vector<8x8xf32>
    %106 = tpu.matmul %104, %105, %cst_50 {dimension_numbers = #tpu.dot_dimension_numbers<[1], [1], [0], [0], [0, 0, 1, 0], [], []>} : vector<8x4xbf16>, vector<8x4xbf16>, vector<8x8xf32> -> vector<8x8xf32>
    %cst_51 = arith.constant dense<0xFF800000> : vector<8xf32>
    %107 = vector.multi_reduction <maximumf>, %106, %cst_51 [1] : vector<8x8xf32> to vector<8xf32>
    %108 = vector.shape_cast %107 : vector<8xf32> to vector<8x1xf32>
    %109 = vector.broadcast %108 : vector<8x1xf32> to vector<8x8xf32>
    %110 = arith.subf %106, %109 : vector<8x8xf32>
    %111 = math.exp %110 : vector<8x8xf32>
    %cst_52 = arith.constant dense<0.000000e+00> : vector<8xf32>
    %112 = vector.multi_reduction <add>, %111, %cst_52 [1] : vector<8x8xf32> to vector<8xf32>
    %113 = vector.shape_cast %112 : vector<8xf32> to vector<8x1xf32>
    %114 = arith.truncf %111 : vector<8x8xf32> to vector<8x8xbf16>
    %115 = vector.extract_strided_slice %69 {offsets = [0, 8], sizes = [8, 4], strides = [1, 1]} : vector<8x32xbf16> to vector<8x4xbf16>
    %cst_53 = arith.constant dense<0.000000e+00> : vector<8x4xf32>
    %116 = tpu.matmul %114, %115, %cst_53 {dimension_numbers = #tpu.dot_dimension_numbers<[1], [0], [0], [1], [0, 0, 1, 1], [], []>} : vector<8x8xbf16>, vector<8x4xbf16>, vector<8x4xf32> -> vector<8x4xf32>
    %117 = tpu.reciprocal %113 {approx = true} : vector<8x1xf32> -> vector<8x1xf32>
    %118 = vector.broadcast %117 : vector<8x1xf32> to vector<8x4xf32>
    %119 = arith.mulf %116, %118 : vector<8x4xf32>
    %c0_54 = arith.constant 0 : index
    %c8 = arith.constant 8 : index
    %120 = vector.load %arg26[%c0_54, %c8] : memref<8x32xf32, #tpu.memory_space<vmem>>, vector<8x4xf32>
    tpu.vector_store %arg26[%c0_54, %c8], %119 {strides = array<i32>} : memref<8x32xf32, #tpu.memory_space<vmem>>, vector<8x4xf32>,
    %121 = vector.extract_strided_slice %67 {offsets = [0, 12], sizes = [8, 4], strides = [1, 1]} : vector<8x32xbf16> to vector<8x4xbf16>
    %122 = vector.extract_strided_slice %68 {offsets = [0, 12], sizes = [8, 4], strides = [1, 1]} : vector<8x32xbf16> to vector<8x4xbf16>
    %cst_55 = arith.constant dense<0.000000e+00> : vector<8x8xf32>
    %123 = tpu.matmul %121, %122, %cst_55 {dimension_numbers = #tpu.dot_dimension_numbers<[1], [1], [0], [0], [0, 0, 1, 0], [], []>} : vector<8x4xbf16>, vector<8x4xbf16>, vector<8x8xf32> -> vector<8x8xf32>
    %cst_56 = arith.constant dense<0xFF800000> : vector<8xf32>
    %124 = vector.multi_reduction <maximumf>, %123, %cst_56 [1] : vector<8x8xf32> to vector<8xf32>
    %125 = vector.shape_cast %124 : vector<8xf32> to vector<8x1xf32>
    %126 = vector.broadcast %125 : vector<8x1xf32> to vector<8x8xf32>
    %127 = arith.subf %123, %126 : vector<8x8xf32>
    %128 = math.exp %127 : vector<8x8xf32>
    %cst_57 = arith.constant dense<0.000000e+00> : vector<8xf32>
    %129 = vector.multi_reduction <add>, %128, %cst_57 [1] : vector<8x8xf32> to vector<8xf32>
    %130 = vector.shape_cast %129 : vector<8xf32> to vector<8x1xf32>
    %131 = arith.truncf %128 : vector<8x8xf32> to vector<8x8xbf16>
    %132 = vector.extract_strided_slice %69 {offsets = [0, 12], sizes = [8, 4], strides = [1, 1]} : vector<8x32xbf16> to vector<8x4xbf16>
    %cst_58 = arith.constant dense<0.000000e+00> : vector<8x4xf32>
    %133 = tpu.matmul %131, %132, %cst_58 {dimension_numbers = #tpu.dot_dimension_numbers<[1], [0], [0], [1], [0, 0, 1, 1], [], []>} : vector<8x8xbf16>, vector<8x4xbf16>, vector<8x4xf32> -> vector<8x4xf32>
    %134 = tpu.reciprocal %130 {approx = true} : vector<8x1xf32> -> vector<8x1xf32>
    %135 = vector.broadcast %134 : vector<8x1xf32> to vector<8x4xf32>
    %136 = arith.mulf %133, %135 : vector<8x4xf32>
    %c0_59 = arith.constant 0 : index
    %c12 = arith.constant 12 : index
    %137 = vector.load %arg26[%c0_59, %c12] : memref<8x32xf32, #tpu.memory_space<vmem>>, vector<8x4xf32>
    tpu.vector_store %arg26[%c0_59, %c12], %136 {strides = array<i32>} : memref<8x32xf32, #tpu.memory_space<vmem>>, vector<8x4xf32>,
    %138 = vector.extract_strided_slice %67 {offsets = [0, 16], sizes = [8, 4], strides = [1, 1]} : vector<8x32xbf16> to vector<8x4xbf16>
    %139 = vector.extract_strided_slice %68 {offsets = [0, 16], sizes = [8, 4], strides = [1, 1]} : vector<8x32xbf16> to vector<8x4xbf16>
    %cst_60 = arith.constant dense<0.000000e+00> : vector<8x8xf32>
    %140 = tpu.matmul %138, %139, %cst_60 {dimension_numbers = #tpu.dot_dimension_numbers<[1], [1], [0], [0], [0, 0, 1, 0], [], []>} : vector<8x4xbf16>, vector<8x4xbf16>, vector<8x8xf32> -> vector<8x8xf32>
    %cst_61 = arith.constant dense<0xFF800000> : vector<8xf32>
    %141 = vector.multi_reduction <maximumf>, %140, %cst_61 [1] : vector<8x8xf32> to vector<8xf32>
    %142 = vector.shape_cast %141 : vector<8xf32> to vector<8x1xf32>
    %143 = vector.broadcast %142 : vector<8x1xf32> to vector<8x8xf32>
    %144 = arith.subf %140, %143 : vector<8x8xf32>
    %145 = math.exp %144 : vector<8x8xf32>
    %cst_62 = arith.constant dense<0.000000e+00> : vector<8xf32>
    %146 = vector.multi_reduction <add>, %145, %cst_62 [1] : vector<8x8xf32> to vector<8xf32>
    %147 = vector.shape_cast %146 : vector<8xf32> to vector<8x1xf32>
    %148 = arith.truncf %145 : vector<8x8xf32> to vector<8x8xbf16>
    %149 = vector.extract_strided_slice %69 {offsets = [0, 16], sizes = [8, 4], strides = [1, 1]} : vector<8x32xbf16> to vector<8x4xbf16>
    %cst_63 = arith.constant dense<0.000000e+00> : vector<8x4xf32>
    %150 = tpu.matmul %148, %149, %cst_63 {dimension_numbers = #tpu.dot_dimension_numbers<[1], [0], [0], [1], [0, 0, 1, 1], [], []>} : vector<8x8xbf16>, vector<8x4xbf16>, vector<8x4xf32> -> vector<8x4xf32>
    %151 = tpu.reciprocal %147 {approx = true} : vector<8x1xf32> -> vector<8x1xf32>
    %152 = vector.broadcast %151 : vector<8x1xf32> to vector<8x4xf32>
    %153 = arith.mulf %150, %152 : vector<8x4xf32>
    %c0_64 = arith.constant 0 : index
    %c16 = arith.constant 16 : index
    %154 = vector.load %arg26[%c0_64, %c16] : memref<8x32xf32, #tpu.memory_space<vmem>>, vector<8x4xf32>
    tpu.vector_store %arg26[%c0_64, %c16], %153 {strides = array<i32>} : memref<8x32xf32, #tpu.memory_space<vmem>>, vector<8x4xf32>,
    %155 = vector.extract_strided_slice %67 {offsets = [0, 20], sizes = [8, 4], strides = [1, 1]} : vector<8x32xbf16> to vector<8x4xbf16>
    %156 = vector.extract_strided_slice %68 {offsets = [0, 20], sizes = [8, 4], strides = [1, 1]} : vector<8x32xbf16> to vector<8x4xbf16>
    %cst_65 = arith.constant dense<0.000000e+00> : vector<8x8xf32>
    %157 = tpu.matmul %155, %156, %cst_65 {dimension_numbers = #tpu.dot_dimension_numbers<[1], [1], [0], [0], [0, 0, 1, 0], [], []>} : vector<8x4xbf16>, vector<8x4xbf16>, vector<8x8xf32> -> vector<8x8xf32>
    %cst_66 = arith.constant dense<0xFF800000> : vector<8xf32>
    %158 = vector.multi_reduction <maximumf>, %157, %cst_66 [1] : vector<8x8xf32> to vector<8xf32>
    %159 = vector.shape_cast %158 : vector<8xf32> to vector<8x1xf32>
    %160 = vector.broadcast %159 : vector<8x1xf32> to vector<8x8xf32>
    %161 = arith.subf %157, %160 : vector<8x8xf32>
    %162 = math.exp %161 : vector<8x8xf32>
    %cst_67 = arith.constant dense<0.000000e+00> : vector<8xf32>
    %163 = vector.multi_reduction <add>, %162, %cst_67 [1] : vector<8x8xf32> to vector<8xf32>
    %164 = vector.shape_cast %163 : vector<8xf32> to vector<8x1xf32>
    %165 = arith.truncf %162 : vector<8x8xf32> to vector<8x8xbf16>
    %166 = vector.extract_strided_slice %69 {offsets = [0, 20], sizes = [8, 4], strides = [1, 1]} : vector<8x32xbf16> to vector<8x4xbf16>
    %cst_68 = arith.constant dense<0.000000e+00> : vector<8x4xf32>
    %167 = tpu.matmul %165, %166, %cst_68 {dimension_numbers = #tpu.dot_dimension_numbers<[1], [0], [0], [1], [0, 0, 1, 1], [], []>} : vector<8x8xbf16>, vector<8x4xbf16>, vector<8x4xf32> -> vector<8x4xf32>
    %168 = tpu.reciprocal %164 {approx = true} : vector<8x1xf32> -> vector<8x1xf32>
    %169 = vector.broadcast %168 : vector<8x1xf32> to vector<8x4xf32>
    %170 = arith.mulf %167, %169 : vector<8x4xf32>
    %c0_69 = arith.constant 0 : index
    %c20 = arith.constant 20 : index
    %171 = vector.load %arg26[%c0_69, %c20] : memref<8x32xf32, #tpu.memory_space<vmem>>, vector<8x4xf32>
    tpu.vector_store %arg26[%c0_69, %c20], %170 {strides = array<i32>} : memref<8x32xf32, #tpu.memory_space<vmem>>, vector<8x4xf32>,
    %172 = vector.extract_strided_slice %67 {offsets = [0, 24], sizes = [8, 4], strides = [1, 1]} : vector<8x32xbf16> to vector<8x4xbf16>
    %173 = vector.extract_strided_slice %68 {offsets = [0, 24], sizes = [8, 4], strides = [1, 1]} : vector<8x32xbf16> to vector<8x4xbf16>
    %cst_70 = arith.constant dense<0.000000e+00> : vector<8x8xf32>
    %174 = tpu.matmul %172, %173, %cst_70 {dimension_numbers = #tpu.dot_dimension_numbers<[1], [1], [0], [0], [0, 0, 1, 0], [], []>} : vector<8x4xbf16>, vector<8x4xbf16>, vector<8x8xf32> -> vector<8x8xf32>
    %cst_71 = arith.constant dense<0xFF800000> : vector<8xf32>
    %175 = vector.multi_reduction <maximumf>, %174, %cst_71 [1] : vector<8x8xf32> to vector<8xf32>
    %176 = vector.shape_cast %175 : vector<8xf32> to vector<8x1xf32>
    %177 = vector.broadcast %176 : vector<8x1xf32> to vector<8x8xf32>
    %178 = arith.subf %174, %177 : vector<8x8xf32>
    %179 = math.exp %178 : vector<8x8xf32>
    %cst_72 = arith.constant dense<0.000000e+00> : vector<8xf32>
    %180 = vector.multi_reduction <add>, %179, %cst_72 [1] : vector<8x8xf32> to vector<8xf32>
    %181 = vector.shape_cast %180 : vector<8xf32> to vector<8x1xf32>
    %182 = arith.truncf %179 : vector<8x8xf32> to vector<8x8xbf16>
    %183 = vector.extract_strided_slice %69 {offsets = [0, 24], sizes = [8, 4], strides = [1, 1]} : vector<8x32xbf16> to vector<8x4xbf16>
    %cst_73 = arith.constant dense<0.000000e+00> : vector<8x4xf32>
    %184 = tpu.matmul %182, %183, %cst_73 {dimension_numbers = #tpu.dot_dimension_numbers<[1], [0], [0], [1], [0, 0, 1, 1], [], []>} : vector<8x8xbf16>, vector<8x4xbf16>, vector<8x4xf32> -> vector<8x4xf32>
    %185 = tpu.reciprocal %181 {approx = true} : vector<8x1xf32> -> vector<8x1xf32>
    %186 = vector.broadcast %185 : vector<8x1xf32> to vector<8x4xf32>
    %187 = arith.mulf %184, %186 : vector<8x4xf32>
    %c0_74 = arith.constant 0 : index
    %c24 = arith.constant 24 : index
    %188 = vector.load %arg26[%c0_74, %c24] : memref<8x32xf32, #tpu.memory_space<vmem>>, vector<8x4xf32>
    tpu.vector_store %arg26[%c0_74, %c24], %187 {strides = array<i32>} : memref<8x32xf32, #tpu.memory_space<vmem>>, vector<8x4xf32>,
    %189 = vector.extract_strided_slice %67 {offsets = [0, 28], sizes = [8, 4], strides = [1, 1]} : vector<8x32xbf16> to vector<8x4xbf16>
    %190 = vector.extract_strided_slice %68 {offsets = [0, 28], sizes = [8, 4], strides = [1, 1]} : vector<8x32xbf16> to vector<8x4xbf16>
    %cst_75 = arith.constant dense<0.000000e+00> : vector<8x8xf32>
    %191 = tpu.matmul %189, %190, %cst_75 {dimension_numbers = #tpu.dot_dimension_numbers<[1], [1], [0], [0], [0, 0, 1, 0], [], []>} : vector<8x4xbf16>, vector<8x4xbf16>, vector<8x8xf32> -> vector<8x8xf32>
    %cst_76 = arith.constant dense<0xFF800000> : vector<8xf32>
    %192 = vector.multi_reduction <maximumf>, %191, %cst_76 [1] : vector<8x8xf32> to vector<8xf32>
    %193 = vector.shape_cast %192 : vector<8xf32> to vector<8x1xf32>
    %194 = vector.broadcast %193 : vector<8x1xf32> to vector<8x8xf32>
    %195 = arith.subf %191, %194 : vector<8x8xf32>
    %196 = math.exp %195 : vector<8x8xf32>
    %cst_77 = arith.constant dense<0.000000e+00> : vector<8xf32>
    %197 = vector.multi_reduction <add>, %196, %cst_77 [1] : vector<8x8xf32> to vector<8xf32>
    %198 = vector.shape_cast %197 : vector<8xf32> to vector<8x1xf32>
    %199 = arith.truncf %196 : vector<8x8xf32> to vector<8x8xbf16>
    %200 = vector.extract_strided_slice %69 {offsets = [0, 28], sizes = [8, 4], strides = [1, 1]} : vector<8x32xbf16> to vector<8x4xbf16>
    %cst_78 = arith.constant dense<0.000000e+00> : vector<8x4xf32>
    %201 = tpu.matmul %199, %200, %cst_78 {dimension_numbers = #tpu.dot_dimension_numbers<[1], [0], [0], [1], [0, 0, 1, 1], [], []>} : vector<8x8xbf16>, vector<8x4xbf16>, vector<8x4xf32> -> vector<8x4xf32>
    %202 = tpu.reciprocal %198 {approx = true} : vector<8x1xf32> -> vector<8x1xf32>
    %203 = vector.broadcast %202 : vector<8x1xf32> to vector<8x4xf32>
    %204 = arith.mulf %201, %203 : vector<8x4xf32>
    %c0_79 = arith.constant 0 : index
    %c28 = arith.constant 28 : index
    %205 = vector.load %arg26[%c0_79, %c28] : memref<8x32xf32, #tpu.memory_space<vmem>>, vector<8x4xf32>
    tpu.vector_store %arg26[%c0_79, %c28], %204 {strides = array<i32>} : memref<8x32xf32, #tpu.memory_space<vmem>>, vector<8x4xf32>,
    %c0_80 = arith.constant 0 : index
    %c0_81 = arith.constant 0 : index
    %206 = vector.load %arg26[%c0_80, %c0_81] : memref<8x32xf32, #tpu.memory_space<vmem>>, vector<8x32xf32>
    %207 = arith.truncf %206 : vector<8x32xf32> to vector<8x32xbf16>
    %cst_82 = arith.constant dense<0.000000e+00> : vector<8x32xf32>
    %208 = tpu.matmul %207, %57, %cst_82 {dimension_numbers = #tpu.dot_dimension_numbers<[1], [0], [0], [1], [0, 0, 1, 1], [], []>} : vector<8x32xbf16>, vector<32x32xbf16>, vector<8x32xf32> -> vector<8x32xf32>
    %209 = vector.broadcast %58 : vector<1x32xf32> to vector<8x32xf32>
    %210 = arith.addf %208, %209 : vector<8x32xf32>
    %211 = arith.addf %1, %210 : vector<8x32xf32>
    %c0_83 = arith.constant 0 : index
    %c0_84 = arith.constant 0 : index
    %212 = vector.load %arg12[%c0_83, %c0_84] : memref<1x32xf32, #tpu.memory_space<vmem>>, vector<1x32xf32>
    %c0_85 = arith.constant 0 : index
    %c0_86 = arith.constant 0 : index
    %213 = vector.load %arg13[%c0_85, %c0_86] : memref<1x32xf32, #tpu.memory_space<vmem>>, vector<1x32xf32>
    %cst_87 = arith.constant dense<0.000000e+00> : vector<8xf32>
    %214 = vector.multi_reduction <add>, %211, %cst_87 [1] : vector<8x32xf32> to vector<8xf32>
    %215 = vector.shape_cast %214 : vector<8xf32> to vector<8x1xf32>
    %cst_88 = arith.constant 3.200000e+01 : f32
    %216 = vector.broadcast %cst_88 : f32 to vector<8x1xf32>
    %217 = arith.divf %215, %216 : vector<8x1xf32>
    %218 = vector.broadcast %217 : vector<8x1xf32> to vector<8x32xf32>
    %219 = arith.subf %211, %218 : vector<8x32xf32>
    %220 = arith.mulf %219, %219 : vector<8x32xf32>
    %cst_89 = arith.constant dense<0.000000e+00> : vector<8xf32>
    %221 = vector.multi_reduction <add>, %220, %cst_89 [1] : vector<8x32xf32> to vector<8xf32>
    %222 = vector.shape_cast %221 : vector<8xf32> to vector<8x1xf32>
    %cst_90 = arith.constant 3.200000e+01 : f32
    %223 = vector.broadcast %cst_90 : f32 to vector<8x1xf32>
    %224 = arith.divf %222, %223 : vector<8x1xf32>
    %225 = vector.broadcast %217 : vector<8x1xf32> to vector<8x32xf32>
    %226 = arith.subf %211, %225 : vector<8x32xf32>
    %cst_91 = arith.constant 9.99999974E-6 : f32
    %227 = vector.broadcast %cst_91 : f32 to vector<8x1xf32>
    %228 = arith.addf %224, %227 : vector<8x1xf32>
    %229 = math.rsqrt %228 : vector<8x1xf32>
    %230 = vector.broadcast %229 : vector<8x1xf32> to vector<8x32xf32>
    %231 = arith.mulf %226, %230 : vector<8x32xf32>
    %232 = vector.broadcast %212 : vector<1x32xf32> to vector<8x32xf32>
    %233 = arith.mulf %231, %232 : vector<8x32xf32>
    %234 = vector.broadcast %213 : vector<1x32xf32> to vector<8x32xf32>
    %235 = arith.addf %233, %234 : vector<8x32xf32>
    %c0_92 = arith.constant 0 : index
    %c0_93 = arith.constant 0 : index
    %236 = vector.load %arg14[%c0_92, %c0_93] : memref<32x32xbf16, #tpu.memory_space<vmem>>, vector<32x32xbf16>
    %c0_94 = arith.constant 0 : index
    %c0_95 = arith.constant 0 : index
    %237 = vector.load %arg15[%c0_94, %c0_95] : memref<16x32xbf16, #tpu.memory_space<vmem>>, vector<16x32xbf16>
    %c0_96 = arith.constant 0 : index
    %c0_97 = arith.constant 0 : index
    %238 = vector.load %arg16[%c0_96, %c0_97] : memref<16x32xbf16, #tpu.memory_space<vmem>>, vector<16x32xbf16>
    %c0_98 = arith.constant 0 : index
    %c0_99 = arith.constant 0 : index
    %239 = vector.load %arg17[%c0_98, %c0_99] : memref<32x32xbf16, #tpu.memory_space<vmem>>, vector<32x32xbf16>
    %c0_100 = arith.constant 0 : index
    %c0_101 = arith.constant 0 : index
    %240 = vector.load %arg18[%c0_100, %c0_101] : memref<1x32xf32, #tpu.memory_space<vmem>>, vector<1x32xf32>
    %cst_102 = arith.constant 5.000000e-01 : f32
    %241 = vector.broadcast %cst_102 : f32 to vector<8x32xf32>
    %242 = arith.mulf %235, %241 : vector<8x32xf32>
    %243 = arith.truncf %242 : vector<8x32xf32> to vector<8x32xbf16>
    %cst_103 = arith.constant dense<0.000000e+00> : vector<8x32xf32>
    %244 = tpu.matmul %243, %236, %cst_103 {dimension_numbers = #tpu.dot_dimension_numbers<[1], [0], [0], [1], [0, 0, 1, 1], [], []>} : vector<8x32xbf16>, vector<32x32xbf16>, vector<8x32xf32> -> vector<8x32xf32>
    %245 = arith.truncf %5 : vector<8x16xf32> to vector<8x16xbf16>
    %cst_104 = arith.constant dense<0.000000e+00> : vector<8x32xf32>
    %246 = tpu.matmul %245, %237, %cst_104 {dimension_numbers = #tpu.dot_dimension_numbers<[1], [0], [0], [1], [0, 0, 1, 1], [], []>} : vector<8x16xbf16>, vector<16x32xbf16>, vector<8x32xf32> -> vector<8x32xf32>
    %247 = arith.truncf %5 : vector<8x16xf32> to vector<8x16xbf16>
    %cst_105 = arith.constant dense<0.000000e+00> : vector<8x32xf32>
    %248 = tpu.matmul %247, %238, %cst_105 {dimension_numbers = #tpu.dot_dimension_numbers<[1], [0], [0], [1], [0, 0, 1, 1], [], []>} : vector<8x16xbf16>, vector<16x32xbf16>, vector<8x32xf32> -> vector<8x32xf32>
    %249 = arith.truncf %244 : vector<8x32xf32> to vector<8x32xbf16>
    %250 = arith.truncf %246 : vector<8x32xf32> to vector<8x32xbf16>
    %251 = arith.truncf %248 : vector<8x32xf32> to vector<8x32xbf16>
    %252 = vector.extract_strided_slice %249 {offsets = [0, 0], sizes = [8, 4], strides = [1, 1]} : vector<8x32xbf16> to vector<8x4xbf16>
    %253 = vector.extract_strided_slice %250 {offsets = [0, 0], sizes = [8, 4], strides = [1, 1]} : vector<8x32xbf16> to vector<8x4xbf16>
    %cst_106 = arith.constant dense<0.000000e+00> : vector<8x8xf32>
    %254 = tpu.matmul %252, %253, %cst_106 {dimension_numbers = #tpu.dot_dimension_numbers<[1], [1], [0], [0], [0, 0, 1, 0], [], []>} : vector<8x4xbf16>, vector<8x4xbf16>, vector<8x8xf32> -> vector<8x8xf32>
    %cst_107 = arith.constant dense<0xFF800000> : vector<8xf32>
    %255 = vector.multi_reduction <maximumf>, %254, %cst_107 [1] : vector<8x8xf32> to vector<8xf32>
    %256 = vector.shape_cast %255 : vector<8xf32> to vector<8x1xf32>
    %257 = vector.broadcast %256 : vector<8x1xf32> to vector<8x8xf32>
    %258 = arith.subf %254, %257 : vector<8x8xf32>
    %259 = math.exp %258 : vector<8x8xf32>
    %cst_108 = arith.constant dense<0.000000e+00> : vector<8xf32>
    %260 = vector.multi_reduction <add>, %259, %cst_108 [1] : vector<8x8xf32> to vector<8xf32>
    %261 = vector.shape_cast %260 : vector<8xf32> to vector<8x1xf32>
    %262 = arith.truncf %259 : vector<8x8xf32> to vector<8x8xbf16>
    %263 = vector.extract_strided_slice %251 {offsets = [0, 0], sizes = [8, 4], strides = [1, 1]} : vector<8x32xbf16> to vector<8x4xbf16>
    %cst_109 = arith.constant dense<0.000000e+00> : vector<8x4xf32>
    %264 = tpu.matmul %262, %263, %cst_109 {dimension_numbers = #tpu.dot_dimension_numbers<[1], [0], [0], [1], [0, 0, 1, 1], [], []>} : vector<8x8xbf16>, vector<8x4xbf16>, vector<8x4xf32> -> vector<8x4xf32>
    %265 = tpu.reciprocal %261 {approx = true} : vector<8x1xf32> -> vector<8x1xf32>
    %266 = vector.broadcast %265 : vector<8x1xf32> to vector<8x4xf32>
    %267 = arith.mulf %264, %266 : vector<8x4xf32>
    %c0_110 = arith.constant 0 : index
    %c0_111 = arith.constant 0 : index
    %268 = vector.load %arg26[%c0_110, %c0_111] : memref<8x32xf32, #tpu.memory_space<vmem>>, vector<8x4xf32>
    tpu.vector_store %arg26[%c0_110, %c0_111], %267 {strides = array<i32>} : memref<8x32xf32, #tpu.memory_space<vmem>>, vector<8x4xf32>,
    %269 = vector.extract_strided_slice %249 {offsets = [0, 4], sizes = [8, 4], strides = [1, 1]} : vector<8x32xbf16> to vector<8x4xbf16>
    %270 = vector.extract_strided_slice %250 {offsets = [0, 4], sizes = [8, 4], strides = [1, 1]} : vector<8x32xbf16> to vector<8x4xbf16>
    %cst_112 = arith.constant dense<0.000000e+00> : vector<8x8xf32>
    %271 = tpu.matmul %269, %270, %cst_112 {dimension_numbers = #tpu.dot_dimension_numbers<[1], [1], [0], [0], [0, 0, 1, 0], [], []>} : vector<8x4xbf16>, vector<8x4xbf16>, vector<8x8xf32> -> vector<8x8xf32>
    %cst_113 = arith.constant dense<0xFF800000> : vector<8xf32>
    %272 = vector.multi_reduction <maximumf>, %271, %cst_113 [1] : vector<8x8xf32> to vector<8xf32>
    %273 = vector.shape_cast %272 : vector<8xf32> to vector<8x1xf32>
    %274 = vector.broadcast %273 : vector<8x1xf32> to vector<8x8xf32>
    %275 = arith.subf %271, %274 : vector<8x8xf32>
    %276 = math.exp %275 : vector<8x8xf32>
    %cst_114 = arith.constant dense<0.000000e+00> : vector<8xf32>
    %277 = vector.multi_reduction <add>, %276, %cst_114 [1] : vector<8x8xf32> to vector<8xf32>
    %278 = vector.shape_cast %277 : vector<8xf32> to vector<8x1xf32>
    %279 = arith.truncf %276 : vector<8x8xf32> to vector<8x8xbf16>
    %280 = vector.extract_strided_slice %251 {offsets = [0, 4], sizes = [8, 4], strides = [1, 1]} : vector<8x32xbf16> to vector<8x4xbf16>
    %cst_115 = arith.constant dense<0.000000e+00> : vector<8x4xf32>
    %281 = tpu.matmul %279, %280, %cst_115 {dimension_numbers = #tpu.dot_dimension_numbers<[1], [0], [0], [1], [0, 0, 1, 1], [], []>} : vector<8x8xbf16>, vector<8x4xbf16>, vector<8x4xf32> -> vector<8x4xf32>
    %282 = tpu.reciprocal %278 {approx = true} : vector<8x1xf32> -> vector<8x1xf32>
    %283 = vector.broadcast %282 : vector<8x1xf32> to vector<8x4xf32>
    %284 = arith.mulf %281, %283 : vector<8x4xf32>
    %c0_116 = arith.constant 0 : index
    %c4_117 = arith.constant 4 : index
    %285 = vector.load %arg26[%c0_116, %c4_117] : memref<8x32xf32, #tpu.memory_space<vmem>>, vector<8x4xf32>
    tpu.vector_store %arg26[%c0_116, %c4_117], %284 {strides = array<i32>} : memref<8x32xf32, #tpu.memory_space<vmem>>, vector<8x4xf32>,
    %286 = vector.extract_strided_slice %249 {offsets = [0, 8], sizes = [8, 4], strides = [1, 1]} : vector<8x32xbf16> to vector<8x4xbf16>
    %287 = vector.extract_strided_slice %250 {offsets = [0, 8], sizes = [8, 4], strides = [1, 1]} : vector<8x32xbf16> to vector<8x4xbf16>
    %cst_118 = arith.constant dense<0.000000e+00> : vector<8x8xf32>
    %288 = tpu.matmul %286, %287, %cst_118 {dimension_numbers = #tpu.dot_dimension_numbers<[1], [1], [0], [0], [0, 0, 1, 0], [], []>} : vector<8x4xbf16>, vector<8x4xbf16>, vector<8x8xf32> -> vector<8x8xf32>
    %cst_119 = arith.constant dense<0xFF800000> : vector<8xf32>
    %289 = vector.multi_reduction <maximumf>, %288, %cst_119 [1] : vector<8x8xf32> to vector<8xf32>
    %290 = vector.shape_cast %289 : vector<8xf32> to vector<8x1xf32>
    %291 = vector.broadcast %290 : vector<8x1xf32> to vector<8x8xf32>
    %292 = arith.subf %288, %291 : vector<8x8xf32>
    %293 = math.exp %292 : vector<8x8xf32>
    %cst_120 = arith.constant dense<0.000000e+00> : vector<8xf32>
    %294 = vector.multi_reduction <add>, %293, %cst_120 [1] : vector<8x8xf32> to vector<8xf32>
    %295 = vector.shape_cast %294 : vector<8xf32> to vector<8x1xf32>
    %296 = arith.truncf %293 : vector<8x8xf32> to vector<8x8xbf16>
    %297 = vector.extract_strided_slice %251 {offsets = [0, 8], sizes = [8, 4], strides = [1, 1]} : vector<8x32xbf16> to vector<8x4xbf16>
    %cst_121 = arith.constant dense<0.000000e+00> : vector<8x4xf32>
    %298 = tpu.matmul %296, %297, %cst_121 {dimension_numbers = #tpu.dot_dimension_numbers<[1], [0], [0], [1], [0, 0, 1, 1], [], []>} : vector<8x8xbf16>, vector<8x4xbf16>, vector<8x4xf32> -> vector<8x4xf32>
    %299 = tpu.reciprocal %295 {approx = true} : vector<8x1xf32> -> vector<8x1xf32>
    %300 = vector.broadcast %299 : vector<8x1xf32> to vector<8x4xf32>
    %301 = arith.mulf %298, %300 : vector<8x4xf32>
    %c0_122 = arith.constant 0 : index
    %c8_123 = arith.constant 8 : index
    %302 = vector.load %arg26[%c0_122, %c8_123] : memref<8x32xf32, #tpu.memory_space<vmem>>, vector<8x4xf32>
    tpu.vector_store %arg26[%c0_122, %c8_123], %301 {strides = array<i32>} : memref<8x32xf32, #tpu.memory_space<vmem>>, vector<8x4xf32>,
    %303 = vector.extract_strided_slice %249 {offsets = [0, 12], sizes = [8, 4], strides = [1, 1]} : vector<8x32xbf16> to vector<8x4xbf16>
    %304 = vector.extract_strided_slice %250 {offsets = [0, 12], sizes = [8, 4], strides = [1, 1]} : vector<8x32xbf16> to vector<8x4xbf16>
    %cst_124 = arith.constant dense<0.000000e+00> : vector<8x8xf32>
    %305 = tpu.matmul %303, %304, %cst_124 {dimension_numbers = #tpu.dot_dimension_numbers<[1], [1], [0], [0], [0, 0, 1, 0], [], []>} : vector<8x4xbf16>, vector<8x4xbf16>, vector<8x8xf32> -> vector<8x8xf32>
    %cst_125 = arith.constant dense<0xFF800000> : vector<8xf32>
    %306 = vector.multi_reduction <maximumf>, %305, %cst_125 [1] : vector<8x8xf32> to vector<8xf32>
    %307 = vector.shape_cast %306 : vector<8xf32> to vector<8x1xf32>
    %308 = vector.broadcast %307 : vector<8x1xf32> to vector<8x8xf32>
    %309 = arith.subf %305, %308 : vector<8x8xf32>
    %310 = math.exp %309 : vector<8x8xf32>
    %cst_126 = arith.constant dense<0.000000e+00> : vector<8xf32>
    %311 = vector.multi_reduction <add>, %310, %cst_126 [1] : vector<8x8xf32> to vector<8xf32>
    %312 = vector.shape_cast %311 : vector<8xf32> to vector<8x1xf32>
    %313 = arith.truncf %310 : vector<8x8xf32> to vector<8x8xbf16>
    %314 = vector.extract_strided_slice %251 {offsets = [0, 12], sizes = [8, 4], strides = [1, 1]} : vector<8x32xbf16> to vector<8x4xbf16>
    %cst_127 = arith.constant dense<0.000000e+00> : vector<8x4xf32>
    %315 = tpu.matmul %313, %314, %cst_127 {dimension_numbers = #tpu.dot_dimension_numbers<[1], [0], [0], [1], [0, 0, 1, 1], [], []>} : vector<8x8xbf16>, vector<8x4xbf16>, vector<8x4xf32> -> vector<8x4xf32>
    %316 = tpu.reciprocal %312 {approx = true} : vector<8x1xf32> -> vector<8x1xf32>
    %317 = vector.broadcast %316 : vector<8x1xf32> to vector<8x4xf32>
    %318 = arith.mulf %315, %317 : vector<8x4xf32>
    %c0_128 = arith.constant 0 : index
    %c12_129 = arith.constant 12 : index
    %319 = vector.load %arg26[%c0_128, %c12_129] : memref<8x32xf32, #tpu.memory_space<vmem>>, vector<8x4xf32>
    tpu.vector_store %arg26[%c0_128, %c12_129], %318 {strides = array<i32>} : memref<8x32xf32, #tpu.memory_space<vmem>>, vector<8x4xf32>,
    %320 = vector.extract_strided_slice %249 {offsets = [0, 16], sizes = [8, 4], strides = [1, 1]} : vector<8x32xbf16> to vector<8x4xbf16>
    %321 = vector.extract_strided_slice %250 {offsets = [0, 16], sizes = [8, 4], strides = [1, 1]} : vector<8x32xbf16> to vector<8x4xbf16>
    %cst_130 = arith.constant dense<0.000000e+00> : vector<8x8xf32>
    %322 = tpu.matmul %320, %321, %cst_130 {dimension_numbers = #tpu.dot_dimension_numbers<[1], [1], [0], [0], [0, 0, 1, 0], [], []>} : vector<8x4xbf16>, vector<8x4xbf16>, vector<8x8xf32> -> vector<8x8xf32>
    %cst_131 = arith.constant dense<0xFF800000> : vector<8xf32>
    %323 = vector.multi_reduction <maximumf>, %322, %cst_131 [1] : vector<8x8xf32> to vector<8xf32>
    %324 = vector.shape_cast %323 : vector<8xf32> to vector<8x1xf32>
    %325 = vector.broadcast %324 : vector<8x1xf32> to vector<8x8xf32>
    %326 = arith.subf %322, %325 : vector<8x8xf32>
    %327 = math.exp %326 : vector<8x8xf32>
    %cst_132 = arith.constant dense<0.000000e+00> : vector<8xf32>
    %328 = vector.multi_reduction <add>, %327, %cst_132 [1] : vector<8x8xf32> to vector<8xf32>
    %329 = vector.shape_cast %328 : vector<8xf32> to vector<8x1xf32>
    %330 = arith.truncf %327 : vector<8x8xf32> to vector<8x8xbf16>
    %331 = vector.extract_strided_slice %251 {offsets = [0, 16], sizes = [8, 4], strides = [1, 1]} : vector<8x32xbf16> to vector<8x4xbf16>
    %cst_133 = arith.constant dense<0.000000e+00> : vector<8x4xf32>
    %332 = tpu.matmul %330, %331, %cst_133 {dimension_numbers = #tpu.dot_dimension_numbers<[1], [0], [0], [1], [0, 0, 1, 1], [], []>} : vector<8x8xbf16>, vector<8x4xbf16>, vector<8x4xf32> -> vector<8x4xf32>
    %333 = tpu.reciprocal %329 {approx = true} : vector<8x1xf32> -> vector<8x1xf32>
    %334 = vector.broadcast %333 : vector<8x1xf32> to vector<8x4xf32>
    %335 = arith.mulf %332, %334 : vector<8x4xf32>
    %c0_134 = arith.constant 0 : index
    %c16_135 = arith.constant 16 : index
    %336 = vector.load %arg26[%c0_134, %c16_135] : memref<8x32xf32, #tpu.memory_space<vmem>>, vector<8x4xf32>
    tpu.vector_store %arg26[%c0_134, %c16_135], %335 {strides = array<i32>} : memref<8x32xf32, #tpu.memory_space<vmem>>, vector<8x4xf32>,
    %337 = vector.extract_strided_slice %249 {offsets = [0, 20], sizes = [8, 4], strides = [1, 1]} : vector<8x32xbf16> to vector<8x4xbf16>
    %338 = vector.extract_strided_slice %250 {offsets = [0, 20], sizes = [8, 4], strides = [1, 1]} : vector<8x32xbf16> to vector<8x4xbf16>
    %cst_136 = arith.constant dense<0.000000e+00> : vector<8x8xf32>
    %339 = tpu.matmul %337, %338, %cst_136 {dimension_numbers = #tpu.dot_dimension_numbers<[1], [1], [0], [0], [0, 0, 1, 0], [], []>} : vector<8x4xbf16>, vector<8x4xbf16>, vector<8x8xf32> -> vector<8x8xf32>
    %cst_137 = arith.constant dense<0xFF800000> : vector<8xf32>
    %340 = vector.multi_reduction <maximumf>, %339, %cst_137 [1] : vector<8x8xf32> to vector<8xf32>
    %341 = vector.shape_cast %340 : vector<8xf32> to vector<8x1xf32>
    %342 = vector.broadcast %341 : vector<8x1xf32> to vector<8x8xf32>
    %343 = arith.subf %339, %342 : vector<8x8xf32>
    %344 = math.exp %343 : vector<8x8xf32>
    %cst_138 = arith.constant dense<0.000000e+00> : vector<8xf32>
    %345 = vector.multi_reduction <add>, %344, %cst_138 [1] : vector<8x8xf32> to vector<8xf32>
    %346 = vector.shape_cast %345 : vector<8xf32> to vector<8x1xf32>
    %347 = arith.truncf %344 : vector<8x8xf32> to vector<8x8xbf16>
    %348 = vector.extract_strided_slice %251 {offsets = [0, 20], sizes = [8, 4], strides = [1, 1]} : vector<8x32xbf16> to vector<8x4xbf16>
    %cst_139 = arith.constant dense<0.000000e+00> : vector<8x4xf32>
    %349 = tpu.matmul %347, %348, %cst_139 {dimension_numbers = #tpu.dot_dimension_numbers<[1], [0], [0], [1], [0, 0, 1, 1], [], []>} : vector<8x8xbf16>, vector<8x4xbf16>, vector<8x4xf32> -> vector<8x4xf32>
    %350 = tpu.reciprocal %346 {approx = true} : vector<8x1xf32> -> vector<8x1xf32>
    %351 = vector.broadcast %350 : vector<8x1xf32> to vector<8x4xf32>
    %352 = arith.mulf %349, %351 : vector<8x4xf32>
    %c0_140 = arith.constant 0 : index
    %c20_141 = arith.constant 20 : index
    %353 = vector.load %arg26[%c0_140, %c20_141] : memref<8x32xf32, #tpu.memory_space<vmem>>, vector<8x4xf32>
    tpu.vector_store %arg26[%c0_140, %c20_141], %352 {strides = array<i32>} : memref<8x32xf32, #tpu.memory_space<vmem>>, vector<8x4xf32>,
    %354 = vector.extract_strided_slice %249 {offsets = [0, 24], sizes = [8, 4], strides = [1, 1]} : vector<8x32xbf16> to vector<8x4xbf16>
    %355 = vector.extract_strided_slice %250 {offsets = [0, 24], sizes = [8, 4], strides = [1, 1]} : vector<8x32xbf16> to vector<8x4xbf16>
    %cst_142 = arith.constant dense<0.000000e+00> : vector<8x8xf32>
    %356 = tpu.matmul %354, %355, %cst_142 {dimension_numbers = #tpu.dot_dimension_numbers<[1], [1], [0], [0], [0, 0, 1, 0], [], []>} : vector<8x4xbf16>, vector<8x4xbf16>, vector<8x8xf32> -> vector<8x8xf32>
    %cst_143 = arith.constant dense<0xFF800000> : vector<8xf32>
    %357 = vector.multi_reduction <maximumf>, %356, %cst_143 [1] : vector<8x8xf32> to vector<8xf32>
    %358 = vector.shape_cast %357 : vector<8xf32> to vector<8x1xf32>
    %359 = vector.broadcast %358 : vector<8x1xf32> to vector<8x8xf32>
    %360 = arith.subf %356, %359 : vector<8x8xf32>
    %361 = math.exp %360 : vector<8x8xf32>
    %cst_144 = arith.constant dense<0.000000e+00> : vector<8xf32>
    %362 = vector.multi_reduction <add>, %361, %cst_144 [1] : vector<8x8xf32> to vector<8xf32>
    %363 = vector.shape_cast %362 : vector<8xf32> to vector<8x1xf32>
    %364 = arith.truncf %361 : vector<8x8xf32> to vector<8x8xbf16>
    %365 = vector.extract_strided_slice %251 {offsets = [0, 24], sizes = [8, 4], strides = [1, 1]} : vector<8x32xbf16> to vector<8x4xbf16>
    %cst_145 = arith.constant dense<0.000000e+00> : vector<8x4xf32>
    %366 = tpu.matmul %364, %365, %cst_145 {dimension_numbers = #tpu.dot_dimension_numbers<[1], [0], [0], [1], [0, 0, 1, 1], [], []>} : vector<8x8xbf16>, vector<8x4xbf16>, vector<8x4xf32> -> vector<8x4xf32>
    %367 = tpu.reciprocal %363 {approx = true} : vector<8x1xf32> -> vector<8x1xf32>
    %368 = vector.broadcast %367 : vector<8x1xf32> to vector<8x4xf32>
    %369 = arith.mulf %366, %368 : vector<8x4xf32>
    %c0_146 = arith.constant 0 : index
    %c24_147 = arith.constant 24 : index
    %370 = vector.load %arg26[%c0_146, %c24_147] : memref<8x32xf32, #tpu.memory_space<vmem>>, vector<8x4xf32>
    tpu.vector_store %arg26[%c0_146, %c24_147], %369 {strides = array<i32>} : memref<8x32xf32, #tpu.memory_space<vmem>>, vector<8x4xf32>,
    %371 = vector.extract_strided_slice %249 {offsets = [0, 28], sizes = [8, 4], strides = [1, 1]} : vector<8x32xbf16> to vector<8x4xbf16>
    %372 = vector.extract_strided_slice %250 {offsets = [0, 28], sizes = [8, 4], strides = [1, 1]} : vector<8x32xbf16> to vector<8x4xbf16>
    %cst_148 = arith.constant dense<0.000000e+00> : vector<8x8xf32>
    %373 = tpu.matmul %371, %372, %cst_148 {dimension_numbers = #tpu.dot_dimension_numbers<[1], [1], [0], [0], [0, 0, 1, 0], [], []>} : vector<8x4xbf16>, vector<8x4xbf16>, vector<8x8xf32> -> vector<8x8xf32>
    %cst_149 = arith.constant dense<0xFF800000> : vector<8xf32>
    %374 = vector.multi_reduction <maximumf>, %373, %cst_149 [1] : vector<8x8xf32> to vector<8xf32>
    %375 = vector.shape_cast %374 : vector<8xf32> to vector<8x1xf32>
    %376 = vector.broadcast %375 : vector<8x1xf32> to vector<8x8xf32>
    %377 = arith.subf %373, %376 : vector<8x8xf32>
    %378 = math.exp %377 : vector<8x8xf32>
    %cst_150 = arith.constant dense<0.000000e+00> : vector<8xf32>
    %379 = vector.multi_reduction <add>, %378, %cst_150 [1] : vector<8x8xf32> to vector<8xf32>
    %380 = vector.shape_cast %379 : vector<8xf32> to vector<8x1xf32>
    %381 = arith.truncf %378 : vector<8x8xf32> to vector<8x8xbf16>
    %382 = vector.extract_strided_slice %251 {offsets = [0, 28], sizes = [8, 4], strides = [1, 1]} : vector<8x32xbf16> to vector<8x4xbf16>
    %cst_151 = arith.constant dense<0.000000e+00> : vector<8x4xf32>
    %383 = tpu.matmul %381, %382, %cst_151 {dimension_numbers = #tpu.dot_dimension_numbers<[1], [0], [0], [1], [0, 0, 1, 1], [], []>} : vector<8x8xbf16>, vector<8x4xbf16>, vector<8x4xf32> -> vector<8x4xf32>
    %384 = tpu.reciprocal %380 {approx = true} : vector<8x1xf32> -> vector<8x1xf32>
    %385 = vector.broadcast %384 : vector<8x1xf32> to vector<8x4xf32>
    %386 = arith.mulf %383, %385 : vector<8x4xf32>
    %c0_152 = arith.constant 0 : index
    %c28_153 = arith.constant 28 : index
    %387 = vector.load %arg26[%c0_152, %c28_153] : memref<8x32xf32, #tpu.memory_space<vmem>>, vector<8x4xf32>
    tpu.vector_store %arg26[%c0_152, %c28_153], %386 {strides = array<i32>} : memref<8x32xf32, #tpu.memory_space<vmem>>, vector<8x4xf32>,
    %c0_154 = arith.constant 0 : index
    %c0_155 = arith.constant 0 : index
    %388 = vector.load %arg26[%c0_154, %c0_155] : memref<8x32xf32, #tpu.memory_space<vmem>>, vector<8x32xf32>
    %389 = arith.truncf %388 : vector<8x32xf32> to vector<8x32xbf16>
    %cst_156 = arith.constant dense<0.000000e+00> : vector<8x32xf32>
    %390 = tpu.matmul %389, %239, %cst_156 {dimension_numbers = #tpu.dot_dimension_numbers<[1], [0], [0], [1], [0, 0, 1, 1], [], []>} : vector<8x32xbf16>, vector<32x32xbf16>, vector<8x32xf32> -> vector<8x32xf32>
    %391 = vector.broadcast %240 : vector<1x32xf32> to vector<8x32xf32>
    %392 = arith.addf %390, %391 : vector<8x32xf32>
    %393 = arith.addf %211, %392 : vector<8x32xf32>
    %c0_157 = arith.constant 0 : index
    %c0_158 = arith.constant 0 : index
    %394 = vector.load %arg19[%c0_157, %c0_158] : memref<1x32xf32, #tpu.memory_space<vmem>>, vector<1x32xf32>
    %c0_159 = arith.constant 0 : index
    %c0_160 = arith.constant 0 : index
    %395 = vector.load %arg20[%c0_159, %c0_160] : memref<1x32xf32, #tpu.memory_space<vmem>>, vector<1x32xf32>
    %cst_161 = arith.constant dense<0.000000e+00> : vector<8xf32>
    %396 = vector.multi_reduction <add>, %393, %cst_161 [1] : vector<8x32xf32> to vector<8xf32>
    %397 = vector.shape_cast %396 : vector<8xf32> to vector<8x1xf32>
    %cst_162 = arith.constant 3.200000e+01 : f32
    %398 = vector.broadcast %cst_162 : f32 to vector<8x1xf32>
    %399 = arith.divf %397, %398 : vector<8x1xf32>
    %400 = vector.broadcast %399 : vector<8x1xf32> to vector<8x32xf32>
    %401 = arith.subf %393, %400 : vector<8x32xf32>
    %402 = arith.mulf %401, %401 : vector<8x32xf32>
    %cst_163 = arith.constant dense<0.000000e+00> : vector<8xf32>
    %403 = vector.multi_reduction <add>, %402, %cst_163 [1] : vector<8x32xf32> to vector<8xf32>
    %404 = vector.shape_cast %403 : vector<8xf32> to vector<8x1xf32>
    %cst_164 = arith.constant 3.200000e+01 : f32
    %405 = vector.broadcast %cst_164 : f32 to vector<8x1xf32>
    %406 = arith.divf %404, %405 : vector<8x1xf32>
    %407 = vector.broadcast %399 : vector<8x1xf32> to vector<8x32xf32>
    %408 = arith.subf %393, %407 : vector<8x32xf32>
    %cst_165 = arith.constant 9.99999974E-6 : f32
    %409 = vector.broadcast %cst_165 : f32 to vector<8x1xf32>
    %410 = arith.addf %406, %409 : vector<8x1xf32>
    %411 = math.rsqrt %410 : vector<8x1xf32>
    %412 = vector.broadcast %411 : vector<8x1xf32> to vector<8x32xf32>
    %413 = arith.mulf %408, %412 : vector<8x32xf32>
    %414 = vector.broadcast %394 : vector<1x32xf32> to vector<8x32xf32>
    %415 = arith.mulf %413, %414 : vector<8x32xf32>
    %416 = vector.broadcast %395 : vector<1x32xf32> to vector<8x32xf32>
    %417 = arith.addf %415, %416 : vector<8x32xf32>
    %418 = arith.truncf %417 : vector<8x32xf32> to vector<8x32xbf16>
    %c0_166 = arith.constant 0 : index
    %c0_167 = arith.constant 0 : index
    %419 = vector.load %arg21[%c0_166, %c0_167] : memref<32x256xbf16, #tpu.memory_space<vmem>>, vector<32x256xbf16>
    %cst_168 = arith.constant dense<0.000000e+00> : vector<8x256xf32>
    %420 = tpu.matmul %418, %419, %cst_168 {dimension_numbers = #tpu.dot_dimension_numbers<[1], [0], [0], [1], [0, 0, 1, 1], [], []>} : vector<8x32xbf16>, vector<32x256xbf16>, vector<8x256xf32> -> vector<8x256xf32>
    %c0_169 = arith.constant 0 : index
    %c0_170 = arith.constant 0 : index
    %421 = vector.load %arg22[%c0_169, %c0_170] : memref<1x256xf32, #tpu.memory_space<vmem>>, vector<1x256xf32>
    %422 = vector.broadcast %421 : vector<1x256xf32> to vector<8x256xf32>
    %423 = arith.addf %420, %422 : vector<8x256xf32>
    %424 = vector.extract_strided_slice %423 {offsets = [0, 0], sizes = [8, 128], strides = [1, 1]} : vector<8x256xf32> to vector<8x128xf32>
    %425 = vector.extract_strided_slice %423 {offsets = [0, 128], sizes = [8, 128], strides = [1, 1]} : vector<8x256xf32> to vector<8x128xf32>
    %cst_171 = arith.constant 5.000000e-01 : f32
    %426 = vector.broadcast %cst_171 : f32 to vector<8x128xf32>
    %427 = arith.mulf %426, %425 : vector<8x128xf32>
    %cst_172 = arith.constant 0.707106769 : f32
    %428 = vector.broadcast %cst_172 : f32 to vector<8x128xf32>
    %429 = arith.mulf %425, %428 : vector<8x128xf32>
    %430 = math.erf %429 : vector<8x128xf32>
    %cst_173 = arith.constant 1.000000e+00 : f32
    %431 = vector.broadcast %cst_173 : f32 to vector<8x128xf32>
    %432 = arith.addf %431, %430 : vector<8x128xf32>
    %433 = arith.mulf %427, %432 : vector<8x128xf32>
    %434 = arith.mulf %424, %433 : vector<8x128xf32>
    %435 = arith.truncf %434 : vector<8x128xf32> to vector<8x128xbf16>
    %c0_174 = arith.constant 0 : index
    %c0_175 = arith.constant 0 : index
    %436 = vector.load %arg23[%c0_174, %c0_175] : memref<128x32xbf16, #tpu.memory_space<vmem>>, vector<128x32xbf16>
    %cst_176 = arith.constant dense<0.000000e+00> : vector<8x32xf32>
    %437 = tpu.matmul %435, %436, %cst_176 {dimension_numbers = #tpu.dot_dimension_numbers<[1], [0], [0], [1], [0, 0, 1, 1], [], []>} : vector<8x128xbf16>, vector<128x32xbf16>, vector<8x32xf32> -> vector<8x32xf32>
    %438 = arith.addf %393, %437 : vector<8x32xf32>
    %c0_177 = arith.constant 0 : index
    %c0_178 = arith.constant 0 : index
    %439 = vector.load %arg24[%c0_177, %c0_178] : memref<1x32xf32, #tpu.memory_space<vmem>>, vector<1x32xf32>
    %440 = vector.broadcast %439 : vector<1x32xf32> to vector<8x32xf32>
    %441 = arith.addf %438, %440 : vector<8x32xf32>
    %c0_179 = arith.constant 0 : index
    %c0_180 = arith.constant 0 : index
    %c0_181 = arith.constant 0 : index
    %442 = vector.load %arg25[%c0_179, %c0_180, %c0_181] : memref<1x8x32xf32, #tpu.memory_space<vmem>>, vector<1x8x32xf32>
    %443 = vector.shape_cast %442 : vector<1x8x32xf32> to vector<8x32xf32>
    %444 = vector.shape_cast %441 : vector<8x32xf32> to vector<1x8x32xf32>
    tpu.vector_store %arg25[%c0_179, %c0_180, %c0_181], %444 {strides = array<i32>} : memref<1x8x32xf32, #tpu.memory_space<vmem>>, vector<1x8x32xf32>,
    return
  }
  func.func @transform_0(%arg0: i32, %arg1: i32) -> (i32, i32, i32) {
    %c0_i32 = arith.constant 0 : i32
    %c0_i32_0 = arith.constant 0 : i32
    return %arg0, %arg1, %c0_i32 : i32, i32, i32
  }
  func.func @transform_1(%arg0: i32, %arg1: i32) -> (i32, i32, i32) {
    %c0_i32 = arith.constant 0 : i32
    %c0_i32_0 = arith.constant 0 : i32
    %c0_i32_1 = arith.constant 0 : i32
    return %arg0, %c0_i32, %c0_i32_0 : i32, i32, i32
  }
  func.func @transform_2(%arg0: i32, %arg1: i32) -> (i32, i32, i32) {
    %c0_i32 = arith.constant 0 : i32
    %c0_i32_0 = arith.constant 0 : i32
    %c0_i32_1 = arith.constant 0 : i32
    return %arg0, %c0_i32, %c0_i32_0 : i32, i32, i32
  }
  func.func @transform_3(%arg0: i32, %arg1: i32) -> (i32, i32) {
    %c0_i32 = arith.constant 0 : i32
    %c0_i32_0 = arith.constant 0 : i32
    %c0_i32_1 = arith.constant 0 : i32
    return %c0_i32, %c0_i32_0 : i32, i32
  }
  func.func @transform_4(%arg0: i32, %arg1: i32) -> (i32, i32) {
    %c0_i32 = arith.constant 0 : i32
    %c0_i32_0 = arith.constant 0 : i32
    %c0_i32_1 = arith.constant 0 : i32
    return %c0_i32, %c0_i32_0 : i32, i32
  }
  func.func @transform_5(%arg0: i32, %arg1: i32) -> (i32, i32) {
    %c0_i32 = arith.constant 0 : i32
    %c0_i32_0 = arith.constant 0 : i32
    %c0_i32_1 = arith.constant 0 : i32
    return %c0_i32, %c0_i32_0 : i32, i32
  }
  func.func @transform_6(%arg0: i32, %arg1: i32) -> (i32, i32) {
    %c0_i32 = arith.constant 0 : i32
    %c0_i32_0 = arith.constant 0 : i32
    %c0_i32_1 = arith.constant 0 : i32
    return %c0_i32, %c0_i32_0 : i32, i32
  }
  func.func @transform_7(%arg0: i32, %arg1: i32) -> (i32, i32) {
    %c0_i32 = arith.constant 0 : i32
    %c0_i32_0 = arith.constant 0 : i32
    %c0_i32_1 = arith.constant 0 : i32
    return %c0_i32, %c0_i32_0 : i32, i32
  }
  func.func @transform_8(%arg0: i32, %arg1: i32) -> (i32, i32) {
    %c0_i32 = arith.constant 0 : i32
    %c0_i32_0 = arith.constant 0 : i32
    %c0_i32_1 = arith.constant 0 : i32
    return %c0_i32, %c0_i32_0 : i32, i32
  }
  func.func @transform_9(%arg0: i32, %arg1: i32) -> (i32, i32) {
    %c0_i32 = arith.constant 0 : i32
    %c0_i32_0 = arith.constant 0 : i32
    %c0_i32_1 = arith.constant 0 : i32
    return %c0_i32, %c0_i32_0 : i32, i32
  }
  func.func @transform_10(%arg0: i32, %arg1: i32) -> (i32, i32) {
    %c0_i32 = arith.constant 0 : i32
    %c0_i32_0 = arith.constant 0 : i32
    %c0_i32_1 = arith.constant 0 : i32
    return %c0_i32, %c0_i32_0 : i32, i32
  }
  func.func @transform_11(%arg0: i32, %arg1: i32) -> (i32, i32) {
    %c0_i32 = arith.constant 0 : i32
    %c0_i32_0 = arith.constant 0 : i32
    %c0_i32_1 = arith.constant 0 : i32
    return %c0_i32, %c0_i32_0 : i32, i32
  }
  func.func @transform_12(%arg0: i32, %arg1: i32) -> (i32, i32) {
    %c0_i32 = arith.constant 0 : i32
    %c0_i32_0 = arith.constant 0 : i32
    %c0_i32_1 = arith.constant 0 : i32
    return %c0_i32, %c0_i32_0 : i32, i32
  }
  func.func @transform_13(%arg0: i32, %arg1: i32) -> (i32, i32) {
    %c0_i32 = arith.constant 0 : i32
    %c0_i32_0 = arith.constant 0 : i32
    %c0_i32_1 = arith.constant 0 : i32
    return %c0_i32, %c0_i32_0 : i32, i32
  }
  func.func @transform_14(%arg0: i32, %arg1: i32) -> (i32, i32) {
    %c0_i32 = arith.constant 0 : i32
    %c0_i32_0 = arith.constant 0 : i32
    %c0_i32_1 = arith.constant 0 : i32
    return %c0_i32, %c0_i32_0 : i32, i32
  }
  func.func @transform_15(%arg0: i32, %arg1: i32) -> (i32, i32) {
    %c0_i32 = arith.constant 0 : i32
    %c0_i32_0 = arith.constant 0 : i32
    %c0_i32_1 = arith.constant 0 : i32
    return %c0_i32, %c0_i32_0 : i32, i32
  }
  func.func @transform_16(%arg0: i32, %arg1: i32) -> (i32, i32) {
    %c0_i32 = arith.constant 0 : i32
    %c0_i32_0 = arith.constant 0 : i32
    %c0_i32_1 = arith.constant 0 : i32
    return %c0_i32, %c0_i32_0 : i32, i32
  }
  func.func @transform_17(%arg0: i32, %arg1: i32) -> (i32, i32) {
    %c0_i32 = arith.constant 0 : i32
    %c0_i32_0 = arith.constant 0 : i32
    %c0_i32_1 = arith.constant 0 : i32
    return %c0_i32, %c0_i32_0 : i32, i32
  }
  func.func @transform_18(%arg0: i32, %arg1: i32) -> (i32, i32) {
    %c0_i32 = arith.constant 0 : i32
    %c0_i32_0 = arith.constant 0 : i32
    %c0_i32_1 = arith.constant 0 : i32
    return %c0_i32, %c0_i32_0 : i32, i32
  }
  func.func @transform_19(%arg0: i32, %arg1: i32) -> (i32, i32) {
    %c0_i32 = arith.constant 0 : i32
    %c0_i32_0 = arith.constant 0 : i32
    %c0_i32_1 = arith.constant 0 : i32
    return %c0_i32, %c0_i32_0 : i32, i32
  }
  func.func @transform_20(%arg0: i32, %arg1: i32) -> (i32, i32) {
    %c0_i32 = arith.constant 0 : i32
    %c0_i32_0 = arith.constant 0 : i32
    %c0_i32_1 = arith.constant 0 : i32
    return %c0_i32, %c0_i32_0 : i32, i32
  }
  func.func @transform_21(%arg0: i32, %arg1: i32) -> (i32, i32) {
    %c0_i32 = arith.constant 0 : i32
    %c0_i32_0 = arith.constant 0 : i32
    %c0_i32_1 = arith.constant 0 : i32
    return %c0_i32, %c0_i32_0 : i32, i32
  }
  func.func @transform_22(%arg0: i32, %arg1: i32) -> (i32, i32) {
    %c0_i32 = arith.constant 0 : i32
    %c0_i32_0 = arith.constant 0 : i32
    %c0_i32_1 = arith.constant 0 : i32
    return %c0_i32, %c0_i32_0 : i32, i32
  }
  func.func @transform_23(%arg0: i32, %arg1: i32) -> (i32, i32, i32) {
    %c0_i32 = arith.constant 0 : i32
    %c0_i32_0 = arith.constant 0 : i32
    return %arg0, %arg1, %c0_i32 : i32, i32, i32
  }
}

</mosaic_0001>

<llo_original>
// kernel: tpu_custom_call.1
$region0: #{tpu_custom_call.1}
  #allocation0 [shape = 'u32[]', space=smem, size = 0x4, offset = 0x4, fixed_abs, tag = 'smem constant byte address 0x4 - core index']
  #allocation1 [shape = 'u32[144,128]{1,0:T(1,128)}', space=vmem, size = 0x12000, scoped, tag = 'internal scratch']
  #allocation2 [shape = 'f32[8,32]{1,0:T(8,128)}', space=vmem, size = 0x1000, scoped, tag = 'scratch operand']
  %s0 = inlined_call_operand.vmem [shape: f32[2,8,32], index: 0, kind: input, shape index: {}]
  %s1 = inlined_call_operand.vmem [shape: f32[2,8,32], index: 1, kind: input, shape index: {}]
  %s2 = inlined_call_operand.vmem [shape: f32[2,8,16], index: 2, kind: input, shape index: {}]
  %s3 = inlined_call_operand.vmem [shape: f32[1,32], index: 3, kind: input, shape index: {}]
  %s4 = inlined_call_operand.hbm [shape: f32[1,32], index: 4, kind: input, shape index: {}]
  %s5 = inlined_call_operand.hbm [shape: bf16[32,32], index: 5, kind: input, shape index: {}]
  %s6 = inlined_call_operand.hbm [shape: bf16[32,32], index: 6, kind: input, shape index: {}]
  %s7 = inlined_call_operand.hbm [shape: bf16[32,32], index: 7, kind: input, shape index: {}]
  %s8 = inlined_call_operand.hbm [shape: bf16[32,32], index: 8, kind: input, shape index: {}]
  %s9 = inlined_call_operand.hbm [shape: f32[1,32], index: 9, kind: input, shape index: {}]
  %s10 = inlined_call_operand.hbm [shape: f32[1,32], index: 10, kind: input, shape index: {}]
  %s11 = inlined_call_operand.hbm [shape: f32[1,32], index: 11, kind: input, shape index: {}]
  %s12 = inlined_call_operand.vmem [shape: bf16[32,32], index: 12, kind: input, shape index: {}]
  %s13 = inlined_call_operand.hbm [shape: bf16[16,32], index: 13, kind: input, shape index: {}]
  %s14 = inlined_call_operand.hbm [shape: bf16[16,32], index: 14, kind: input, shape index: {}]
  %s15 = inlined_call_operand.vmem [shape: bf16[32,32], index: 15, kind: input, shape index: {}]
  %s16 = inlined_call_operand.vmem [shape: f32[1,32], index: 16, kind: input, shape index: {}]
  %s17 = inlined_call_operand.vmem [shape: f32[1,32], index: 17, kind: input, shape index: {}]
  %s18 = inlined_call_operand.vmem [shape: f32[1,32], index: 18, kind: input, shape index: {}]
  %s19 = inlined_call_operand.vmem [shape: bf16[32,256], index: 19, kind: input, shape index: {}]
  %s20 = inlined_call_operand.vmem [shape: f32[1,256], index: 20, kind: input, shape index: {}]
  %s21 = inlined_call_operand.vmem [shape: bf16[128,32], index: 21, kind: input, shape index: {}]
  %s22 = inlined_call_operand.vmem [shape: f32[1,32], index: 22, kind: input, shape index: {}]
  %s23 = inlined_call_operand.hbm [shape: f32[2,8,32], index: 23, kind: output, shape index: {}]
  %s24 = sld [smem:[#allocation0]]
  $region165: #{tpu_custom_call.1} parent=0
    _
  %s26 = ssub.s32 1, %s24
  %s27 = scalar_select 0, %s26, %s24
  $region1: #{tpu_custom_call.1} parent=0
    #allocation3 [shape = 'u8[512]{0}', space=vmem, size = 0x400, scoped, tag = 'input window, operand 4, single buffered']
    #allocation4 [shape = 's32[2]{0}', space=sflag, size = 0x8, scoped, tag = 'scoped memory for tpu_custom_call.1']
    #allocation5 [shape = 's32[2]{0}', space=sflag, size = 0x8, scoped, tag = 'scoped memory for tpu_custom_call.1']
    #allocation6 [shape = 'u8[8192]{0}', space=vmem, size = 0x2000, scoped, tag = 'input window, operand 5, single buffered']
    #allocation7 [shape = 's32[1]{0}', space=sflag, size = 0x4, scoped, tag = 'scoped memory for tpu_custom_call.1']
    #allocation8 [shape = 'u8[8192]{0}', space=vmem, size = 0x2000, scoped, tag = 'input window, operand 6, single buffered']
    #allocation9 [shape = 'u8[8192]{0}', space=vmem, size = 0x2000, scoped, tag = 'input window, operand 7, single buffered']
    #allocation10 [shape = 's32[1]{0}', space=sflag, size = 0x4, scoped, tag = 'scoped memory for tpu_custom_call.1']
    #allocation11 [shape = 'u8[8192]{0}', space=vmem, size = 0x2000, scoped, tag = 'input window, operand 8, single buffered']
    #allocation12 [shape = 'u8[512]{0}', space=vmem, size = 0x400, scoped, tag = 'input window, operand 9, single buffered']
    #allocation13 [shape = 's32[1]{0}', space=sflag, size = 0x4, scoped, tag = 'scoped memory for tpu_custom_call.1']
    #allocation14 [shape = 'u8[512]{0}', space=vmem, size = 0x400, scoped, tag = 'input window, operand 10, single buffered']
    #allocation15 [shape = 'u8[512]{0}', space=vmem, size = 0x400, scoped, tag = 'input window, operand 11, single buffered']
    #allocation16 [shape = 's32[1]{0}', space=sflag, size = 0x4, scoped, tag = 'scoped memory for tpu_custom_call.1']
    #allocation17 [shape = 'u8[4096]{0}', space=vmem, size = 0x1000, scoped, tag = 'input window, operand 13, single buffered']
    #allocation18 [shape = 'u8[4096]{0}', space=vmem, size = 0x1000, scoped, tag = 'input window, operand 14, single buffered']
    #allocation19 [shape = 's32[1]{0}', space=sflag, size = 0x4, scoped, tag = 'scoped memory for tpu_custom_call.1']
    #allocation20 [shape = 'u8[8192]{0}', space=vmem, size = 0x2000, scoped, tag = 'output window, operand 0']
    %28 = vsyncpa [#allocation4], 0
    %29 = vsyncpa [#allocation7], 0
    %30 = vsyncpa [#allocation10], 0
    %31 = vsyncpa [#allocation13], 0
    %32 = vsyncpa [#allocation16], 0
    %33 = vsyncpa [#allocation19], 0
    %34 = vsyncpa [#allocation5], 0
    %s35 = scalar_lea.sflag [#allocation5], 1
    %36 = vsyncpa %s35, 0
    loop: start=0, step=1, limit=4
    $region2: #{tpu_custom_call.1} parent=1 // loop_pre_header
      _
    $region3: #{tpu_custom_call.1} parent=1 // loop_header
      %s38 = sphi 0, %s42
      %p39 = scmp.ge.s32.totalorder %s38, 4
      %s45 = sphi 0, %s57
      %s46 = sphi 0, %s53
      %s47 = sphi 0, %s45
      %s48 = sphi 0, %s46
      %s49 = sphi 0, %s47
      %s50 = sphi 0, %s48
      %s62 = sphi 0, %s64
      %s65 = sphi 0, %s62
      %s66 = sphi 0, %s65
      %s82 = sphi 0, %s66
      %s88 = sphi 0, %s90
      %s91 = sphi 0, %s88
      %s92 = sphi 0, %s91
      %s108 = sphi 0, %s92
      %s114 = sphi 0, %s116
      %s117 = sphi 0, %s114
      %s118 = sphi 0, %s117
      %s134 = sphi 0, %s118
      %s138 = sphi 0, %s138
      %s140 = sphi 0, %s138
      %s141 = sphi 0, %s140
      %s155 = sphi 0, %s141
      %s159 = sphi 0, %s159
      %s161 = sphi 0, %s159
      %s162 = sphi 0, %s161
      %s176 = sphi 0, %s162
      %s180 = sphi 0, %s180
      %s182 = sphi 0, %s180
      %s183 = sphi 0, %s182
      %s197 = sphi 0, %s183
      %s201 = sphi 0, %s201
      %s203 = sphi 0, %s201
      %s204 = sphi 0, %s203
      %s218 = sphi 0, %s204
      %s222 = sphi 0, %s222
      %s224 = sphi 0, %s222
      %s225 = sphi 0, %s224
      %s239 = sphi 0, %s225
      %s243 = sphi 0, %s243
      %s245 = sphi 0, %s243
      %s246 = sphi 0, %s245
      %s260 = sphi 0, %s246
      %s264 = sphi 0, %s264
      %s266 = sphi 0, %s264
      %s267 = sphi 0, %s266
      %s281 = sphi 0, %s267
      %s285 = sphi 0, %s285
      %s287 = sphi 0, %s285
      %s288 = sphi 0, %s287
      %s302 = sphi 0, %s288
      %s306 = sphi 0, %s306
      %s308 = sphi 0, %s306
      %s309 = sphi 0, %s308
      %s323 = sphi 0, %s309
      %s327 = sphi 0, %s327
      %s329 = sphi 0, %s327
      %s330 = sphi 0, %s329
      %s344 = sphi 0, %s330
      %s348 = sphi 0, %s348
      %s350 = sphi 0, %s348
      %s351 = sphi 0, %s350
      %s365 = sphi 0, %s351
      %s369 = sphi 0, %s369
      %s371 = sphi 0, %s369
      %s372 = sphi 0, %s371
      %s386 = sphi 0, %s372
      %s390 = sphi 0, %s390
      %s392 = sphi 0, %s390
      %s393 = sphi 0, %s392
      %s407 = sphi 0, %s393
      %s411 = sphi 0, %s411
      %s413 = sphi 0, %s411
      %s414 = sphi 0, %s413
      %s428 = sphi 0, %s414
      %s432 = sphi 0, %s432
      %s434 = sphi 0, %s432
      %s435 = sphi 0, %s434
      %s449 = sphi 0, %s435
      %s453 = sphi 0, %s453
      %s455 = sphi 0, %s453
      %s456 = sphi 0, %s455
      %s470 = sphi 0, %s456
      %s474 = sphi 0, %s474
      %s476 = sphi 0, %s474
      %s477 = sphi 0, %s476
      %s491 = sphi 0, %s477
      %s495 = sphi 0, %s495
      %s497 = sphi 0, %s495
      %s498 = sphi 0, %s497
      %s512 = sphi 0, %s498
      %s516 = sphi 0, %s516
      %s518 = sphi 0, %s516
      %s519 = sphi 0, %s518
      %s533 = sphi 0, %s519
      %s537 = sphi 0, %s537
      %s539 = sphi 0, %s537
      %s540 = sphi 0, %s539
      %s554 = sphi 0, %s540
      %s562 = sphi 0, %s564
      %s565 = sphi 0, %s562
      %s566 = sphi 0, %s565
      %s582 = sphi 0, %s566
    $region4: #{tpu_custom_call.1} parent=1 // loop_header_branch
      %41 = sbr.rel (%p39) target = $region8
    $region5: #{tpu_custom_call.1} parent=1 // loop_body
      %s43 = ssub.s32 %s38, 1
      %s44 = ssub.s32 %s38, 2
      %s51 = sadd.s32 1, %s46
      %p52 = scmp.ge.s32.totalorder %s51, 1
      %s53 = scalar_select %p52, 0, %s51
      %s54 = sadd.s32 1, %s45
      %s55 = scalar_select %p52, %s54, %s45
      %p56 = scmp.ge.s32.totalorder %s55, 2
      %s57 = scalar_select %p56, 0, %s55
      %s58 = ssub.s32 %s45, %s57
      %s59 = ssub.s32 %s46, %s53
      %s60 = sor.u32 %s58, %s59
      %p61 = scmp.eq.s32.totalorder %s60, 0
      %s63 = sadd.s32 %s62, 1
      %s64 = scalar_select %p61, %s62, %s63
      %p67 = pneg %p61
      %p68 = scmp.eq.s32.totalorder %s38, 1
      %p69 = por %p67, %p68
      %p70 = scmp.ne.s32.totalorder %s62, %s65
      %p71 = scmp.eq.s32.totalorder %s38, 0
      %p72 = por %p70, %p71
      %p73 = scmp.ne.s32.totalorder %s62, %s65
      %p74 = scmp.eq.s32.totalorder %s43, 1
      %p75 = por %p73, %p74
      %p76 = scmp.ne.s32.totalorder %s65, %s66
      %p77 = scmp.eq.s32.totalorder %s43, 0
      %p78 = por %p76, %p77
      %p79 = scmp.ne.s32.totalorder %s65, %s66
      %p80 = scmp.eq.s32.totalorder %s44, 1
      %p81 = por %p79, %p80
      %p83 = scmp.ne.s32.totalorder %s66, %s82
      %p84 = scmp.eq.s32.totalorder %s44, 0
      %p85 = por %p83, %p84
      %s86 = ssub.s32 %s45, %s57
      %p87 = scmp.eq.s32.totalorder %s86, 0
      %s89 = sadd.s32 %s88, 1
      %s90 = scalar_select %p87, %s88, %s89
      %p93 = pneg %p87
      %p94 = scmp.eq.s32.totalorder %s38, 1
      %p95 = por %p93, %p94
      %p96 = scmp.ne.s32.totalorder %s88, %s91
      %p97 = scmp.eq.s32.totalorder %s38, 0
      %p98 = por %p96, %p97
      %p99 = scmp.ne.s32.totalorder %s88, %s91
      %p100 = scmp.eq.s32.totalorder %s43, 1
      %p101 = por %p99, %p100
      %p102 = scmp.ne.s32.totalorder %s91, %s92
      %p103 = scmp.eq.s32.totalorder %s43, 0
      %p104 = por %p102, %p103
      %p105 = scmp.ne.s32.totalorder %s91, %s92
      %p106 = scmp.eq.s32.totalorder %s44, 1
      %p107 = por %p105, %p106
      %p109 = scmp.ne.s32.totalorder %s92, %s108
      %p110 = scmp.eq.s32.totalorder %s44, 0
      %p111 = por %p109, %p110
      %s112 = ssub.s32 %s45, %s57
      %p113 = scmp.eq.s32.totalorder %s112, 0
      %s115 = sadd.s32 %s114, 1
      %s116 = scalar_select %p113, %s114, %s115
      %p119 = pneg %p113
      %p120 = scmp.eq.s32.totalorder %s38, 1
      %p121 = por %p119, %p120
      %p122 = scmp.ne.s32.totalorder %s114, %s117
      %p123 = scmp.eq.s32.totalorder %s38, 0
      %p124 = por %p122, %p123
      %p125 = scmp.ne.s32.totalorder %s114, %s117
      %p126 = scmp.eq.s32.totalorder %s43, 1
      %p127 = por %p125, %p126
      %p128 = scmp.ne.s32.totalorder %s117, %s118
      %p129 = scmp.eq.s32.totalorder %s43, 0
      %p130 = por %p128, %p129
      %p131 = scmp.ne.s32.totalorder %s117, %s118
      %p132 = scmp.eq.s32.totalorder %s44, 1
      %p133 = por %p131, %p132
      %p135 = scmp.ne.s32.totalorder %s118, %s134
      %p136 = scmp.eq.s32.totalorder %s44, 0
      %p137 = por %p135, %p136
      %s139 = sadd.s32 %s138, 1
      %p142 = scmp.eq.s32.totalorder %s38, 1
      %p143 = scmp.ne.s32.totalorder %s138, %s140
      %p144 = scmp.eq.s32.totalorder %s38, 0
      %p145 = por %p143, %p144
      %p146 = scmp.ne.s32.totalorder %s138, %s140
      %p147 = scmp.eq.s32.totalorder %s43, 1
      %p148 = por %p146, %p147
      %p149 = scmp.ne.s32.totalorder %s140, %s141
      %p150 = scmp.eq.s32.totalorder %s43, 0
      %p151 = por %p149, %p150
      %p152 = scmp.ne.s32.totalorder %s140, %s141
      %p153 = scmp.eq.s32.totalorder %s44, 1
      %p154 = por %p152, %p153
      %p156 = scmp.ne.s32.totalorder %s141, %s155
      %p157 = scmp.eq.s32.totalorder %s44, 0
      %p158 = por %p156, %p157
      %s160 = sadd.s32 %s159, 1
      %p163 = scmp.eq.s32.totalorder %s38, 1
      %p164 = scmp.ne.s32.totalorder %s159, %s161
      %p165 = scmp.eq.s32.totalorder %s38, 0
      %p166 = por %p164, %p165
      %p167 = scmp.ne.s32.totalorder %s159, %s161
      %p168 = scmp.eq.s32.totalorder %s43, 1
      %p169 = por %p167, %p168
      %p170 = scmp.ne.s32.totalorder %s161, %s162
      %p171 = scmp.eq.s32.totalorder %s43, 0
      %p172 = por %p170, %p171
      %p173 = scmp.ne.s32.totalorder %s161, %s162
      %p174 = scmp.eq.s32.totalorder %s44, 1
      %p175 = por %p173, %p174
      %p177 = scmp.ne.s32.totalorder %s162, %s176
      %p178 = scmp.eq.s32.totalorder %s44, 0
      %p179 = por %p177, %p178
      %s181 = sadd.s32 %s180, 1
      %p184 = scmp.eq.s32.totalorder %s38, 1
      %p185 = scmp.ne.s32.totalorder %s180, %s182
      %p186 = scmp.eq.s32.totalorder %s38, 0
      %p187 = por %p185, %p186
      %p188 = scmp.ne.s32.totalorder %s180, %s182
      %p189 = scmp.eq.s32.totalorder %s43, 1
      %p190 = por %p188, %p189
      %p191 = scmp.ne.s32.totalorder %s182, %s183
      %p192 = scmp.eq.s32.totalorder %s43, 0
      %p193 = por %p191, %p192
      %p194 = scmp.ne.s32.totalorder %s182, %s183
      %p195 = scmp.eq.s32.totalorder %s44, 1
      %p196 = por %p194, %p195
      %p198 = scmp.ne.s32.totalorder %s183, %s197
      %p199 = scmp.eq.s32.totalorder %s44, 0
      %p200 = por %p198, %p199
      %s202 = sadd.s32 %s201, 1
      %p205 = scmp.eq.s32.totalorder %s38, 1
      %p206 = scmp.ne.s32.totalorder %s201, %s203
      %p207 = scmp.eq.s32.totalorder %s38, 0
      %p208 = por %p206, %p207
      %p209 = scmp.ne.s32.totalorder %s201, %s203
      %p210 = scmp.eq.s32.totalorder %s43, 1
      %p211 = por %p209, %p210
      %p212 = scmp.ne.s32.totalorder %s203, %s204
      %p213 = scmp.eq.s32.totalorder %s43, 0
      %p214 = por %p212, %p213
      %p215 = scmp.ne.s32.totalorder %s203, %s204
      %p216 = scmp.eq.s32.totalorder %s44, 1
      %p217 = por %p215, %p216
      %p219 = scmp.ne.s32.totalorder %s204, %s218
      %p220 = scmp.eq.s32.totalorder %s44, 0
      %p221 = por %p219, %p220
      %s223 = sadd.s32 %s222, 1
      %p226 = scmp.eq.s32.totalorder %s38, 1
      %p227 = scmp.ne.s32.totalorder %s222, %s224
      %p228 = scmp.eq.s32.totalorder %s38, 0
      %p229 = por %p227, %p228
      %p230 = scmp.ne.s32.totalorder %s222, %s224
      %p231 = scmp.eq.s32.totalorder %s43, 1
      %p232 = por %p230, %p231
      %p233 = scmp.ne.s32.totalorder %s224, %s225
      %p234 = scmp.eq.s32.totalorder %s43, 0
      %p235 = por %p233, %p234
      %p236 = scmp.ne.s32.totalorder %s224, %s225
      %p237 = scmp.eq.s32.totalorder %s44, 1
      %p238 = por %p236, %p237
      %p240 = scmp.ne.s32.totalorder %s225, %s239
      %p241 = scmp.eq.s32.totalorder %s44, 0
      %p242 = por %p240, %p241
      %s244 = sadd.s32 %s243, 1
      %p247 = scmp.eq.s32.totalorder %s38, 1
      %p248 = scmp.ne.s32.totalorder %s243, %s245
      %p249 = scmp.eq.s32.totalorder %s38, 0
      %p250 = por %p248, %p249
      %p251 = scmp.ne.s32.totalorder %s243, %s245
      %p252 = scmp.eq.s32.totalorder %s43, 1
      %p253 = por %p251, %p252
      %p254 = scmp.ne.s32.totalorder %s245, %s246
      %p255 = scmp.eq.s32.totalorder %s43, 0
      %p256 = por %p254, %p255
      %p257 = scmp.ne.s32.totalorder %s245, %s246
      %p258 = scmp.eq.s32.totalorder %s44, 1
      %p259 = por %p257, %p258
      %p261 = scmp.ne.s32.totalorder %s246, %s260
      %p262 = scmp.eq.s32.totalorder %s44, 0
      %p263 = por %p261, %p262
      %s265 = sadd.s32 %s264, 1
      %p268 = scmp.eq.s32.totalorder %s38, 1
      %p269 = scmp.ne.s32.totalorder %s264, %s266
      %p270 = scmp.eq.s32.totalorder %s38, 0
      %p271 = por %p269, %p270
      %p272 = scmp.ne.s32.totalorder %s264, %s266
      %p273 = scmp.eq.s32.totalorder %s43, 1
      %p274 = por %p272, %p273
      %p275 = scmp.ne.s32.totalorder %s266, %s267
      %p276 = scmp.eq.s32.totalorder %s43, 0
      %p277 = por %p275, %p276
      %p278 = scmp.ne.s32.totalorder %s266, %s267
      %p279 = scmp.eq.s32.totalorder %s44, 1
      %p280 = por %p278, %p279
      %p282 = scmp.ne.s32.totalorder %s267, %s281
      %p283 = scmp.eq.s32.totalorder %s44, 0
      %p284 = por %p282, %p283
      %s286 = sadd.s32 %s285, 1
      %p289 = scmp.eq.s32.totalorder %s38, 1
      %p290 = scmp.ne.s32.totalorder %s285, %s287
      %p291 = scmp.eq.s32.totalorder %s38, 0
      %p292 = por %p290, %p291
      %p293 = scmp.ne.s32.totalorder %s285, %s287
      %p294 = scmp.eq.s32.totalorder %s43, 1
      %p295 = por %p293, %p294
      %p296 = scmp.ne.s32.totalorder %s287, %s288
      %p297 = scmp.eq.s32.totalorder %s43, 0
      %p298 = por %p296, %p297
      %p299 = scmp.ne.s32.totalorder %s287, %s288
      %p300 = scmp.eq.s32.totalorder %s44, 1
      %p301 = por %p299, %p300
      %p303 = scmp.ne.s32.totalorder %s288, %s302
      %p304 = scmp.eq.s32.totalorder %s44, 0
      %p305 = por %p303, %p304
      %s307 = sadd.s32 %s306, 1
      %p310 = scmp.eq.s32.totalorder %s38, 1
      %p311 = scmp.ne.s32.totalorder %s306, %s308
      %p312 = scmp.eq.s32.totalorder %s38, 0
      %p313 = por %p311, %p312
      %p314 = scmp.ne.s32.totalorder %s306, %s308
      %p315 = scmp.eq.s32.totalorder %s43, 1
      %p316 = por %p314, %p315
      %p317 = scmp.ne.s32.totalorder %s308, %s309
      %p318 = scmp.eq.s32.totalorder %s43, 0
      %p319 = por %p317, %p318
      %p320 = scmp.ne.s32.totalorder %s308, %s309
      %p321 = scmp.eq.s32.totalorder %s44, 1
      %p322 = por %p320, %p321
      %p324 = scmp.ne.s32.totalorder %s309, %s323
      %p325 = scmp.eq.s32.totalorder %s44, 0
      %p326 = por %p324, %p325
      %s328 = sadd.s32 %s327, 1
      %p331 = scmp.eq.s32.totalorder %s38, 1
      %p332 = scmp.ne.s32.totalorder %s327, %s329
      %p333 = scmp.eq.s32.totalorder %s38, 0
      %p334 = por %p332, %p333
      %p335 = scmp.ne.s32.totalorder %s327, %s329
      %p336 = scmp.eq.s32.totalorder %s43, 1
      %p337 = por %p335, %p336
      %p338 = scmp.ne.s32.totalorder %s329, %s330
      %p339 = scmp.eq.s32.totalorder %s43, 0
      %p340 = por %p338, %p339
      %p341 = scmp.ne.s32.totalorder %s329, %s330
      %p342 = scmp.eq.s32.totalorder %s44, 1
      %p343 = por %p341, %p342
      %p345 = scmp.ne.s32.totalorder %s330, %s344
      %p346 = scmp.eq.s32.totalorder %s44, 0
      %p347 = por %p345, %p346
      %s349 = sadd.s32 %s348, 1
      %p352 = scmp.eq.s32.totalorder %s38, 1
      %p353 = scmp.ne.s32.totalorder %s348, %s350
      %p354 = scmp.eq.s32.totalorder %s38, 0
      %p355 = por %p353, %p354
      %p356 = scmp.ne.s32.totalorder %s348, %s350
      %p357 = scmp.eq.s32.totalorder %s43, 1
      %p358 = por %p356, %p357
      %p359 = scmp.ne.s32.totalorder %s350, %s351
      %p360 = scmp.eq.s32.totalorder %s43, 0
      %p361 = por %p359, %p360
      %p362 = scmp.ne.s32.totalorder %s350, %s351
      %p363 = scmp.eq.s32.totalorder %s44, 1
      %p364 = por %p362, %p363
      %p366 = scmp.ne.s32.totalorder %s351, %s365
      %p367 = scmp.eq.s32.totalorder %s44, 0
      %p368 = por %p366, %p367
      %s370 = sadd.s32 %s369, 1
      %p373 = scmp.eq.s32.totalorder %s38, 1
      %p374 = scmp.ne.s32.totalorder %s369, %s371
      %p375 = scmp.eq.s32.totalorder %s38, 0
      %p376 = por %p374, %p375
      %p377 = scmp.ne.s32.totalorder %s369, %s371
      %p378 = scmp.eq.s32.totalorder %s43, 1
      %p379 = por %p377, %p378
      %p380 = scmp.ne.s32.totalorder %s371, %s372
      %p381 = scmp.eq.s32.totalorder %s43, 0
      %p382 = por %p380, %p381
      %p383 = scmp.ne.s32.totalorder %s371, %s372
      %p384 = scmp.eq.s32.totalorder %s44, 1
      %p385 = por %p383, %p384
      %p387 = scmp.ne.s32.totalorder %s372, %s386
      %p388 = scmp.eq.s32.totalorder %s44, 0
      %p389 = por %p387, %p388
      %s391 = sadd.s32 %s390, 1
      %p394 = scmp.eq.s32.totalorder %s38, 1
      %p395 = scmp.ne.s32.totalorder %s390, %s392
      %p396 = scmp.eq.s32.totalorder %s38, 0
      %p397 = por %p395, %p396
      %p398 = scmp.ne.s32.totalorder %s390, %s392
      %p399 = scmp.eq.s32.totalorder %s43, 1
      %p400 = por %p398, %p399
      %p401 = scmp.ne.s32.totalorder %s392, %s393
      %p402 = scmp.eq.s32.totalorder %s43, 0
      %p403 = por %p401, %p402
      %p404 = scmp.ne.s32.totalorder %s392, %s393
      %p405 = scmp.eq.s32.totalorder %s44, 1
      %p406 = por %p404, %p405
      %p408 = scmp.ne.s32.totalorder %s393, %s407
      %p409 = scmp.eq.s32.totalorder %s44, 0
      %p410 = por %p408, %p409
      %s412 = sadd.s32 %s411, 1
      %p415 = scmp.eq.s32.totalorder %s38, 1
      %p416 = scmp.ne.s32.totalorder %s411, %s413
      %p417 = scmp.eq.s32.totalorder %s38, 0
      %p418 = por %p416, %p417
      %p419 = scmp.ne.s32.totalorder %s411, %s413
      %p420 = scmp.eq.s32.totalorder %s43, 1
      %p421 = por %p419, %p420
      %p422 = scmp.ne.s32.totalorder %s413, %s414
      %p423 = scmp.eq.s32.totalorder %s43, 0
      %p424 = por %p422, %p423
      %p425 = scmp.ne.s32.totalorder %s413, %s414
      %p426 = scmp.eq.s32.totalorder %s44, 1
      %p427 = por %p425, %p426
      %p429 = scmp.ne.s32.totalorder %s414, %s428
      %p430 = scmp.eq.s32.totalorder %s44, 0
      %p431 = por %p429, %p430
      %s433 = sadd.s32 %s432, 1
      %p436 = scmp.eq.s32.totalorder %s38, 1
      %p437 = scmp.ne.s32.totalorder %s432, %s434
      %p438 = scmp.eq.s32.totalorder %s38, 0
      %p439 = por %p437, %p438
      %p440 = scmp.ne.s32.totalorder %s432, %s434
      %p441 = scmp.eq.s32.totalorder %s43, 1
      %p442 = por %p440, %p441
      %p443 = scmp.ne.s32.totalorder %s434, %s435
      %p444 = scmp.eq.s32.totalorder %s43, 0
      %p445 = por %p443, %p444
      %p446 = scmp.ne.s32.totalorder %s434, %s435
      %p447 = scmp.eq.s32.totalorder %s44, 1
      %p448 = por %p446, %p447
      %p450 = scmp.ne.s32.totalorder %s435, %s449
      %p451 = scmp.eq.s32.totalorder %s44, 0
      %p452 = por %p450, %p451
      %s454 = sadd.s32 %s453, 1
      %p457 = scmp.eq.s32.totalorder %s38, 1
      %p458 = scmp.ne.s32.totalorder %s453, %s455
      %p459 = scmp.eq.s32.totalorder %s38, 0
      %p460 = por %p458, %p459
      %p461 = scmp.ne.s32.totalorder %s453, %s455
      %p462 = scmp.eq.s32.totalorder %s43, 1
      %p463 = por %p461, %p462
      %p464 = scmp.ne.s32.totalorder %s455, %s456
      %p465 = scmp.eq.s32.totalorder %s43, 0
      %p466 = por %p464, %p465
      %p467 = scmp.ne.s32.totalorder %s455, %s456
      %p468 = scmp.eq.s32.totalorder %s44, 1
      %p469 = por %p467, %p468
      %p471 = scmp.ne.s32.totalorder %s456, %s470
      %p472 = scmp.eq.s32.totalorder %s44, 0
      %p473 = por %p471, %p472
      %s475 = sadd.s32 %s474, 1
      %p478 = scmp.eq.s32.totalorder %s38, 1
      %p479 = scmp.ne.s32.totalorder %s474, %s476
      %p480 = scmp.eq.s32.totalorder %s38, 0
      %p481 = por %p479, %p480
      %p482 = scmp.ne.s32.totalorder %s474, %s476
      %p483 = scmp.eq.s32.totalorder %s43, 1
      %p484 = por %p482, %p483
      %p485 = scmp.ne.s32.totalorder %s476, %s477
      %p486 = scmp.eq.s32.totalorder %s43, 0
      %p487 = por %p485, %p486
      %p488 = scmp.ne.s32.totalorder %s476, %s477
      %p489 = scmp.eq.s32.totalorder %s44, 1
      %p490 = por %p488, %p489
      %p492 = scmp.ne.s32.totalorder %s477, %s491
      %p493 = scmp.eq.s32.totalorder %s44, 0
      %p494 = por %p492, %p493
      %s496 = sadd.s32 %s495, 1
      %p499 = scmp.eq.s32.totalorder %s38, 1
      %p500 = scmp.ne.s32.totalorder %s495, %s497
      %p501 = scmp.eq.s32.totalorder %s38, 0
      %p502 = por %p500, %p501
      %p503 = scmp.ne.s32.totalorder %s495, %s497
      %p504 = scmp.eq.s32.totalorder %s43, 1
      %p505 = por %p503, %p504
      %p506 = scmp.ne.s32.totalorder %s497, %s498
      %p507 = scmp.eq.s32.totalorder %s43, 0
      %p508 = por %p506, %p507
      %p509 = scmp.ne.s32.totalorder %s497, %s498
      %p510 = scmp.eq.s32.totalorder %s44, 1
      %p511 = por %p509, %p510
      %p513 = scmp.ne.s32.totalorder %s498, %s512
      %p514 = scmp.eq.s32.totalorder %s44, 0
      %p515 = por %p513, %p514
      %s517 = sadd.s32 %s516, 1
      %p520 = scmp.eq.s32.totalorder %s38, 1
      %p521 = scmp.ne.s32.totalorder %s516, %s518
      %p522 = scmp.eq.s32.totalorder %s38, 0
      %p523 = por %p521, %p522
      %p524 = scmp.ne.s32.totalorder %s516, %s518
      %p525 = scmp.eq.s32.totalorder %s43, 1
      %p526 = por %p524, %p525
      %p527 = scmp.ne.s32.totalorder %s518, %s519
      %p528 = scmp.eq.s32.totalorder %s43, 0
      %p529 = por %p527, %p528
      %p530 = scmp.ne.s32.totalorder %s518, %s519
      %p531 = scmp.eq.s32.totalorder %s44, 1
      %p532 = por %p530, %p531
      %p534 = scmp.ne.s32.totalorder %s519, %s533
      %p535 = scmp.eq.s32.totalorder %s44, 0
      %p536 = por %p534, %p535
      %s538 = sadd.s32 %s537, 1
      %p541 = scmp.eq.s32.totalorder %s38, 1
      %p542 = scmp.ne.s32.totalorder %s537, %s539
      %p543 = scmp.eq.s32.totalorder %s38, 0
      %p544 = por %p542, %p543
      %p545 = scmp.ne.s32.totalorder %s537, %s539
      %p546 = scmp.eq.s32.totalorder %s43, 1
      %p547 = por %p545, %p546
      %p548 = scmp.ne.s32.totalorder %s539, %s540
      %p549 = scmp.eq.s32.totalorder %s43, 0
      %p550 = por %p548, %p549
      %p551 = scmp.ne.s32.totalorder %s539, %s540
      %p552 = scmp.eq.s32.totalorder %s44, 1
      %p553 = por %p551, %p552
      %p555 = scmp.ne.s32.totalorder %s540, %s554
      %p556 = scmp.eq.s32.totalorder %s44, 0
      %p557 = por %p555, %p556
      %s558 = ssub.s32 %s45, %s57
      %s559 = ssub.s32 %s46, %s53
      %s560 = sor.u32 %s558, %s559
      %p561 = scmp.eq.s32.totalorder %s560, 0
      %s563 = sadd.s32 %s562, 1
      %s564 = scalar_select %p561, %s562, %s563
      %p567 = pneg %p561
      %p568 = scmp.eq.s32.totalorder %s38, 1
      %p569 = por %p567, %p568
      %p570 = scmp.ne.s32.totalorder %s562, %s565
      %p571 = scmp.eq.s32.totalorder %s38, 0
      %p572 = por %p570, %p571
      %p573 = scmp.ne.s32.totalorder %s562, %s565
      %p574 = scmp.eq.s32.totalorder %s43, 1
      %p575 = por %p573, %p574
      %p576 = scmp.ne.s32.totalorder %s565, %s566
      %p577 = scmp.eq.s32.totalorder %s43, 0
      %p578 = por %p576, %p577
      %p579 = scmp.ne.s32.totalorder %s565, %s566
      %p580 = scmp.eq.s32.totalorder %s44, 1
      %p581 = por %p579, %p580
      %p583 = scmp.ne.s32.totalorder %s566, %s582
      %p584 = scmp.eq.s32.totalorder %s44, 0
      %p585 = por %p583, %p584
      %p586 = scmp.le.s32.totalorder 1, %s38
      %p587 = scmp.lt.s32.totalorder %s38, 3
      %p588 = pnand %p586, %p587
      %p589 = pneg %p588
      // Predicated region
      $region9: #{tpu_custom_call.1} parent=5 // pred_check
        _
      $region10: #{tpu_custom_call.1} parent=5 // pred_check_branch
        %591 = sbr.rel (%p588) target = $region12
      $region11: #{tpu_custom_call.1} parent=5 // pred_region
        %s592 = ssub.s32 %s38, 1
        // Predicated region
        $region13: #{tpu_custom_call.1} parent=11 // pred_check
          %p593 = pneg %p151
        $region14: #{tpu_custom_call.1} parent=11 // pred_check_branch
          %595 = sbr.rel (%p593) target = $region16
        $region15: #{tpu_custom_call.1} parent=11 // pred_region
          _
        $region16: #{tpu_custom_call.1} parent=11 // pred_fallthru
          _
        // Predicated region
        $region17: #{tpu_custom_call.1} parent=11 // pred_check
          %p596 = pneg %p172
        $region18: #{tpu_custom_call.1} parent=11 // pred_check_branch
          %598 = sbr.rel (%p596) target = $region20
        $region19: #{tpu_custom_call.1} parent=11 // pred_region
          %s600 = ssub.s32 16, 16
          %601 = vsyncadd [#allocation4], %s600
          %s603 = sshll.u32 [#allocation3], 4
          %s604 = int_to_ptr.vmem [resolvable:$true] %s603
          %606 = dma.hbm_to_vmem [thread:$0]  %s4, 16, %s604, [#allocation4]
        $region20: #{tpu_custom_call.1} parent=11 // pred_fallthru
          _
        // Predicated region
        $region21: #{tpu_custom_call.1} parent=11 // pred_check
          %p607 = pneg %p193
        $region22: #{tpu_custom_call.1} parent=11 // pred_check_branch
          %609 = sbr.rel (%p607) target = $region24
        $region23: #{tpu_custom_call.1} parent=11 // pred_region
          %s611 = ssub.s32 256, 256
          %612 = vsyncadd [#allocation7], %s611
          %s613 = sshll.u32 [#allocation6], 4
          %s614 = int_to_ptr.vmem [resolvable:$true] %s613
          %619 = dma.hbm_to_vmem [thread:$0]  %s5, 256, %s614, [#allocation7], 64, 64, 4
        $region24: #{tpu_custom_call.1} parent=11 // pred_fallthru
          _
        // Predicated region
        $region25: #{tpu_custom_call.1} parent=11 // pred_check
          %p620 = pneg %p214
        $region26: #{tpu_custom_call.1} parent=11 // pred_check_branch
          %622 = sbr.rel (%p620) target = $region28
        $region27: #{tpu_custom_call.1} parent=11 // pred_region
          %s624 = ssub.s32 256, 256
          %625 = vsyncadd [#allocation7], %s624
          %s626 = sshll.u32 [#allocation8], 4
          %s627 = int_to_ptr.vmem [resolvable:$true] %s626
          %632 = dma.hbm_to_vmem [thread:$0]  %s6, 256, %s627, [#allocation7], 64, 64, 4
        $region28: #{tpu_custom_call.1} parent=11 // pred_fallthru
          _
        // Predicated region
        $region29: #{tpu_custom_call.1} parent=11 // pred_check
          %p633 = pneg %p235
        $region30: #{tpu_custom_call.1} parent=11 // pred_check_branch
          %635 = sbr.rel (%p633) target = $region32
        $region31: #{tpu_custom_call.1} parent=11 // pred_region
          %s637 = ssub.s32 256, 256
          %638 = vsyncadd [#allocation10], %s637
          %s639 = sshll.u32 [#allocation9], 4
          %s640 = int_to_ptr.vmem [resolvable:$true] %s639
          %645 = dma.hbm_to_vmem [thread:$0]  %s7, 256, %s640, [#allocation10], 64, 64, 4
        $region32: #{tpu_custom_call.1} parent=11 // pred_fallthru
          _
        // Predicated region
        $region33: #{tpu_custom_call.1} parent=11 // pred_check
          %p646 = pneg %p256
        $region34: #{tpu_custom_call.1} parent=11 // pred_check_branch
          %648 = sbr.rel (%p646) target = $region36
        $region35: #{tpu_custom_call.1} parent=11 // pred_region
          %s650 = ssub.s32 256, 256
          %651 = vsyncadd [#allocation10], %s650
          %s652 = sshll.u32 [#allocation11], 4
          %s653 = int_to_ptr.vmem [resolvable:$true] %s652
          %658 = dma.hbm_to_vmem [thread:$0]  %s8, 256, %s653, [#allocation10], 64, 64, 4
        $region36: #{tpu_custom_call.1} parent=11 // pred_fallthru
          _
        // Predicated region
        $region37: #{tpu_custom_call.1} parent=11 // pred_check
          %p659 = pneg %p277
        $region38: #{tpu_custom_call.1} parent=11 // pred_check_branch
          %661 = sbr.rel (%p659) target = $region40
        $region39: #{tpu_custom_call.1} parent=11 // pred_region
          %s663 = ssub.s32 16, 16
          %664 = vsyncadd [#allocation13], %s663
          %s666 = sshll.u32 [#allocation12], 4
          %s667 = int_to_ptr.vmem [resolvable:$true] %s666
          %669 = dma.hbm_to_vmem [thread:$0]  %s9, 16, %s667, [#allocation13]
        $region40: #{tpu_custom_call.1} parent=11 // pred_fallthru
          _
        // Predicated region
        $region41: #{tpu_custom_call.1} parent=11 // pred_check
          %p670 = pneg %p298
        $region42: #{tpu_custom_call.1} parent=11 // pred_check_branch
          %672 = sbr.rel (%p670) target = $region44
        $region43: #{tpu_custom_call.1} parent=11 // pred_region
          %s674 = ssub.s32 16, 16
          %675 = vsyncadd [#allocation13], %s674
          %s677 = sshll.u32 [#allocation14], 4
          %s678 = int_to_ptr.vmem [resolvable:$true] %s677
          %680 = dma.hbm_to_vmem [thread:$0]  %s10, 16, %s678, [#allocation13]
        $region44: #{tpu_custom_call.1} parent=11 // pred_fallthru
          _
        // Predicated region
        $region45: #{tpu_custom_call.1} parent=11 // pred_check
          %p681 = pneg %p319
        $region46: #{tpu_custom_call.1} parent=11 // pred_check_branch
          %683 = sbr.rel (%p681) target = $region48
        $region47: #{tpu_custom_call.1} parent=11 // pred_region
          %s685 = ssub.s32 16, 16
          %686 = vsyncadd [#allocation16], %s685
          %s688 = sshll.u32 [#allocation15], 4
          %s689 = int_to_ptr.vmem [resolvable:$true] %s688
          %691 = dma.hbm_to_vmem [thread:$0]  %s11, 16, %s689, [#allocation16]
        $region48: #{tpu_custom_call.1} parent=11 // pred_fallthru
          _
        // Predicated region
        $region49: #{tpu_custom_call.1} parent=11 // pred_check
          %p692 = pneg %p340
        $region50: #{tpu_custom_call.1} parent=11 // pred_check_branch
          %694 = sbr.rel (%p692) target = $region52
        $region51: #{tpu_custom_call.1} parent=11 // pred_region
          _
        $region52: #{tpu_custom_call.1} parent=11 // pred_fallthru
          _
        // Predicated region
        $region53: #{tpu_custom_call.1} parent=11 // pred_check
          %p695 = pneg %p361
        $region54: #{tpu_custom_call.1} parent=11 // pred_check_branch
          %697 = sbr.rel (%p695) target = $region56
        $region55: #{tpu_custom_call.1} parent=11 // pred_region
          %s699 = ssub.s32 128, 128
          %700 = vsyncadd [#allocation16], %s699
          %s701 = sshll.u32 [#allocation17], 4
          %s702 = int_to_ptr.vmem [resolvable:$true] %s701
          %707 = dma.hbm_to_vmem [thread:$0]  %s13, 128, %s702, [#allocation16], 64, 64, 4
        $region56: #{tpu_custom_call.1} parent=11 // pred_fallthru
          _
        // Predicated region
        $region57: #{tpu_custom_call.1} parent=11 // pred_check
          %p708 = pneg %p382
        $region58: #{tpu_custom_call.1} parent=11 // pred_check_branch
          %710 = sbr.rel (%p708) target = $region60
        $region59: #{tpu_custom_call.1} parent=11 // pred_region
          %s712 = ssub.s32 128, 128
          %713 = vsyncadd [#allocation19], %s712
          %s714 = sshll.u32 [#allocation18], 4
          %s715 = int_to_ptr.vmem [resolvable:$true] %s714
          %720 = dma.hbm_to_vmem [thread:$0]  %s14, 128, %s715, [#allocation19], 64, 64, 4
        $region60: #{tpu_custom_call.1} parent=11 // pred_fallthru
          _
        // Predicated region
        $region61: #{tpu_custom_call.1} parent=11 // pred_check
          %p721 = pneg %p403
        $region62: #{tpu_custom_call.1} parent=11 // pred_check_branch
          %723 = sbr.rel (%p721) target = $region64
        $region63: #{tpu_custom_call.1} parent=11 // pred_region
          _
        $region64: #{tpu_custom_call.1} parent=11 // pred_fallthru
          _
        // Predicated region
        $region65: #{tpu_custom_call.1} parent=11 // pred_check
          %p724 = pneg %p424
        $region66: #{tpu_custom_call.1} parent=11 // pred_check_branch
          %726 = sbr.rel (%p724) target = $region68
        $region67: #{tpu_custom_call.1} parent=11 // pred_region
          _
        $region68: #{tpu_custom_call.1} parent=11 // pred_fallthru
          _
        // Predicated region
        $region69: #{tpu_custom_call.1} parent=11 // pred_check
          %p727 = pneg %p445
        $region70: #{tpu_custom_call.1} parent=11 // pred_check_branch
          %729 = sbr.rel (%p727) target = $region72
        $region71: #{tpu_custom_call.1} parent=11 // pred_region
          _
        $region72: #{tpu_custom_call.1} parent=11 // pred_fallthru
          _
        // Predicated region
        $region73: #{tpu_custom_call.1} parent=11 // pred_check
          %p730 = pneg %p466
        $region74: #{tpu_custom_call.1} parent=11 // pred_check_branch
          %732 = sbr.rel (%p730) target = $region76
        $region75: #{tpu_custom_call.1} parent=11 // pred_region
          _
        $region76: #{tpu_custom_call.1} parent=11 // pred_fallthru
          _
        // Predicated region
        $region77: #{tpu_custom_call.1} parent=11 // pred_check
          %p733 = pneg %p487
        $region78: #{tpu_custom_call.1} parent=11 // pred_check_branch
          %735 = sbr.rel (%p733) target = $region80
        $region79: #{tpu_custom_call.1} parent=11 // pred_region
          _
        $region80: #{tpu_custom_call.1} parent=11 // pred_fallthru
          _
        // Predicated region
        $region81: #{tpu_custom_call.1} parent=11 // pred_check
          %p736 = pneg %p508
        $region82: #{tpu_custom_call.1} parent=11 // pred_check_branch
          %738 = sbr.rel (%p736) target = $region84
        $region83: #{tpu_custom_call.1} parent=11 // pred_region
          _
        $region84: #{tpu_custom_call.1} parent=11 // pred_fallthru
          _
        // Predicated region
        $region85: #{tpu_custom_call.1} parent=11 // pred_check
          %p739 = pneg %p529
        $region86: #{tpu_custom_call.1} parent=11 // pred_check_branch
          %741 = sbr.rel (%p739) target = $region88
        $region87: #{tpu_custom_call.1} parent=11 // pred_region
          _
        $region88: #{tpu_custom_call.1} parent=11 // pred_fallthru
          _
        // Predicated region
        $region89: #{tpu_custom_call.1} parent=11 // pred_check
          %p742 = pneg %p550
        $region90: #{tpu_custom_call.1} parent=11 // pred_check_branch
          %744 = sbr.rel (%p742) target = $region92
        $region91: #{tpu_custom_call.1} parent=11 // pred_region
          _
        $region92: #{tpu_custom_call.1} parent=11 // pred_fallthru
          _
      $region12: #{tpu_custom_call.1} parent=5 // pred_fallthru
        _
      %p745 = scmp.lt.s32.totalorder %s38, 2
      // Predicated region
      $region93: #{tpu_custom_call.1} parent=5 // pred_check
        %p746 = pneg %p745
      $region94: #{tpu_custom_call.1} parent=5 // pred_check_branch
        %748 = sbr.rel (%p746) target = $region96
      $region95: #{tpu_custom_call.1} parent=5 // pred_region
        // Predicated region
        $region97: #{tpu_custom_call.1} parent=95 // pred_check
          %p749 = pneg %p72
        $region98: #{tpu_custom_call.1} parent=95 // pred_check_branch
          %751 = sbr.rel (%p749) target = $region100
        $region99: #{tpu_custom_call.1} parent=95 // pred_region
          %p752 = scmp.lt.s32.totalorder %s45, 1
          %s753 = scalar_select %p752, %s45, 1
          %p754 = scmp.lt.s32.totalorder %s46, 0
          %s755 = scalar_select %p754, %s46, 0
          %s756 = sadd.s32 %s755, %s753
          %s757 = smul.addr %s756, 8
          %s758 = scalar_lea.vmem %s0, %s757
        $region100: #{tpu_custom_call.1} parent=95 // pred_fallthru
          _
        // Predicated region
        $region101: #{tpu_custom_call.1} parent=95 // pred_check
          %p759 = pneg %p98
        $region102: #{tpu_custom_call.1} parent=95 // pred_check_branch
          %761 = sbr.rel (%p759) target = $region104
        $region103: #{tpu_custom_call.1} parent=95 // pred_region
          %p762 = scmp.lt.s32.totalorder %s45, 1
          %s763 = scalar_select %p762, %s45, 1
          %s764 = smul.addr %s763, 8
          %s765 = scalar_lea.vmem %s1, %s764
        $region104: #{tpu_custom_call.1} parent=95 // pred_fallthru
          _
        // Predicated region
        $region105: #{tpu_custom_call.1} parent=95 // pred_check
          %p766 = pneg %p124
        $region106: #{tpu_custom_call.1} parent=95 // pred_check_branch
          %768 = sbr.rel (%p766) target = $region108
        $region107: #{tpu_custom_call.1} parent=95 // pred_region
          %p769 = scmp.lt.s32.totalorder %s45, 1
          %s770 = scalar_select %p769, %s45, 1
          %s771 = smul.addr %s770, 8
          %s772 = scalar_lea.vmem %s2, %s771
        $region108: #{tpu_custom_call.1} parent=95 // pred_fallthru
          _
      $region96: #{tpu_custom_call.1} parent=5 // pred_fallthru
        _
      %p773 = scmp.le.s32.totalorder 1, %s38
      %p774 = scmp.lt.s32.totalorder %s38, 3
      %p775 = pnand %p773, %p774
      %p776 = pneg %p775
      // Predicated region
      $region109: #{tpu_custom_call.1} parent=5 // pred_check
        _
      $region110: #{tpu_custom_call.1} parent=5 // pred_check_branch
        %778 = sbr.rel (%p775) target = $region112
      $region111: #{tpu_custom_call.1} parent=5 // pred_region
        %s779 = ssub.s32 %s38, 1
        // Predicated region
        $region113: #{tpu_custom_call.1} parent=111 // pred_check
          %p780 = pneg %p172
        $region114: #{tpu_custom_call.1} parent=111 // pred_check_branch
          %782 = sbr.rel (%p780) target = $region116
        $region115: #{tpu_custom_call.1} parent=111 // pred_region
          %783 = dma.done [#allocation4], 16
        $region116: #{tpu_custom_call.1} parent=111 // pred_fallthru
          _
        // Predicated region
        $region117: #{tpu_custom_call.1} parent=111 // pred_check
          %p784 = pneg %p193
        $region118: #{tpu_custom_call.1} parent=111 // pred_check_branch
          %786 = sbr.rel (%p784) target = $region120
        $region119: #{tpu_custom_call.1} parent=111 // pred_region
          %787 = dma.done [#allocation7], 256
        $region120: #{tpu_custom_call.1} parent=111 // pred_fallthru
          _
        // Predicated region
        $region121: #{tpu_custom_call.1} parent=111 // pred_check
          %p788 = pneg %p214
        $region122: #{tpu_custom_call.1} parent=111 // pred_check_branch
          %790 = sbr.rel (%p788) target = $region124
        $region123: #{tpu_custom_call.1} parent=111 // pred_region
          %791 = dma.done [#allocation7], 256
        $region124: #{tpu_custom_call.1} parent=111 // pred_fallthru
          _
        // Predicated region
        $region125: #{tpu_custom_call.1} parent=111 // pred_check
          %p792 = pneg %p235
        $region126: #{tpu_custom_call.1} parent=111 // pred_check_branch
          %794 = sbr.rel (%p792) target = $region128
        $region127: #{tpu_custom_call.1} parent=111 // pred_region
          %795 = dma.done [#allocation10], 256
        $region128: #{tpu_custom_call.1} parent=111 // pred_fallthru
          _
        // Predicated region
        $region129: #{tpu_custom_call.1} parent=111 // pred_check
          %p796 = pneg %p256
        $region130: #{tpu_custom_call.1} parent=111 // pred_check_branch
          %798 = sbr.rel (%p796) target = $region132
        $region131: #{tpu_custom_call.1} parent=111 // pred_region
          %799 = dma.done [#allocation10], 256
        $region132: #{tpu_custom_call.1} parent=111 // pred_fallthru
          _
        // Predicated region
        $region133: #{tpu_custom_call.1} parent=111 // pred_check
          %p800 = pneg %p277
        $region134: #{tpu_custom_call.1} parent=111 // pred_check_branch
          %802 = sbr.rel (%p800) target = $region136
        $region135: #{tpu_custom_call.1} parent=111 // pred_region
          %803 = dma.done [#allocation13], 16
        $region136: #{tpu_custom_call.1} parent=111 // pred_fallthru
          _
        // Predicated region
        $region137: #{tpu_custom_call.1} parent=111 // pred_check
          %p804 = pneg %p298
        $region138: #{tpu_custom_call.1} parent=111 // pred_check_branch
          %806 = sbr.rel (%p804) target = $region140
        $region139: #{tpu_custom_call.1} parent=111 // pred_region
          %807 = dma.done [#allocation13], 16
        $region140: #{tpu_custom_call.1} parent=111 // pred_fallthru
          _
        // Predicated region
        $region141: #{tpu_custom_call.1} parent=111 // pred_check
          %p808 = pneg %p319
        $region142: #{tpu_custom_call.1} parent=111 // pred_check_branch
          %810 = sbr.rel (%p808) target = $region144
        $region143: #{tpu_custom_call.1} parent=111 // pred_region
          %811 = dma.done [#allocation16], 16
        $region144: #{tpu_custom_call.1} parent=111 // pred_fallthru
          _
        // Predicated region
        $region145: #{tpu_custom_call.1} parent=111 // pred_check
          %p812 = pneg %p361
        $region146: #{tpu_custom_call.1} parent=111 // pred_check_branch
          %814 = sbr.rel (%p812) target = $region148
        $region147: #{tpu_custom_call.1} parent=111 // pred_region
          %815 = dma.done [#allocation16], 128
        $region148: #{tpu_custom_call.1} parent=111 // pred_fallthru
          _
        // Predicated region
        $region149: #{tpu_custom_call.1} parent=111 // pred_check
          %p816 = pneg %p382
        $region150: #{tpu_custom_call.1} parent=111 // pred_check_branch
          %818 = sbr.rel (%p816) target = $region152
        $region151: #{tpu_custom_call.1} parent=111 // pred_region
          %819 = dma.done [#allocation19], 128
        $region152: #{tpu_custom_call.1} parent=111 // pred_fallthru
          _
        %p820 = scmp.lt.s32.totalorder %s47, 1
        %s821 = scalar_select %p820, %s47, 1
        %p822 = scmp.lt.s32.totalorder %s48, 0
        %s823 = scalar_select %p822, %s48, 0
        %s824 = sadd.s32 %s823, %s821
        %s825 = smul.addr %s824, 8
        %s826 = scalar_lea.vmem %s0, %s825
        %p827 = pneg %p78
        %p828 = pneg %p75
        %p829 = scmp.lt.s32.totalorder %s47, 1
        %s830 = scalar_select %p829, %s47, 1
        %s831 = smul.addr %s830, 8
        %s832 = scalar_lea.vmem %s1, %s831
        %p833 = pneg %p104
        %p834 = pneg %p101
        %p835 = scmp.lt.s32.totalorder %s47, 1
        %s836 = scalar_select %p835, %s47, 1
        %s837 = smul.addr %s836, 8
        %s838 = scalar_lea.vmem %s2, %s837
        %p839 = pneg %p130
        %p840 = pneg %p127
        %p841 = pneg %p151
        %p842 = pneg %p148
        %p843 = pneg %p172
        %p844 = pneg %p169
        %p845 = pneg %p193
        %p846 = pneg %p190
        %p847 = pneg %p214
        %p848 = pneg %p211
        %p849 = pneg %p235
        %p850 = pneg %p232
        %p851 = pneg %p256
        %p852 = pneg %p253
        %p853 = pneg %p277
        %p854 = pneg %p274
        %p855 = pneg %p298
        %p856 = pneg %p295
        %p857 = pneg %p319
        %p858 = pneg %p316
        %p859 = pneg %p340
        %p860 = pneg %p337
        %p861 = pneg %p361
        %p862 = pneg %p358
        %p863 = pneg %p382
        %p864 = pneg %p379
        %p865 = pneg %p403
        %p866 = pneg %p400
        %p867 = pneg %p424
        %p868 = pneg %p421
        %p869 = pneg %p445
        %p870 = pneg %p442
        %p871 = pneg %p466
        %p872 = pneg %p463
        %p873 = pneg %p487
        %p874 = pneg %p484
        %p875 = pneg %p508
        %p876 = pneg %p505
        %p877 = pneg %p529
        %p878 = pneg %p526
        %p879 = pneg %p550
        %p880 = pneg %p547
        %p881 = pneg %p578
        %p882 = pneg %p575
        %s883 = sand.u32 %s565, 1
        %s884 = scalar_lea.sflag [#allocation5], %s883
        %s885 = sand.u32 %s565, 1
        %s886 = smul.addr %s885, 8
        %s887 = scalar_lea.vmem [#allocation20], %s886
        %p888 = scmp.lt.s32.totalorder %s47, 1
        %s889 = scalar_select %p888, %s47, 1
        %p890 = scmp.lt.s32.totalorder %s48, 0
        %s891 = scalar_select %p890, %s48, 0
        %s892 = sadd.s32 %s891, %s889
        %s893 = smul.addr %s892, 8
        %s894 = scalar_lea.vmem %s0, %s893
        %p895 = scmp.lt.s32.totalorder %s47, 1
        %s896 = scalar_select %p895, %s47, 1
        %s897 = smul.addr %s896, 8
        %s898 = scalar_lea.vmem %s1, %s897
        %p899 = scmp.lt.s32.totalorder %s47, 1
        %s900 = scalar_select %p899, %s47, 1
        %s901 = smul.addr %s900, 8
        %s902 = scalar_lea.vmem %s2, %s901
        %v904 = vld [vmem:[%s894] sm:$0xff]
        %v905 = vld [vmem:[%s898] sm:$0xff]
        %v906 = vld [vmem:[%s902] sm:$0xff]
        %v907 = vld [vmem:[%s3] sm:$0x1]
        %v908 = vld [vmem:[#allocation3] sm:$0x1]
        %vm909 = vcmask 261120
        %v910 = vsel %vm909, %v904, 0.0
        %911 = vadd.xlane.f32.xlu0 %v910
        %v912 = vpop.xlane.xlu0 %911
        %v913 = vrcp.pop 32.0
        %v914 = vmul.f32 %v912, %v913
        %v915 = vsub.f32 %v904, %v914
        %v916 = vmul.f32 %v915, %v915
        %v917 = vsel %vm909, %v916, 0.0
        %918 = vadd.xlane.f32.xlu0 %v917
        %v919 = vpop.xlane.xlu0 %918
        %v920 = vmul.f32 %v919, %v913
        %v921 = vadd.f32 %v920, 1e-05
        %v922 = vrsqrt.pop %v921
        %v923 = vmul.f32 %v915, %v922
        %v925 = vlaneseq
        %v926 = vshrl.u32 %v925, 7
        %v927 = vsub.s32 0, %v926
        %v928 = vrot.slane %v907, %v927
        %v930 = vmul.f32 %v923, %v928
        %v932 = vlaneseq
        %v933 = vshrl.u32 %v932, 7
        %v934 = vsub.s32 0, %v933
        %v935 = vrot.slane %v908, %v934
        %v937 = vadd.f32 %v930, %v935
        %v938 = vsel %vm909, %v905, 0.0
        %939 = vadd.xlane.f32.xlu0 %v938
        %v940 = vpop.xlane.xlu0 %939
        %v941 = vmul.f32 %v940, %v913
        %v942 = vsub.f32 %v905, %v941
        %v943 = vmul.f32 %v942, %v942
        %v944 = vsel %vm909, %v943, 0.0
        %945 = vadd.xlane.f32.xlu0 %v944
        %v946 = vpop.xlane.xlu0 %945
        %v947 = vmul.f32 %v946, %v913
        %v948 = vadd.f32 %v947, 1e-05
        %v949 = vrsqrt.pop %v948
        %v950 = vmul.f32 %v942, %v949
        %v951 = vmul.f32 %v950, %v928
        %v952 = vadd.f32 %v951, %v935
        %v953 = vld [vmem:[#allocation6] sm:$0xf]
        %v954 = vld [vmem:[#allocation6 + $0x4] sm:$0xf]
        %v955 = vld [vmem:[#allocation6 + $0x8] sm:$0xf]
        %v956 = vld [vmem:[#allocation6 + $0xc] sm:$0xf]
        %v957 = vld [vmem:[#allocation8] sm:$0xf]
        %v958 = vld [vmem:[#allocation8 + $0x4] sm:$0xf]
        %v959 = vld [vmem:[#allocation8 + $0x8] sm:$0xf]
        %v960 = vld [vmem:[#allocation8 + $0xc] sm:$0xf]
        %v961 = vld [vmem:[#allocation9] sm:$0xf]
        %v962 = vld [vmem:[#allocation9 + $0x4] sm:$0xf]
        %v963 = vld [vmem:[#allocation9 + $0x8] sm:$0xf]
        %v964 = vld [vmem:[#allocation9 + $0xc] sm:$0xf]
        %v965 = vld [vmem:[#allocation11] sm:$0xf]
        %v966 = vld [vmem:[#allocation11 + $0x4] sm:$0xf]
        %v967 = vld [vmem:[#allocation11 + $0x8] sm:$0xf]
        %v968 = vld [vmem:[#allocation11 + $0xc] sm:$0xf]
        %v969 = vld [vmem:[#allocation12] sm:$0x1]
        %v970 = vmul.f32 %v937, 0.5
        %v971 = vpack.c.bf16 %v970, %v970
        %v976 = vunpack.c.l.b16 %v953
        %v977 = vunpack.c.l.b16 %v954
        %v978 = vunpack.c.l.b16 %v955
        %v979 = vunpack.c.l.b16 %v956
        %v980 = vpack.c.b16 %v977, %v976
        %v981 = vpack.c.b16 %v979, %v978
        %v985 = vsel %vm909, %v971, 0
        %987 = vmatprep.subr.bf16.mxu0 0
        %988 = vmatpush1.bf16.msra.mxu0 %v980
        %989 = vmatprep.subr.bf16.mxu0 0
        %990 = vmatpush1.bf16.msra.mxu0 %v981
        %991 = vmatprep.subr.bf16.mxu0 0
        %992 = vmatpush1.bf16.msra.mxu0 0
        %993 = vmatprep.subr.bf16.mxu0 0
        %994 = vmatpush1.bf16.msra.mxu0 0
        %995 = vmatprep.subr.bf16.mxu0 0
        %996 = vmatpush1.bf16.msra.mxu0 0
        %997 = vmatprep.subr.bf16.mxu0 0
        %998 = vmatpush1.bf16.msra.mxu0 0
        %999 = vmatprep.subr.bf16.mxu0 0
        %1000 = vmatpush1.bf16.msra.mxu0 0
        %1001 = vmatprep.subr.bf16.mxu0 0
        %1002 = vmatpush1.bf16.msra.mxu0 0
        %1003 = vmatprep.subr.bf16.mxu0 0
        %1004 = vmatpush1.bf16.msra.mxu0 0
        %1005 = vmatprep.subr.bf16.mxu0 0
        %1006 = vmatpush1.bf16.msra.mxu0 0
        %1007 = vmatprep.subr.bf16.mxu0 0
        %1008 = vmatpush1.bf16.msra.mxu0 0
        %1009 = vmatprep.subr.bf16.mxu0 0
        %1010 = vmatpush1.bf16.msra.mxu0 0
        %1011 = vmatprep.subr.bf16.mxu0 0
        %1012 = vmatpush1.bf16.msra.mxu0 0
        %1013 = vmatprep.subr.bf16.mxu0 0
        %1014 = vmatpush1.bf16.msra.mxu0 0
        %1015 = vmatprep.subr.bf16.mxu0 0
        %1016 = vmatpush1.bf16.msra.mxu0 0
        %1017 = vmatprep.subr.bf16.mxu0 0
        %1018 = vmatpush1.bf16.msra.mxu0 0
        %1019 = vmatprep.mubr.bf16.mxu0 0
        %1020 = vmatmul.mubr.bf16.gmra.mrb[0].mxu0 %v985
        %v1021 = vpop.f32.mrb[0].mxu0
        %v1022 = vadd.f32 0.0, %v1021
        %v1023 = vpop.f32.mrb[0].mxu0
        %v1024 = vpop.f32.mrb[0].mxu0
        %v1025 = vpop.f32.mrb[0].mxu0
        %1026 = vdwg.mxu0
        %v1027 = vpack.c.bf16 %v952, %v952
        %v1032 = vunpack.c.l.b16 %v957
        %v1033 = vunpack.c.l.b16 %v958
        %v1034 = vunpack.c.l.b16 %v959
        %v1035 = vunpack.c.l.b16 %v960
        %v1036 = vpack.c.b16 %v1033, %v1032
        %v1037 = vpack.c.b16 %v1035, %v1034
        %v1041 = vsel %vm909, %v1027, 0
        %1043 = vmatprep.subr.bf16.mxu0 0
        %1044 = vmatpush1.bf16.msra.mxu0 %v1036
        %1045 = vmatprep.subr.bf16.mxu0 0
        %1046 = vmatpush1.bf16.msra.mxu0 %v1037
        %1047 = vmatprep.subr.bf16.mxu0 0
        %1048 = vmatpush1.bf16.msra.mxu0 0
        %1049 = vmatprep.subr.bf16.mxu0 0
        %1050 = vmatpush1.bf16.msra.mxu0 0
        %1051 = vmatprep.subr.bf16.mxu0 0
        %1052 = vmatpush1.bf16.msra.mxu0 0
        %1053 = vmatprep.subr.bf16.mxu0 0
        %1054 = vmatpush1.bf16.msra.mxu0 0
        %1055 = vmatprep.subr.bf16.mxu0 0
        %1056 = vmatpush1.bf16.msra.mxu0 0
        %1057 = vmatprep.subr.bf16.mxu0 0
        %1058 = vmatpush1.bf16.msra.mxu0 0
        %1059 = vmatprep.subr.bf16.mxu0 0
        %1060 = vmatpush1.bf16.msra.mxu0 0
        %1061 = vmatprep.subr.bf16.mxu0 0
        %1062 = vmatpush1.bf16.msra.mxu0 0
        %1063 = vmatprep.subr.bf16.mxu0 0
        %1064 = vmatpush1.bf16.msra.mxu0 0
        %1065 = vmatprep.subr.bf16.mxu0 0
        %1066 = vmatpush1.bf16.msra.mxu0 0
        %1067 = vmatprep.subr.bf16.mxu0 0
        %1068 = vmatpush1.bf16.msra.mxu0 0
        %1069 = vmatprep.subr.bf16.mxu0 0
        %1070 = vmatpush1.bf16.msra.mxu0 0
        %1071 = vmatprep.subr.bf16.mxu0 0
        %1072 = vmatpush1.bf16.msra.mxu0 0
        %1073 = vmatprep.subr.bf16.mxu0 0
        %1074 = vmatpush1.bf16.msra.mxu0 0
        %1075 = vmatprep.mubr.bf16.mxu0 0
        %1076 = vmatmul.mubr.bf16.gmra.mrb[0].mxu0 %v1041
        %v1077 = vpop.f32.mrb[0].mxu0
        %v1078 = vadd.f32 0.0, %v1077
        %v1079 = vpop.f32.mrb[0].mxu0
        %v1080 = vpop.f32.mrb[0].mxu0
        %v1081 = vpop.f32.mrb[0].mxu0
        %1082 = vdwg.mxu0
        %v1087 = vunpack.c.l.b16 %v961
        %v1088 = vunpack.c.l.b16 %v962
        %v1089 = vunpack.c.l.b16 %v963
        %v1090 = vunpack.c.l.b16 %v964
        %v1091 = vpack.c.b16 %v1088, %v1087
        %v1092 = vpack.c.b16 %v1090, %v1089
        %1095 = vmatprep.subr.bf16.mxu0 0
        %1096 = vmatpush1.bf16.msra.mxu0 %v1091
        %1097 = vmatprep.subr.bf16.mxu0 0
        %1098 = vmatpush1.bf16.msra.mxu0 %v1092
        %1099 = vmatprep.subr.bf16.mxu0 0
        %1100 = vmatpush1.bf16.msra.mxu0 0
        %1101 = vmatprep.subr.bf16.mxu0 0
        %1102 = vmatpush1.bf16.msra.mxu0 0
        %1103 = vmatprep.subr.bf16.mxu0 0
        %1104 = vmatpush1.bf16.msra.mxu0 0
        %1105 = vmatprep.subr.bf16.mxu0 0
        %1106 = vmatpush1.bf16.msra.mxu0 0
        %1107 = vmatprep.subr.bf16.mxu0 0
        %1108 = vmatpush1.bf16.msra.mxu0 0
        %1109 = vmatprep.subr.bf16.mxu0 0
        %1110 = vmatpush1.bf16.msra.mxu0 0
        %1111 = vmatprep.subr.bf16.mxu0 0
        %1112 = vmatpush1.bf16.msra.mxu0 0
        %1113 = vmatprep.subr.bf16.mxu0 0
        %1114 = vmatpush1.bf16.msra.mxu0 0
        %1115 = vmatprep.subr.bf16.mxu0 0
        %1116 = vmatpush1.bf16.msra.mxu0 0
        %1117 = vmatprep.subr.bf16.mxu0 0
        %1118 = vmatpush1.bf16.msra.mxu0 0
        %1119 = vmatprep.subr.bf16.mxu0 0
        %1120 = vmatpush1.bf16.msra.mxu0 0
        %1121 = vmatprep.subr.bf16.mxu0 0
        %1122 = vmatpush1.bf16.msra.mxu0 0
        %1123 = vmatprep.subr.bf16.mxu0 0
        %1124 = vmatpush1.bf16.msra.mxu0 0
        %1125 = vmatprep.subr.bf16.mxu0 0
        %1126 = vmatpush1.bf16.msra.mxu0 0
        %1127 = vmatprep.mubr.bf16.mxu0 0
        %1128 = vmatmul.mubr.bf16.gmra.mrb[0].mxu0 %v1041
        %v1129 = vpop.f32.mrb[0].mxu0
        %v1130 = vadd.f32 0.0, %v1129
        %v1131 = vpop.f32.mrb[0].mxu0
        %v1132 = vpop.f32.mrb[0].mxu0
        %v1133 = vpop.f32.mrb[0].mxu0
        %1134 = vdwg.mxu0
        %v1135 = vpack.c.bf16 %v1022, %v1022
        %v1136 = vpack.c.bf16 %v1078, %v1078
        %v1137 = vpack.c.bf16 %v1130, %v1130
        %vm1138 = vcmask 31744
        %v1140 = vsel %vm1138, %v1135, 0
        %v1143 = vsel %vm1138, %v1136, 0
        %1145 = vmatprep.subr.bf16.mxu0 0
        %1146 = vmatpush1.bf16.xpose.msra.mxu0 %v1143
        %1147 = vmatprep.subr.bf16.mxu0 0
        %1148 = vmatpush1.bf16.xpose.msra.mxu0 0
        %1149 = vmatprep.subr.bf16.mxu0 0
        %1150 = vmatpush1.bf16.xpose.msra.mxu0 0
        %1151 = vmatprep.subr.bf16.mxu0 0
        %1152 = vmatpush1.bf16.xpose.msra.mxu0 0
        %1153 = vmatprep.subr.bf16.mxu0 0
        %1154 = vmatpush1.bf16.xpose.msra.mxu0 0
        %1155 = vmatprep.subr.bf16.mxu0 0
        %1156 = vmatpush1.bf16.xpose.msra.mxu0 0
        %1157 = vmatprep.subr.bf16.mxu0 0
        %1158 = vmatpush1.bf16.xpose.msra.mxu0 0
        %1159 = vmatprep.subr.bf16.mxu0 0
        %1160 = vmatpush1.bf16.xpose.msra.mxu0 0
        %1161 = vmatprep.subr.bf16.mxu0 0
        %1162 = vmatpush1.bf16.xpose.msra.mxu0 0
        %1163 = vmatprep.subr.bf16.mxu0 0
        %1164 = vmatpush1.bf16.xpose.msra.mxu0 0
        %1165 = vmatprep.subr.bf16.mxu0 0
        %1166 = vmatpush1.bf16.xpose.msra.mxu0 0
        %1167 = vmatprep.subr.bf16.mxu0 0
        %1168 = vmatpush1.bf16.xpose.msra.mxu0 0
        %1169 = vmatprep.subr.bf16.mxu0 0
        %1170 = vmatpush1.bf16.xpose.msra.mxu0 0
        %1171 = vmatprep.subr.bf16.mxu0 0
        %1172 = vmatpush1.bf16.xpose.msra.mxu0 0
        %1173 = vmatprep.subr.bf16.mxu0 0
        %1174 = vmatpush1.bf16.xpose.msra.mxu0 0
        %1175 = vmatprep.subr.bf16.mxu0 0
        %1176 = vmatpush1.bf16.xpose.msra.mxu0 0
        %1177 = vmatprep.mubr.bf16.mxu0 0
        %1178 = vmatmul.mubr.bf16.gmra.mrb[0].mxu0 %v1140
        %v1179 = vpop.f32.mrb[0].mxu0
        %v1180 = vadd.f32 0.0, %v1179
        %v1181 = vpop.f32.mrb[0].mxu0
        %v1182 = vpop.f32.mrb[0].mxu0
        %v1183 = vpop.f32.mrb[0].mxu0
        %1184 = vdwg.mxu0
        %vm1185 = vcmask 64512
        %v1186 = vsel %vm1185, %v1180, -inf
        %1187 = vmax.xlane.f32.xlu0 %v1186
        %v1188 = vpop.xlane.xlu0 %1187
        %v1189 = vsub.f32 %v1180, %v1188
        %v1190 = vmul.f32 %v1189, 1.442695
        %v1191 = vpow.pop %v1190
        %v1192 = vsel %vm1185, %v1191, 0.0
        %1193 = vadd.xlane.f32.xlu0 %v1192
        %v1194 = vpop.xlane.xlu0 %1193
        %v1195 = vpack.c.bf16 %v1191, %v1191
        %v1197 = vsel %vm1185, %v1195, 0
        %vm1199 = vcmask 1043456
        %v1201 = vsel %vm1199, %v1137, 0
        %1203 = vmatprep.subr.bf16.mxu0 0
        %1204 = vmatpush1.bf16.msra.mxu0 %v1201
        %1205 = vmatprep.subr.bf16.mxu0 0
        %1206 = vmatpush1.bf16.msra.mxu0 0
        %1207 = vmatprep.subr.bf16.mxu0 0
        %1208 = vmatpush1.bf16.msra.mxu0 0
        %1209 = vmatprep.subr.bf16.mxu0 0
        %1210 = vmatpush1.bf16.msra.mxu0 0
        %1211 = vmatprep.subr.bf16.mxu0 0
        %1212 = vmatpush1.bf16.msra.mxu0 0
        %1213 = vmatprep.subr.bf16.mxu0 0
        %1214 = vmatpush1.bf16.msra.mxu0 0
        %1215 = vmatprep.subr.bf16.mxu0 0
        %1216 = vmatpush1.bf16.msra.mxu0 0
        %1217 = vmatprep.subr.bf16.mxu0 0
        %1218 = vmatpush1.bf16.msra.mxu0 0
        %1219 = vmatprep.subr.bf16.mxu0 0
        %1220 = vmatpush1.bf16.msra.mxu0 0
        %1221 = vmatprep.subr.bf16.mxu0 0
        %1222 = vmatpush1.bf16.msra.mxu0 0
        %1223 = vmatprep.subr.bf16.mxu0 0
        %1224 = vmatpush1.bf16.msra.mxu0 0
        %1225 = vmatprep.subr.bf16.mxu0 0
        %1226 = vmatpush1.bf16.msra.mxu0 0
        %1227 = vmatprep.subr.bf16.mxu0 0
        %1228 = vmatpush1.bf16.msra.mxu0 0
        %1229 = vmatprep.subr.bf16.mxu0 0
        %1230 = vmatpush1.bf16.msra.mxu0 0
        %1231 = vmatprep.subr.bf16.mxu0 0
        %1232 = vmatpush1.bf16.msra.mxu0 0
        %1233 = vmatprep.subr.bf16.mxu0 0
        %1234 = vmatpush1.bf16.msra.mxu0 0
        %1235 = vmatprep.mubr.bf16.mxu0 0
        %1236 = vmatmul.mubr.bf16.gmra.mrb[0].mxu0 %v1197
        %v1237 = vpop.f32.mrb[0].mxu0
        %v1238 = vadd.f32 0.0, %v1237
        %v1239 = vpop.f32.mrb[0].mxu0
        %v1240 = vpop.f32.mrb[0].mxu0
        %v1241 = vpop.f32.mrb[0].mxu0
        %1242 = vdwg.mxu0
        %v1243 = vrcp.pop %v1194
        %v1244 = vmul.f32 %v1238, %v1243
        %1245 = vst.msk [vmem:[#allocation2] sm:$0xff] %vm1138, %v1244
        %1247 = vrot.lane.b32.xlu0 %v1135, 124
        %v1248 = vpop.permute.xlu0 %1247
        %1250 = vrot.lane.b32.xlu0 %v1136, 124
        %v1251 = vpop.permute.xlu0 %1250
        %v1253 = vsel %vm1138, %v1248, 0
        %v1256 = vsel %vm1138, %v1251, 0
        %1258 = vmatprep.subr.bf16.mxu0 0
        %1259 = vmatpush1.bf16.xpose.msra.mxu0 %v1256
        %1260 = vmatprep.subr.bf16.mxu0 0
        %1261 = vmatpush1.bf16.xpose.msra.mxu0 0
        %1262 = vmatprep.subr.bf16.mxu0 0
        %1263 = vmatpush1.bf16.xpose.msra.mxu0 0
        %1264 = vmatprep.subr.bf16.mxu0 0
        %1265 = vmatpush1.bf16.xpose.msra.mxu0 0
        %1266 = vmatprep.subr.bf16.mxu0 0
        %1267 = vmatpush1.bf16.xpose.msra.mxu0 0
        %1268 = vmatprep.subr.bf16.mxu0 0
        %1269 = vmatpush1.bf16.xpose.msra.mxu0 0
        %1270 = vmatprep.subr.bf16.mxu0 0
        %1271 = vmatpush1.bf16.xpose.msra.mxu0 0
        %1272 = vmatprep.subr.bf16.mxu0 0
        %1273 = vmatpush1.bf16.xpose.msra.mxu0 0
        %1274 = vmatprep.subr.bf16.mxu0 0
        %1275 = vmatpush1.bf16.xpose.msra.mxu0 0
        %1276 = vmatprep.subr.bf16.mxu0 0
        %1277 = vmatpush1.bf16.xpose.msra.mxu0 0
        %1278 = vmatprep.subr.bf16.mxu0 0
        %1279 = vmatpush1.bf16.xpose.msra.mxu0 0
        %1280 = vmatprep.subr.bf16.mxu0 0
        %1281 = vmatpush1.bf16.xpose.msra.mxu0 0
        %1282 = vmatprep.subr.bf16.mxu0 0
        %1283 = vmatpush1.bf16.xpose.msra.mxu0 0
        %1284 = vmatprep.subr.bf16.mxu0 0
        %1285 = vmatpush1.bf16.xpose.msra.mxu0 0
        %1286 = vmatprep.subr.bf16.mxu0 0
        %1287 = vmatpush1.bf16.xpose.msra.mxu0 0
        %1288 = vmatprep.subr.bf16.mxu0 0
        %1289 = vmatpush1.bf16.xpose.msra.mxu0 0
        %1290 = vmatprep.mubr.bf16.mxu0 0
        %1291 = vmatmul.mubr.bf16.gmra.mrb[0].mxu0 %v1253
        %v1292 = vpop.f32.mrb[0].mxu0
        %v1293 = vadd.f32 0.0, %v1292
        %v1294 = vpop.f32.mrb[0].mxu0
        %v1295 = vpop.f32.mrb[0].mxu0
        %v1296 = vpop.f32.mrb[0].mxu0
        %1297 = vdwg.mxu0
        %v1298 = vsel %vm1185, %v1293, -inf
        %1299 = vmax.xlane.f32.xlu0 %v1298
        %v1300 = vpop.xlane.xlu0 %1299
        %v1301 = vsub.f32 %v1293, %v1300
        %v1302 = vmul.f32 %v1301, 1.442695
        %v1303 = vpow.pop %v1302
        %v1304 = vsel %vm1185, %v1303, 0.0
        %1305 = vadd.xlane.f32.xlu0 %v1304
        %v1306 = vpop.xlane.xlu0 %1305
        %v1307 = vpack.c.bf16 %v1303, %v1303
        %1309 = vrot.lane.b32.xlu0 %v1137, 124
        %v1310 = vpop.permute.xlu0 %1309
        %v1312 = vsel %vm1185, %v1307, 0
        %v1315 = vsel %vm1199, %v1310, 0
        %1317 = vmatprep.subr.bf16.mxu0 0
        %1318 = vmatpush1.bf16.msra.mxu0 %v1315
        %1319 = vmatprep.subr.bf16.mxu0 0
        %1320 = vmatpush1.bf16.msra.mxu0 0
        %1321 = vmatprep.subr.bf16.mxu0 0
        %1322 = vmatpush1.bf16.msra.mxu0 0
        %1323 = vmatprep.subr.bf16.mxu0 0
        %1324 = vmatpush1.bf16.msra.mxu0 0
        %1325 = vmatprep.subr.bf16.mxu0 0
        %1326 = vmatpush1.bf16.msra.mxu0 0
        %1327 = vmatprep.subr.bf16.mxu0 0
        %1328 = vmatpush1.bf16.msra.mxu0 0
        %1329 = vmatprep.subr.bf16.mxu0 0
        %1330 = vmatpush1.bf16.msra.mxu0 0
        %1331 = vmatprep.subr.bf16.mxu0 0
        %1332 = vmatpush1.bf16.msra.mxu0 0
        %1333 = vmatprep.subr.bf16.mxu0 0
        %1334 = vmatpush1.bf16.msra.mxu0 0
        %1335 = vmatprep.subr.bf16.mxu0 0
        %1336 = vmatpush1.bf16.msra.mxu0 0
        %1337 = vmatprep.subr.bf16.mxu0 0
        %1338 = vmatpush1.bf16.msra.mxu0 0
        %1339 = vmatprep.subr.bf16.mxu0 0
        %1340 = vmatpush1.bf16.msra.mxu0 0
        %1341 = vmatprep.subr.bf16.mxu0 0
        %1342 = vmatpush1.bf16.msra.mxu0 0
        %1343 = vmatprep.subr.bf16.mxu0 0
        %1344 = vmatpush1.bf16.msra.mxu0 0
        %1345 = vmatprep.subr.bf16.mxu0 0
        %1346 = vmatpush1.bf16.msra.mxu0 0
        %1347 = vmatprep.subr.bf16.mxu0 0
        %1348 = vmatpush1.bf16.msra.mxu0 0
        %1349 = vmatprep.mubr.bf16.mxu0 0
        %1350 = vmatmul.mubr.bf16.gmra.mrb[0].mxu0 %v1312
        %v1351 = vpop.f32.mrb[0].mxu0
        %v1352 = vadd.f32 0.0, %v1351
        %v1353 = vpop.f32.mrb[0].mxu0
        %v1354 = vpop.f32.mrb[0].mxu0
        %v1355 = vpop.f32.mrb[0].mxu0
        %1356 = vdwg.mxu0
        %v1357 = vrcp.pop %v1306
        %v1358 = vmul.f32 %v1352, %v1357
        %1360 = vrot.lane.b32.xlu0 %v1358, 4
        %v1361 = vpop.permute.xlu0 %1360
        %vm1363 = vcmask 64544
        %1364 = vst.msk [vmem:[#allocation2] sm:$0xff] %vm1363, %v1361
        %1365 = vrot.lane.b32.xlu0 %v1135, 120
        %v1366 = vpop.permute.xlu0 %1365
        %1367 = vrot.lane.b32.xlu0 %v1136, 120
        %v1368 = vpop.permute.xlu0 %1367
        %v1370 = vsel %vm1138, %v1366, 0
        %v1373 = vsel %vm1138, %v1368, 0
        %1375 = vmatprep.subr.bf16.mxu0 0
        %1376 = vmatpush1.bf16.xpose.msra.mxu0 %v1373
        %1377 = vmatprep.subr.bf16.mxu0 0
        %1378 = vmatpush1.bf16.xpose.msra.mxu0 0
        %1379 = vmatprep.subr.bf16.mxu0 0
        %1380 = vmatpush1.bf16.xpose.msra.mxu0 0
        %1381 = vmatprep.subr.bf16.mxu0 0
        %1382 = vmatpush1.bf16.xpose.msra.mxu0 0
        %1383 = vmatprep.subr.bf16.mxu0 0
        %1384 = vmatpush1.bf16.xpose.msra.mxu0 0
        %1385 = vmatprep.subr.bf16.mxu0 0
        %1386 = vmatpush1.bf16.xpose.msra.mxu0 0
        %1387 = vmatprep.subr.bf16.mxu0 0
        %1388 = vmatpush1.bf16.xpose.msra.mxu0 0
        %1389 = vmatprep.subr.bf16.mxu0 0
        %1390 = vmatpush1.bf16.xpose.msra.mxu0 0
        %1391 = vmatprep.subr.bf16.mxu0 0
        %1392 = vmatpush1.bf16.xpose.msra.mxu0 0
        %1393 = vmatprep.subr.bf16.mxu0 0
        %1394 = vmatpush1.bf16.xpose.msra.mxu0 0
        %1395 = vmatprep.subr.bf16.mxu0 0
        %1396 = vmatpush1.bf16.xpose.msra.mxu0 0
        %1397 = vmatprep.subr.bf16.mxu0 0
        %1398 = vmatpush1.bf16.xpose.msra.mxu0 0
        %1399 = vmatprep.subr.bf16.mxu0 0
        %1400 = vmatpush1.bf16.xpose.msra.mxu0 0
        %1401 = vmatprep.subr.bf16.mxu0 0
        %1402 = vmatpush1.bf16.xpose.msra.mxu0 0
        %1403 = vmatprep.subr.bf16.mxu0 0
        %1404 = vmatpush1.bf16.xpose.msra.mxu0 0
        %1405 = vmatprep.subr.bf16.mxu0 0
        %1406 = vmatpush1.bf16.xpose.msra.mxu0 0
        %1407 = vmatprep.mubr.bf16.mxu0 0
        %1408 = vmatmul.mubr.bf16.gmra.mrb[0].mxu0 %v1370
        %v1409 = vpop.f32.mrb[0].mxu0
        %v1410 = vadd.f32 0.0, %v1409
        %v1411 = vpop.f32.mrb[0].mxu0
        %v1412 = vpop.f32.mrb[0].mxu0
        %v1413 = vpop.f32.mrb[0].mxu0
        %1414 = vdwg.mxu0
        %v1415 = vsel %vm1185, %v1410, -inf
        %1416 = vmax.xlane.f32.xlu0 %v1415
        %v1417 = vpop.xlane.xlu0 %1416
        %v1418 = vsub.f32 %v1410, %v1417
        %v1419 = vmul.f32 %v1418, 1.442695
        %v1420 = vpow.pop %v1419
        %v1421 = vsel %vm1185, %v1420, 0.0
        %1422 = vadd.xlane.f32.xlu0 %v1421
        %v1423 = vpop.xlane.xlu0 %1422
        %v1424 = vpack.c.bf16 %v1420, %v1420
        %1425 = vrot.lane.b32.xlu0 %v1137, 120
        %v1426 = vpop.permute.xlu0 %1425
        %v1428 = vsel %vm1185, %v1424, 0
        %v1431 = vsel %vm1199, %v1426, 0
        %1433 = vmatprep.subr.bf16.mxu0 0
        %1434 = vmatpush1.bf16.msra.mxu0 %v1431
        %1435 = vmatprep.subr.bf16.mxu0 0
        %1436 = vmatpush1.bf16.msra.mxu0 0
        %1437 = vmatprep.subr.bf16.mxu0 0
        %1438 = vmatpush1.bf16.msra.mxu0 0
        %1439 = vmatprep.subr.bf16.mxu0 0
        %1440 = vmatpush1.bf16.msra.mxu0 0
        %1441 = vmatprep.subr.bf16.mxu0 0
        %1442 = vmatpush1.bf16.msra.mxu0 0
        %1443 = vmatprep.subr.bf16.mxu0 0
        %1444 = vmatpush1.bf16.msra.mxu0 0
        %1445 = vmatprep.subr.bf16.mxu0 0
        %1446 = vmatpush1.bf16.msra.mxu0 0
        %1447 = vmatprep.subr.bf16.mxu0 0
        %1448 = vmatpush1.bf16.msra.mxu0 0
        %1449 = vmatprep.subr.bf16.mxu0 0
        %1450 = vmatpush1.bf16.msra.mxu0 0
        %1451 = vmatprep.subr.bf16.mxu0 0
        %1452 = vmatpush1.bf16.msra.mxu0 0
        %1453 = vmatprep.subr.bf16.mxu0 0
        %1454 = vmatpush1.bf16.msra.mxu0 0
        %1455 = vmatprep.subr.bf16.mxu0 0
        %1456 = vmatpush1.bf16.msra.mxu0 0
        %1457 = vmatprep.subr.bf16.mxu0 0
        %1458 = vmatpush1.bf16.msra.mxu0 0
        %1459 = vmatprep.subr.bf16.mxu0 0
        %1460 = vmatpush1.bf16.msra.mxu0 0
        %1461 = vmatprep.subr.bf16.mxu0 0
        %1462 = vmatpush1.bf16.msra.mxu0 0
        %1463 = vmatprep.subr.bf16.mxu0 0
        %1464 = vmatpush1.bf16.msra.mxu0 0
        %1465 = vmatprep.mubr.bf16.mxu0 0
        %1466 = vmatmul.mubr.bf16.gmra.mrb[0].mxu0 %v1428
        %v1467 = vpop.f32.mrb[0].mxu0
        %v1468 = vadd.f32 0.0, %v1467
        %v1469 = vpop.f32.mrb[0].mxu0
        %v1470 = vpop.f32.mrb[0].mxu0
        %v1471 = vpop.f32.mrb[0].mxu0
        %1472 = vdwg.mxu0
        %v1473 = vrcp.pop %v1423
        %v1474 = vmul.f32 %v1468, %v1473
        %1476 = vrot.lane.b32.xlu0 %v1474, 8
        %v1477 = vpop.permute.xlu0 %1476
        %vm1479 = vcmask 97344
        %1480 = vst.msk [vmem:[#allocation2] sm:$0xff] %vm1479, %v1477
        %1481 = vrot.lane.b32.xlu0 %v1135, 116
        %v1482 = vpop.permute.xlu0 %1481
        %1483 = vrot.lane.b32.xlu0 %v1136, 116
        %v1484 = vpop.permute.xlu0 %1483
        %v1486 = vsel %vm1138, %v1482, 0
        %v1489 = vsel %vm1138, %v1484, 0
        %1491 = vmatprep.subr.bf16.mxu0 0
        %1492 = vmatpush1.bf16.xpose.msra.mxu0 %v1489
        %1493 = vmatprep.subr.bf16.mxu0 0
        %1494 = vmatpush1.bf16.xpose.msra.mxu0 0
        %1495 = vmatprep.subr.bf16.mxu0 0
        %1496 = vmatpush1.bf16.xpose.msra.mxu0 0
        %1497 = vmatprep.subr.bf16.mxu0 0
        %1498 = vmatpush1.bf16.xpose.msra.mxu0 0
        %1499 = vmatprep.subr.bf16.mxu0 0
        %1500 = vmatpush1.bf16.xpose.msra.mxu0 0
        %1501 = vmatprep.subr.bf16.mxu0 0
        %1502 = vmatpush1.bf16.xpose.msra.mxu0 0
        %1503 = vmatprep.subr.bf16.mxu0 0
        %1504 = vmatpush1.bf16.xpose.msra.mxu0 0
        %1505 = vmatprep.subr.bf16.mxu0 0
        %1506 = vmatpush1.bf16.xpose.msra.mxu0 0
        %1507 = vmatprep.subr.bf16.mxu0 0
        %1508 = vmatpush1.bf16.xpose.msra.mxu0 0
        %1509 = vmatprep.subr.bf16.mxu0 0
        %1510 = vmatpush1.bf16.xpose.msra.mxu0 0
        %1511 = vmatprep.subr.bf16.mxu0 0
        %1512 = vmatpush1.bf16.xpose.msra.mxu0 0
        %1513 = vmatprep.subr.bf16.mxu0 0
        %1514 = vmatpush1.bf16.xpose.msra.mxu0 0
        %1515 = vmatprep.subr.bf16.mxu0 0
        %1516 = vmatpush1.bf16.xpose.msra.mxu0 0
        %1517 = vmatprep.subr.bf16.mxu0 0
        %1518 = vmatpush1.bf16.xpose.msra.mxu0 0
        %1519 = vmatprep.subr.bf16.mxu0 0
        %1520 = vmatpush1.bf16.xpose.msra.mxu0 0
        %1521 = vmatprep.subr.bf16.mxu0 0
        %1522 = vmatpush1.bf16.xpose.msra.mxu0 0
        %1523 = vmatprep.mubr.bf16.mxu0 0
        %1524 = vmatmul.mubr.bf16.gmra.mrb[0].mxu0 %v1486
        %v1525 = vpop.f32.mrb[0].mxu0
        %v1526 = vadd.f32 0.0, %v1525
        %v1527 = vpop.f32.mrb[0].mxu0
        %v1528 = vpop.f32.mrb[0].mxu0
        %v1529 = vpop.f32.mrb[0].mxu0
        %1530 = vdwg.mxu0
        %v1531 = vsel %vm1185, %v1526, -inf
        %1532 = vmax.xlane.f32.xlu0 %v1531
        %v1533 = vpop.xlane.xlu0 %1532
        %v1534 = vsub.f32 %v1526, %v1533
        %v1535 = vmul.f32 %v1534, 1.442695
        %v1536 = vpow.pop %v1535
        %v1537 = vsel %vm1185, %v1536, 0.0
        %1538 = vadd.xlane.f32.xlu0 %v1537
        %v1539 = vpop.xlane.xlu0 %1538
        %v1540 = vpack.c.bf16 %v1536, %v1536
        %1541 = vrot.lane.b32.xlu0 %v1137, 116
        %v1542 = vpop.permute.xlu0 %1541
        %v1544 = vsel %vm1185, %v1540, 0
        %v1547 = vsel %vm1199, %v1542, 0
        %1549 = vmatprep.subr.bf16.mxu0 0
        %1550 = vmatpush1.bf16.msra.mxu0 %v1547
        %1551 = vmatprep.subr.bf16.mxu0 0
        %1552 = vmatpush1.bf16.msra.mxu0 0
        %1553 = vmatprep.subr.bf16.mxu0 0
        %1554 = vmatpush1.bf16.msra.mxu0 0
        %1555 = vmatprep.subr.bf16.mxu0 0
        %1556 = vmatpush1.bf16.msra.mxu0 0
        %1557 = vmatprep.subr.bf16.mxu0 0
        %1558 = vmatpush1.bf16.msra.mxu0 0
        %1559 = vmatprep.subr.bf16.mxu0 0
        %1560 = vmatpush1.bf16.msra.mxu0 0
        %1561 = vmatprep.subr.bf16.mxu0 0
        %1562 = vmatpush1.bf16.msra.mxu0 0
        %1563 = vmatprep.subr.bf16.mxu0 0
        %1564 = vmatpush1.bf16.msra.mxu0 0
        %1565 = vmatprep.subr.bf16.mxu0 0
        %1566 = vmatpush1.bf16.msra.mxu0 0
        %1567 = vmatprep.subr.bf16.mxu0 0
        %1568 = vmatpush1.bf16.msra.mxu0 0
        %1569 = vmatprep.subr.bf16.mxu0 0
        %1570 = vmatpush1.bf16.msra.mxu0 0
        %1571 = vmatprep.subr.bf16.mxu0 0
        %1572 = vmatpush1.bf16.msra.mxu0 0
        %1573 = vmatprep.subr.bf16.mxu0 0
        %1574 = vmatpush1.bf16.msra.mxu0 0
        %1575 = vmatprep.subr.bf16.mxu0 0
        %1576 = vmatpush1.bf16.msra.mxu0 0
        %1577 = vmatprep.subr.bf16.mxu0 0
        %1578 = vmatpush1.bf16.msra.mxu0 0
        %1579 = vmatprep.subr.bf16.mxu0 0
        %1580 = vmatpush1.bf16.msra.mxu0 0
        %1581 = vmatprep.mubr.bf16.mxu0 0
        %1582 = vmatmul.mubr.bf16.gmra.mrb[0].mxu0 %v1544
        %v1583 = vpop.f32.mrb[0].mxu0
        %v1584 = vadd.f32 0.0, %v1583
        %v1585 = vpop.f32.mrb[0].mxu0
        %v1586 = vpop.f32.mrb[0].mxu0
        %v1587 = vpop.f32.mrb[0].mxu0
        %1588 = vdwg.mxu0
        %v1589 = vrcp.pop %v1539
        %v1590 = vmul.f32 %v1584, %v1589
        %1592 = vrot.lane.b32.xlu0 %v1590, 12
        %v1593 = vpop.permute.xlu0 %1592
        %vm1595 = vcmask 130144
        %1596 = vst.msk [vmem:[#allocation2] sm:$0xff] %vm1595, %v1593
        %1597 = vrot.lane.b32.xlu0 %v1135, 112
        %v1598 = vpop.permute.xlu0 %1597
        %1599 = vrot.lane.b32.xlu0 %v1136, 112
        %v1600 = vpop.permute.xlu0 %1599
        %v1602 = vsel %vm1138, %v1598, 0
        %v1605 = vsel %vm1138, %v1600, 0
        %1607 = vmatprep.subr.bf16.mxu0 0
        %1608 = vmatpush1.bf16.xpose.msra.mxu0 %v1605
        %1609 = vmatprep.subr.bf16.mxu0 0
        %1610 = vmatpush1.bf16.xpose.msra.mxu0 0
        %1611 = vmatprep.subr.bf16.mxu0 0
        %1612 = vmatpush1.bf16.xpose.msra.mxu0 0
        %1613 = vmatprep.subr.bf16.mxu0 0
        %1614 = vmatpush1.bf16.xpose.msra.mxu0 0
        %1615 = vmatprep.subr.bf16.mxu0 0
        %1616 = vmatpush1.bf16.xpose.msra.mxu0 0
        %1617 = vmatprep.subr.bf16.mxu0 0
        %1618 = vmatpush1.bf16.xpose.msra.mxu0 0
        %1619 = vmatprep.subr.bf16.mxu0 0
        %1620 = vmatpush1.bf16.xpose.msra.mxu0 0
        %1621 = vmatprep.subr.bf16.mxu0 0
        %1622 = vmatpush1.bf16.xpose.msra.mxu0 0
        %1623 = vmatprep.subr.bf16.mxu0 0
        %1624 = vmatpush1.bf16.xpose.msra.mxu0 0
        %1625 = vmatprep.subr.bf16.mxu0 0
        %1626 = vmatpush1.bf16.xpose.msra.mxu0 0
        %1627 = vmatprep.subr.bf16.mxu0 0
        %1628 = vmatpush1.bf16.xpose.msra.mxu0 0
        %1629 = vmatprep.subr.bf16.mxu0 0
        %1630 = vmatpush1.bf16.xpose.msra.mxu0 0
        %1631 = vmatprep.subr.bf16.mxu0 0
        %1632 = vmatpush1.bf16.xpose.msra.mxu0 0
        %1633 = vmatprep.subr.bf16.mxu0 0
        %1634 = vmatpush1.bf16.xpose.msra.mxu0 0
        %1635 = vmatprep.subr.bf16.mxu0 0
        %1636 = vmatpush1.bf16.xpose.msra.mxu0 0
        %1637 = vmatprep.subr.bf16.mxu0 0
        %1638 = vmatpush1.bf16.xpose.msra.mxu0 0
        %1639 = vmatprep.mubr.bf16.mxu0 0
        %1640 = vmatmul.mubr.bf16.gmra.mrb[0].mxu0 %v1602
        %v1641 = vpop.f32.mrb[0].mxu0
        %v1642 = vadd.f32 0.0, %v1641
        %v1643 = vpop.f32.mrb[0].mxu0
        %v1644 = vpop.f32.mrb[0].mxu0
        %v1645 = vpop.f32.mrb[0].mxu0
        %1646 = vdwg.mxu0
        %v1647 = vsel %vm1185, %v1642, -inf
        %1648 = vmax.xlane.f32.xlu0 %v1647
        %v1649 = vpop.xlane.xlu0 %1648
        %v1650 = vsub.f32 %v1642, %v1649
        %v1651 = vmul.f32 %v1650, 1.442695
        %v1652 = vpow.pop %v1651
        %v1653 = vsel %vm1185, %v1652, 0.0
        %1654 = vadd.xlane.f32.xlu0 %v1653
        %v1655 = vpop.xlane.xlu0 %1654
        %v1656 = vpack.c.bf16 %v1652, %v1652
        %1657 = vrot.lane.b32.xlu0 %v1137, 112
        %v1658 = vpop.permute.xlu0 %1657
        %v1660 = vsel %vm1185, %v1656, 0
        %v1663 = vsel %vm1199, %v1658, 0
        %1665 = vmatprep.subr.bf16.mxu0 0
        %1666 = vmatpush1.bf16.msra.mxu0 %v1663
        %1667 = vmatprep.subr.bf16.mxu0 0
        %1668 = vmatpush1.bf16.msra.mxu0 0
        %1669 = vmatprep.subr.bf16.mxu0 0
        %1670 = vmatpush1.bf16.msra.mxu0 0
        %1671 = vmatprep.subr.bf16.mxu0 0
        %1672 = vmatpush1.bf16.msra.mxu0 0
        %1673 = vmatprep.subr.bf16.mxu0 0
        %1674 = vmatpush1.bf16.msra.mxu0 0
        %1675 = vmatprep.subr.bf16.mxu0 0
        %1676 = vmatpush1.bf16.msra.mxu0 0
        %1677 = vmatprep.subr.bf16.mxu0 0
        %1678 = vmatpush1.bf16.msra.mxu0 0
        %1679 = vmatprep.subr.bf16.mxu0 0
        %1680 = vmatpush1.bf16.msra.mxu0 0
        %1681 = vmatprep.subr.bf16.mxu0 0
        %1682 = vmatpush1.bf16.msra.mxu0 0
        %1683 = vmatprep.subr.bf16.mxu0 0
        %1684 = vmatpush1.bf16.msra.mxu0 0
        %1685 = vmatprep.subr.bf16.mxu0 0
        %1686 = vmatpush1.bf16.msra.mxu0 0
        %1687 = vmatprep.subr.bf16.mxu0 0
        %1688 = vmatpush1.bf16.msra.mxu0 0
        %1689 = vmatprep.subr.bf16.mxu0 0
        %1690 = vmatpush1.bf16.msra.mxu0 0
        %1691 = vmatprep.subr.bf16.mxu0 0
        %1692 = vmatpush1.bf16.msra.mxu0 0
        %1693 = vmatprep.subr.bf16.mxu0 0
        %1694 = vmatpush1.bf16.msra.mxu0 0
        %1695 = vmatprep.subr.bf16.mxu0 0
        %1696 = vmatpush1.bf16.msra.mxu0 0
        %1697 = vmatprep.mubr.bf16.mxu0 0
        %1698 = vmatmul.mubr.bf16.gmra.mrb[0].mxu0 %v1660
        %v1699 = vpop.f32.mrb[0].mxu0
        %v1700 = vadd.f32 0.0, %v1699
        %v1701 = vpop.f32.mrb[0].mxu0
        %v1702 = vpop.f32.mrb[0].mxu0
        %v1703 = vpop.f32.mrb[0].mxu0
        %1704 = vdwg.mxu0
        %v1705 = vrcp.pop %v1655
        %v1706 = vmul.f32 %v1700, %v1705
        %1708 = vrot.lane.b32.xlu0 %v1706, 16
        %v1709 = vpop.permute.xlu0 %1708
        %vm1711 = vcmask 162944
        %1712 = vst.msk [vmem:[#allocation2] sm:$0xff] %vm1711, %v1709
        %1713 = vrot.lane.b32.xlu0 %v1135, 108
        %v1714 = vpop.permute.xlu0 %1713
        %1715 = vrot.lane.b32.xlu0 %v1136, 108
        %v1716 = vpop.permute.xlu0 %1715
        %v1718 = vsel %vm1138, %v1714, 0
        %v1721 = vsel %vm1138, %v1716, 0
        %1723 = vmatprep.subr.bf16.mxu0 0
        %1724 = vmatpush1.bf16.xpose.msra.mxu0 %v1721
        %1725 = vmatprep.subr.bf16.mxu0 0
        %1726 = vmatpush1.bf16.xpose.msra.mxu0 0
        %1727 = vmatprep.subr.bf16.mxu0 0
        %1728 = vmatpush1.bf16.xpose.msra.mxu0 0
        %1729 = vmatprep.subr.bf16.mxu0 0
        %1730 = vmatpush1.bf16.xpose.msra.mxu0 0
        %1731 = vmatprep.subr.bf16.mxu0 0
        %1732 = vmatpush1.bf16.xpose.msra.mxu0 0
        %1733 = vmatprep.subr.bf16.mxu0 0
        %1734 = vmatpush1.bf16.xpose.msra.mxu0 0
        %1735 = vmatprep.subr.bf16.mxu0 0
        %1736 = vmatpush1.bf16.xpose.msra.mxu0 0
        %1737 = vmatprep.subr.bf16.mxu0 0
        %1738 = vmatpush1.bf16.xpose.msra.mxu0 0
        %1739 = vmatprep.subr.bf16.mxu0 0
        %1740 = vmatpush1.bf16.xpose.msra.mxu0 0
        %1741 = vmatprep.subr.bf16.mxu0 0
        %1742 = vmatpush1.bf16.xpose.msra.mxu0 0
        %1743 = vmatprep.subr.bf16.mxu0 0
        %1744 = vmatpush1.bf16.xpose.msra.mxu0 0
        %1745 = vmatprep.subr.bf16.mxu0 0
        %1746 = vmatpush1.bf16.xpose.msra.mxu0 0
        %1747 = vmatprep.subr.bf16.mxu0 0
        %1748 = vmatpush1.bf16.xpose.msra.mxu0 0
        %1749 = vmatprep.subr.bf16.mxu0 0
        %1750 = vmatpush1.bf16.xpose.msra.mxu0 0
        %1751 = vmatprep.subr.bf16.mxu0 0
        %1752 = vmatpush1.bf16.xpose.msra.mxu0 0
        %1753 = vmatprep.subr.bf16.mxu0 0
        %1754 = vmatpush1.bf16.xpose.msra.mxu0 0
        %1755 = vmatprep.mubr.bf16.mxu0 0
        %1756 = vmatmul.mubr.bf16.gmra.mrb[0].mxu0 %v1718
        %v1757 = vpop.f32.mrb[0].mxu0
        %v1758 = vadd.f32 0.0, %v1757
        %v1759 = vpop.f32.mrb[0].mxu0
        %v1760 = vpop.f32.mrb[0].mxu0
        %v1761 = vpop.f32.mrb[0].mxu0
        %1762 = vdwg.mxu0
        %v1763 = vsel %vm1185, %v1758, -inf
        %1764 = vmax.xlane.f32.xlu0 %v1763
        %v1765 = vpop.xlane.xlu0 %1764
        %v1766 = vsub.f32 %v1758, %v1765
        %v1767 = vmul.f32 %v1766, 1.442695
        %v1768 = vpow.pop %v1767
        %v1769 = vsel %vm1185, %v1768, 0.0
        %1770 = vadd.xlane.f32.xlu0 %v1769
        %v1771 = vpop.xlane.xlu0 %1770
        %v1772 = vpack.c.bf16 %v1768, %v1768
        %1773 = vrot.lane.b32.xlu0 %v1137, 108
        %v1774 = vpop.permute.xlu0 %1773
        %v1776 = vsel %vm1185, %v1772, 0
        %v1779 = vsel %vm1199, %v1774, 0
        %1781 = vmatprep.subr.bf16.mxu0 0
        %1782 = vmatpush1.bf16.msra.mxu0 %v1779
        %1783 = vmatprep.subr.bf16.mxu0 0
        %1784 = vmatpush1.bf16.msra.mxu0 0
        %1785 = vmatprep.subr.bf16.mxu0 0
        %1786 = vmatpush1.bf16.msra.mxu0 0
        %1787 = vmatprep.subr.bf16.mxu0 0
        %1788 = vmatpush1.bf16.msra.mxu0 0
        %1789 = vmatprep.subr.bf16.mxu0 0
        %1790 = vmatpush1.bf16.msra.mxu0 0
        %1791 = vmatprep.subr.bf16.mxu0 0
        %1792 = vmatpush1.bf16.msra.mxu0 0
        %1793 = vmatprep.subr.bf16.mxu0 0
        %1794 = vmatpush1.bf16.msra.mxu0 0
        %1795 = vmatprep.subr.bf16.mxu0 0
        %1796 = vmatpush1.bf16.msra.mxu0 0
        %1797 = vmatprep.subr.bf16.mxu0 0
        %1798 = vmatpush1.bf16.msra.mxu0 0
        %1799 = vmatprep.subr.bf16.mxu0 0
        %1800 = vmatpush1.bf16.msra.mxu0 0
        %1801 = vmatprep.subr.bf16.mxu0 0
        %1802 = vmatpush1.bf16.msra.mxu0 0
        %1803 = vmatprep.subr.bf16.mxu0 0
        %1804 = vmatpush1.bf16.msra.mxu0 0
        %1805 = vmatprep.subr.bf16.mxu0 0
        %1806 = vmatpush1.bf16.msra.mxu0 0
        %1807 = vmatprep.subr.bf16.mxu0 0
        %1808 = vmatpush1.bf16.msra.mxu0 0
        %1809 = vmatprep.subr.bf16.mxu0 0
        %1810 = vmatpush1.bf16.msra.mxu0 0
        %1811 = vmatprep.subr.bf16.mxu0 0
        %1812 = vmatpush1.bf16.msra.mxu0 0
        %1813 = vmatprep.mubr.bf16.mxu0 0
        %1814 = vmatmul.mubr.bf16.gmra.mrb[0].mxu0 %v1776
        %v1815 = vpop.f32.mrb[0].mxu0
        %v1816 = vadd.f32 0.0, %v1815
        %v1817 = vpop.f32.mrb[0].mxu0
        %v1818 = vpop.f32.mrb[0].mxu0
        %v1819 = vpop.f32.mrb[0].mxu0
        %1820 = vdwg.mxu0
        %v1821 = vrcp.pop %v1771
        %v1822 = vmul.f32 %v1816, %v1821
        %1824 = vrot.lane.b32.xlu0 %v1822, 20
        %v1825 = vpop.permute.xlu0 %1824
        %vm1827 = vcmask 195744
        %1828 = vst.msk [vmem:[#allocation2] sm:$0xff] %vm1827, %v1825
        %1829 = vrot.lane.b32.xlu0 %v1135, 104
        %v1830 = vpop.permute.xlu0 %1829
        %1831 = vrot.lane.b32.xlu0 %v1136, 104
        %v1832 = vpop.permute.xlu0 %1831
        %v1834 = vsel %vm1138, %v1830, 0
        %v1837 = vsel %vm1138, %v1832, 0
        %1839 = vmatprep.subr.bf16.mxu0 0
        %1840 = vmatpush1.bf16.xpose.msra.mxu0 %v1837
        %1841 = vmatprep.subr.bf16.mxu0 0
        %1842 = vmatpush1.bf16.xpose.msra.mxu0 0
        %1843 = vmatprep.subr.bf16.mxu0 0
        %1844 = vmatpush1.bf16.xpose.msra.mxu0 0
        %1845 = vmatprep.subr.bf16.mxu0 0
        %1846 = vmatpush1.bf16.xpose.msra.mxu0 0
        %1847 = vmatprep.subr.bf16.mxu0 0
        %1848 = vmatpush1.bf16.xpose.msra.mxu0 0
        %1849 = vmatprep.subr.bf16.mxu0 0
        %1850 = vmatpush1.bf16.xpose.msra.mxu0 0
        %1851 = vmatprep.subr.bf16.mxu0 0
        %1852 = vmatpush1.bf16.xpose.msra.mxu0 0
        %1853 = vmatprep.subr.bf16.mxu0 0
        %1854 = vmatpush1.bf16.xpose.msra.mxu0 0
        %1855 = vmatprep.subr.bf16.mxu0 0
        %1856 = vmatpush1.bf16.xpose.msra.mxu0 0
        %1857 = vmatprep.subr.bf16.mxu0 0
        %1858 = vmatpush1.bf16.xpose.msra.mxu0 0
        %1859 = vmatprep.subr.bf16.mxu0 0
        %1860 = vmatpush1.bf16.xpose.msra.mxu0 0
        %1861 = vmatprep.subr.bf16.mxu0 0
        %1862 = vmatpush1.bf16.xpose.msra.mxu0 0
        %1863 = vmatprep.subr.bf16.mxu0 0
        %1864 = vmatpush1.bf16.xpose.msra.mxu0 0
        %1865 = vmatprep.subr.bf16.mxu0 0
        %1866 = vmatpush1.bf16.xpose.msra.mxu0 0
        %1867 = vmatprep.subr.bf16.mxu0 0
        %1868 = vmatpush1.bf16.xpose.msra.mxu0 0
        %1869 = vmatprep.subr.bf16.mxu0 0
        %1870 = vmatpush1.bf16.xpose.msra.mxu0 0
        %1871 = vmatprep.mubr.bf16.mxu0 0
        %1872 = vmatmul.mubr.bf16.gmra.mrb[0].mxu0 %v1834
        %v1873 = vpop.f32.mrb[0].mxu0
        %v1874 = vadd.f32 0.0, %v1873
        %v1875 = vpop.f32.mrb[0].mxu0
        %v1876 = vpop.f32.mrb[0].mxu0
        %v1877 = vpop.f32.mrb[0].mxu0
        %1878 = vdwg.mxu0
        %v1879 = vsel %vm1185, %v1874, -inf
        %1880 = vmax.xlane.f32.xlu0 %v1879
        %v1881 = vpop.xlane.xlu0 %1880
        %v1882 = vsub.f32 %v1874, %v1881
        %v1883 = vmul.f32 %v1882, 1.442695
        %v1884 = vpow.pop %v1883
        %v1885 = vsel %vm1185, %v1884, 0.0
        %1886 = vadd.xlane.f32.xlu0 %v1885
        %v1887 = vpop.xlane.xlu0 %1886
        %v1888 = vpack.c.bf16 %v1884, %v1884
        %1889 = vrot.lane.b32.xlu0 %v1137, 104
        %v1890 = vpop.permute.xlu0 %1889
        %v1892 = vsel %vm1185, %v1888, 0
        %v1895 = vsel %vm1199, %v1890, 0
        %1897 = vmatprep.subr.bf16.mxu0 0
        %1898 = vmatpush1.bf16.msra.mxu0 %v1895
        %1899 = vmatprep.subr.bf16.mxu0 0
        %1900 = vmatpush1.bf16.msra.mxu0 0
        %1901 = vmatprep.subr.bf16.mxu0 0
        %1902 = vmatpush1.bf16.msra.mxu0 0
        %1903 = vmatprep.subr.bf16.mxu0 0
        %1904 = vmatpush1.bf16.msra.mxu0 0
        %1905 = vmatprep.subr.bf16.mxu0 0
        %1906 = vmatpush1.bf16.msra.mxu0 0
        %1907 = vmatprep.subr.bf16.mxu0 0
        %1908 = vmatpush1.bf16.msra.mxu0 0
        %1909 = vmatprep.subr.bf16.mxu0 0
        %1910 = vmatpush1.bf16.msra.mxu0 0
        %1911 = vmatprep.subr.bf16.mxu0 0
        %1912 = vmatpush1.bf16.msra.mxu0 0
        %1913 = vmatprep.subr.bf16.mxu0 0
        %1914 = vmatpush1.bf16.msra.mxu0 0
        %1915 = vmatprep.subr.bf16.mxu0 0
        %1916 = vmatpush1.bf16.msra.mxu0 0
        %1917 = vmatprep.subr.bf16.mxu0 0
        %1918 = vmatpush1.bf16.msra.mxu0 0
        %1919 = vmatprep.subr.bf16.mxu0 0
        %1920 = vmatpush1.bf16.msra.mxu0 0
        %1921 = vmatprep.subr.bf16.mxu0 0
        %1922 = vmatpush1.bf16.msra.mxu0 0
        %1923 = vmatprep.subr.bf16.mxu0 0
        %1924 = vmatpush1.bf16.msra.mxu0 0
        %1925 = vmatprep.subr.bf16.mxu0 0
        %1926 = vmatpush1.bf16.msra.mxu0 0
        %1927 = vmatprep.subr.bf16.mxu0 0
        %1928 = vmatpush1.bf16.msra.mxu0 0
        %1929 = vmatprep.mubr.bf16.mxu0 0
        %1930 = vmatmul.mubr.bf16.gmra.mrb[0].mxu0 %v1892
        %v1931 = vpop.f32.mrb[0].mxu0
        %v1932 = vadd.f32 0.0, %v1931
        %v1933 = vpop.f32.mrb[0].mxu0
        %v1934 = vpop.f32.mrb[0].mxu0
        %v1935 = vpop.f32.mrb[0].mxu0
        %1936 = vdwg.mxu0
        %v1937 = vrcp.pop %v1887
        %v1938 = vmul.f32 %v1932, %v1937
        %1940 = vrot.lane.b32.xlu0 %v1938, 24
        %v1941 = vpop.permute.xlu0 %1940
        %vm1943 = vcmask 228544
        %1944 = vst.msk [vmem:[#allocation2] sm:$0xff] %vm1943, %v1941
        %1945 = vrot.lane.b32.xlu0 %v1135, 100
        %v1946 = vpop.permute.xlu0 %1945
        %1947 = vrot.lane.b32.xlu0 %v1136, 100
        %v1948 = vpop.permute.xlu0 %1947
        %v1950 = vsel %vm1138, %v1946, 0
        %v1953 = vsel %vm1138, %v1948, 0
        %1955 = vmatprep.subr.bf16.mxu0 0
        %1956 = vmatpush1.bf16.xpose.msra.mxu0 %v1953
        %1957 = vmatprep.subr.bf16.mxu0 0
        %1958 = vmatpush1.bf16.xpose.msra.mxu0 0
        %1959 = vmatprep.subr.bf16.mxu0 0
        %1960 = vmatpush1.bf16.xpose.msra.mxu0 0
        %1961 = vmatprep.subr.bf16.mxu0 0
        %1962 = vmatpush1.bf16.xpose.msra.mxu0 0
        %1963 = vmatprep.subr.bf16.mxu0 0
        %1964 = vmatpush1.bf16.xpose.msra.mxu0 0
        %1965 = vmatprep.subr.bf16.mxu0 0
        %1966 = vmatpush1.bf16.xpose.msra.mxu0 0
        %1967 = vmatprep.subr.bf16.mxu0 0
        %1968 = vmatpush1.bf16.xpose.msra.mxu0 0
        %1969 = vmatprep.subr.bf16.mxu0 0
        %1970 = vmatpush1.bf16.xpose.msra.mxu0 0
        %1971 = vmatprep.subr.bf16.mxu0 0
        %1972 = vmatpush1.bf16.xpose.msra.mxu0 0
        %1973 = vmatprep.subr.bf16.mxu0 0
        %1974 = vmatpush1.bf16.xpose.msra.mxu0 0
        %1975 = vmatprep.subr.bf16.mxu0 0
        %1976 = vmatpush1.bf16.xpose.msra.mxu0 0
        %1977 = vmatprep.subr.bf16.mxu0 0
        %1978 = vmatpush1.bf16.xpose.msra.mxu0 0
        %1979 = vmatprep.subr.bf16.mxu0 0
        %1980 = vmatpush1.bf16.xpose.msra.mxu0 0
        %1981 = vmatprep.subr.bf16.mxu0 0
        %1982 = vmatpush1.bf16.xpose.msra.mxu0 0
        %1983 = vmatprep.subr.bf16.mxu0 0
        %1984 = vmatpush1.bf16.xpose.msra.mxu0 0
        %1985 = vmatprep.subr.bf16.mxu0 0
        %1986 = vmatpush1.bf16.xpose.msra.mxu0 0
        %1987 = vmatprep.mubr.bf16.mxu0 0
        %1988 = vmatmul.mubr.bf16.gmra.mrb[0].mxu0 %v1950
        %v1989 = vpop.f32.mrb[0].mxu0
        %v1990 = vadd.f32 0.0, %v1989
        %v1991 = vpop.f32.mrb[0].mxu0
        %v1992 = vpop.f32.mrb[0].mxu0
        %v1993 = vpop.f32.mrb[0].mxu0
        %1994 = vdwg.mxu0
        %v1995 = vsel %vm1185, %v1990, -inf
        %1996 = vmax.xlane.f32.xlu0 %v1995
        %v1997 = vpop.xlane.xlu0 %1996
        %v1998 = vsub.f32 %v1990, %v1997
        %v1999 = vmul.f32 %v1998, 1.442695
        %v2000 = vpow.pop %v1999
        %v2001 = vsel %vm1185, %v2000, 0.0
        %2002 = vadd.xlane.f32.xlu0 %v2001
        %v2003 = vpop.xlane.xlu0 %2002
        %v2004 = vpack.c.bf16 %v2000, %v2000
        %2005 = vrot.lane.b32.xlu0 %v1137, 100
        %v2006 = vpop.permute.xlu0 %2005
        %v2008 = vsel %vm1185, %v2004, 0
        %v2011 = vsel %vm1199, %v2006, 0
        %2013 = vmatprep.subr.bf16.mxu0 0
        %2014 = vmatpush1.bf16.msra.mxu0 %v2011
        %2015 = vmatprep.subr.bf16.mxu0 0
        %2016 = vmatpush1.bf16.msra.mxu0 0
        %2017 = vmatprep.subr.bf16.mxu0 0
        %2018 = vmatpush1.bf16.msra.mxu0 0
        %2019 = vmatprep.subr.bf16.mxu0 0
        %2020 = vmatpush1.bf16.msra.mxu0 0
        %2021 = vmatprep.subr.bf16.mxu0 0
        %2022 = vmatpush1.bf16.msra.mxu0 0
        %2023 = vmatprep.subr.bf16.mxu0 0
        %2024 = vmatpush1.bf16.msra.mxu0 0
        %2025 = vmatprep.subr.bf16.mxu0 0
        %2026 = vmatpush1.bf16.msra.mxu0 0
        %2027 = vmatprep.subr.bf16.mxu0 0
        %2028 = vmatpush1.bf16.msra.mxu0 0
        %2029 = vmatprep.subr.bf16.mxu0 0
        %2030 = vmatpush1.bf16.msra.mxu0 0
        %2031 = vmatprep.subr.bf16.mxu0 0
        %2032 = vmatpush1.bf16.msra.mxu0 0
        %2033 = vmatprep.subr.bf16.mxu0 0
        %2034 = vmatpush1.bf16.msra.mxu0 0
        %2035 = vmatprep.subr.bf16.mxu0 0
        %2036 = vmatpush1.bf16.msra.mxu0 0
        %2037 = vmatprep.subr.bf16.mxu0 0
        %2038 = vmatpush1.bf16.msra.mxu0 0
        %2039 = vmatprep.subr.bf16.mxu0 0
        %2040 = vmatpush1.bf16.msra.mxu0 0
        %2041 = vmatprep.subr.bf16.mxu0 0
        %2042 = vmatpush1.bf16.msra.mxu0 0
        %2043 = vmatprep.subr.bf16.mxu0 0
        %2044 = vmatpush1.bf16.msra.mxu0 0
        %2045 = vmatprep.mubr.bf16.mxu0 0
        %2046 = vmatmul.mubr.bf16.gmra.mrb[0].mxu0 %v2008
        %v2047 = vpop.f32.mrb[0].mxu0
        %v2048 = vadd.f32 0.0, %v2047
        %v2049 = vpop.f32.mrb[0].mxu0
        %v2050 = vpop.f32.mrb[0].mxu0
        %v2051 = vpop.f32.mrb[0].mxu0
        %2052 = vdwg.mxu0
        %v2053 = vrcp.pop %v2003
        %v2054 = vmul.f32 %v2048, %v2053
        %2056 = vrot.lane.b32.xlu0 %v2054, 28
        %v2057 = vpop.permute.xlu0 %2056
        %vm2059 = vcmask 261344
        %2060 = vst.msk [vmem:[#allocation2] sm:$0xff] %vm2059, %v2057
        %v2061 = vld [vmem:[#allocation2] sm:$0xff]
        %v2062 = vpack.c.bf16 %v2061, %v2061
        %v2064 = vlaneseq
        %v2065 = vshrl.u32 %v2064, 7
        %v2066 = vsub.s32 0, %v2065
        %v2067 = vrot.slane %v969, %v2066
        %v2073 = vunpack.c.l.b16 %v965
        %v2074 = vunpack.c.l.b16 %v966
        %v2075 = vunpack.c.l.b16 %v967
        %v2076 = vunpack.c.l.b16 %v968
        %v2077 = vpack.c.b16 %v2074, %v2073
        %v2078 = vpack.c.b16 %v2076, %v2075
        %v2082 = vsel %vm909, %v2062, 0
        %2084 = vmatprep.subr.bf16.mxu0 0
        %2085 = vmatpush1.bf16.msra.mxu0 %v2077
        %2086 = vmatprep.subr.bf16.mxu0 0
        %2087 = vmatpush1.bf16.msra.mxu0 %v2078
        %2088 = vmatprep.subr.bf16.mxu0 0
        %2089 = vmatpush1.bf16.msra.mxu0 0
        %2090 = vmatprep.subr.bf16.mxu0 0
        %2091 = vmatpush1.bf16.msra.mxu0 0
        %2092 = vmatprep.subr.bf16.mxu0 0
        %2093 = vmatpush1.bf16.msra.mxu0 0
        %2094 = vmatprep.subr.bf16.mxu0 0
        %2095 = vmatpush1.bf16.msra.mxu0 0
        %2096 = vmatprep.subr.bf16.mxu0 0
        %2097 = vmatpush1.bf16.msra.mxu0 0
        %2098 = vmatprep.subr.bf16.mxu0 0
        %2099 = vmatpush1.bf16.msra.mxu0 0
        %2100 = vmatprep.subr.bf16.mxu0 0
        %2101 = vmatpush1.bf16.msra.mxu0 0
        %2102 = vmatprep.subr.bf16.mxu0 0
        %2103 = vmatpush1.bf16.msra.mxu0 0
        %2104 = vmatprep.subr.bf16.mxu0 0
        %2105 = vmatpush1.bf16.msra.mxu0 0
        %2106 = vmatprep.subr.bf16.mxu0 0
        %2107 = vmatpush1.bf16.msra.mxu0 0
        %2108 = vmatprep.subr.bf16.mxu0 0
        %2109 = vmatpush1.bf16.msra.mxu0 0
        %2110 = vmatprep.subr.bf16.mxu0 0
        %2111 = vmatpush1.bf16.msra.mxu0 0
        %2112 = vmatprep.subr.bf16.mxu0 0
        %2113 = vmatpush1.bf16.msra.mxu0 0
        %2114 = vmatprep.subr.bf16.mxu0 0
        %2115 = vmatpush1.bf16.msra.mxu0 0
        %2116 = vmatprep.mubr.bf16.mxu0 0
        %2117 = vmatmul.mubr.bf16.gmra.mrb[0].mxu0 %v2082
        %v2118 = vpop.f32.mrb[0].mxu0
        %v2119 = vadd.f32 %v2067, %v2118
        %v2120 = vpop.f32.mrb[0].mxu0
        %v2121 = vpop.f32.mrb[0].mxu0
        %v2122 = vpop.f32.mrb[0].mxu0
        %2123 = vdwg.mxu0
        %v2124 = vadd.f32 %v904, %v2119
        %v2125 = vld [vmem:[#allocation14] sm:$0x1]
        %v2126 = vld [vmem:[#allocation15] sm:$0x1]
        %v2127 = vsel %vm909, %v2124, 0.0
        %2128 = vadd.xlane.f32.xlu0 %v2127
        %v2129 = vpop.xlane.xlu0 %2128
        %v2130 = vmul.f32 %v2129, %v913
        %v2131 = vsub.f32 %v2124, %v2130
        %v2132 = vmul.f32 %v2131, %v2131
        %v2133 = vsel %vm909, %v2132, 0.0
        %2134 = vadd.xlane.f32.xlu0 %v2133
        %v2135 = vpop.xlane.xlu0 %2134
        %v2136 = vmul.f32 %v2135, %v913
        %v2137 = vadd.f32 %v2136, 1e-05
        %v2138 = vrsqrt.pop %v2137
        %v2139 = vmul.f32 %v2131, %v2138
        %v2141 = vlaneseq
        %v2142 = vshrl.u32 %v2141, 7
        %v2143 = vsub.s32 0, %v2142
        %v2144 = vrot.slane %v2125, %v2143
        %v2146 = vmul.f32 %v2139, %v2144
        %v2148 = vlaneseq
        %v2149 = vshrl.u32 %v2148, 7
        %v2150 = vsub.s32 0, %v2149
        %v2151 = vrot.slane %v2126, %v2150
        %v2153 = vadd.f32 %v2146, %v2151
        %v2154 = vld [vmem:[%s12] sm:$0xf]
        %v2155 = vld [vmem:[%s12 + $0x4] sm:$0xf]
        %v2156 = vld [vmem:[%s12 + $0x8] sm:$0xf]
        %v2157 = vld [vmem:[%s12 + $0xc] sm:$0xf]
        %v2158 = vld [vmem:[#allocation17] sm:$0xf]
        %v2159 = vld [vmem:[#allocation17 + $0x4] sm:$0xf]
        %v2160 = vld [vmem:[#allocation18] sm:$0xf]
        %v2161 = vld [vmem:[#allocation18 + $0x4] sm:$0xf]
        %v2162 = vld [vmem:[%s15] sm:$0xf]
        %v2163 = vld [vmem:[%s15 + $0x4] sm:$0xf]
        %v2164 = vld [vmem:[%s15 + $0x8] sm:$0xf]
        %v2165 = vld [vmem:[%s15 + $0xc] sm:$0xf]
        %v2166 = vld [vmem:[%s16] sm:$0x1]
        %v2167 = vmul.f32 %v2153, 0.5
        %v2168 = vpack.c.bf16 %v2167, %v2167
        %v2173 = vunpack.c.l.b16 %v2154
        %v2174 = vunpack.c.l.b16 %v2155
        %v2175 = vunpack.c.l.b16 %v2156
        %v2176 = vunpack.c.l.b16 %v2157
        %v2177 = vpack.c.b16 %v2174, %v2173
        %v2178 = vpack.c.b16 %v2176, %v2175
        %v2182 = vsel %vm909, %v2168, 0
        %2184 = vmatprep.subr.bf16.mxu0 0
        %2185 = vmatpush1.bf16.msra.mxu0 %v2177
        %2186 = vmatprep.subr.bf16.mxu0 0
        %2187 = vmatpush1.bf16.msra.mxu0 %v2178
        %2188 = vmatprep.subr.bf16.mxu0 0
        %2189 = vmatpush1.bf16.msra.mxu0 0
        %2190 = vmatprep.subr.bf16.mxu0 0
        %2191 = vmatpush1.bf16.msra.mxu0 0
        %2192 = vmatprep.subr.bf16.mxu0 0
        %2193 = vmatpush1.bf16.msra.mxu0 0
        %2194 = vmatprep.subr.bf16.mxu0 0
        %2195 = vmatpush1.bf16.msra.mxu0 0
        %2196 = vmatprep.subr.bf16.mxu0 0
        %2197 = vmatpush1.bf16.msra.mxu0 0
        %2198 = vmatprep.subr.bf16.mxu0 0
        %2199 = vmatpush1.bf16.msra.mxu0 0
        %2200 = vmatprep.subr.bf16.mxu0 0
        %2201 = vmatpush1.bf16.msra.mxu0 0
        %2202 = vmatprep.subr.bf16.mxu0 0
        %2203 = vmatpush1.bf16.msra.mxu0 0
        %2204 = vmatprep.subr.bf16.mxu0 0
        %2205 = vmatpush1.bf16.msra.mxu0 0
        %2206 = vmatprep.subr.bf16.mxu0 0
        %2207 = vmatpush1.bf16.msra.mxu0 0
        %2208 = vmatprep.subr.bf16.mxu0 0
        %2209 = vmatpush1.bf16.msra.mxu0 0
        %2210 = vmatprep.subr.bf16.mxu0 0
        %2211 = vmatpush1.bf16.msra.mxu0 0
        %2212 = vmatprep.subr.bf16.mxu0 0
        %2213 = vmatpush1.bf16.msra.mxu0 0
        %2214 = vmatprep.subr.bf16.mxu0 0
        %2215 = vmatpush1.bf16.msra.mxu0 0
        %2216 = vmatprep.mubr.bf16.mxu0 0
        %2217 = vmatmul.mubr.bf16.gmra.mrb[0].mxu0 %v2182
        %v2218 = vpop.f32.mrb[0].mxu0
        %v2219 = vadd.f32 0.0, %v2218
        %v2220 = vpop.f32.mrb[0].mxu0
        %v2221 = vpop.f32.mrb[0].mxu0
        %v2222 = vpop.f32.mrb[0].mxu0
        %2223 = vdwg.mxu0
        %v2224 = vpack.c.bf16 %v906, %v906
        %v2227 = vunpack.c.l.b16 %v2158
        %v2228 = vunpack.c.l.b16 %v2159
        %v2229 = vpack.c.b16 %v2228, %v2227
        %vm2231 = vcmask 130048
        %v2233 = vsel %vm2231, %v2224, 0
        %2235 = vmatprep.subr.bf16.mxu0 0
        %2236 = vmatpush1.bf16.msra.mxu0 %v2229
        %2237 = vmatprep.subr.bf16.mxu0 0
        %2238 = vmatpush1.bf16.msra.mxu0 0
        %2239 = vmatprep.subr.bf16.mxu0 0
        %2240 = vmatpush1.bf16.msra.mxu0 0
        %2241 = vmatprep.subr.bf16.mxu0 0
        %2242 = vmatpush1.bf16.msra.mxu0 0
        %2243 = vmatprep.subr.bf16.mxu0 0
        %2244 = vmatpush1.bf16.msra.mxu0 0
        %2245 = vmatprep.subr.bf16.mxu0 0
        %2246 = vmatpush1.bf16.msra.mxu0 0
        %2247 = vmatprep.subr.bf16.mxu0 0
        %2248 = vmatpush1.bf16.msra.mxu0 0
        %2249 = vmatprep.subr.bf16.mxu0 0
        %2250 = vmatpush1.bf16.msra.mxu0 0
        %2251 = vmatprep.subr.bf16.mxu0 0
        %2252 = vmatpush1.bf16.msra.mxu0 0
        %2253 = vmatprep.subr.bf16.mxu0 0
        %2254 = vmatpush1.bf16.msra.mxu0 0
        %2255 = vmatprep.subr.bf16.mxu0 0
        %2256 = vmatpush1.bf16.msra.mxu0 0
        %2257 = vmatprep.subr.bf16.mxu0 0
        %2258 = vmatpush1.bf16.msra.mxu0 0
        %2259 = vmatprep.subr.bf16.mxu0 0
        %2260 = vmatpush1.bf16.msra.mxu0 0
        %2261 = vmatprep.subr.bf16.mxu0 0
        %2262 = vmatpush1.bf16.msra.mxu0 0
        %2263 = vmatprep.subr.bf16.mxu0 0
        %2264 = vmatpush1.bf16.msra.mxu0 0
        %2265 = vmatprep.subr.bf16.mxu0 0
        %2266 = vmatpush1.bf16.msra.mxu0 0
        %2267 = vmatprep.mubr.bf16.mxu0 0
        %2268 = vmatmul.mubr.bf16.gmra.mrb[0].mxu0 %v2233
        %v2269 = vpop.f32.mrb[0].mxu0
        %v2270 = vadd.f32 0.0, %v2269
        %v2271 = vpop.f32.mrb[0].mxu0
        %v2272 = vpop.f32.mrb[0].mxu0
        %v2273 = vpop.f32.mrb[0].mxu0
        %2274 = vdwg.mxu0
        %v2277 = vunpack.c.l.b16 %v2160
        %v2278 = vunpack.c.l.b16 %v2161
        %v2279 = vpack.c.b16 %v2278, %v2277
        %2281 = vmatprep.subr.bf16.mxu0 0
        %2282 = vmatpush1.bf16.msra.mxu0 %v2279
        %2283 = vmatprep.subr.bf16.mxu0 0
        %2284 = vmatpush1.bf16.msra.mxu0 0
        %2285 = vmatprep.subr.bf16.mxu0 0
        %2286 = vmatpush1.bf16.msra.mxu0 0
        %2287 = vmatprep.subr.bf16.mxu0 0
        %2288 = vmatpush1.bf16.msra.mxu0 0
        %2289 = vmatprep.subr.bf16.mxu0 0
        %2290 = vmatpush1.bf16.msra.mxu0 0
        %2291 = vmatprep.subr.bf16.mxu0 0
        %2292 = vmatpush1.bf16.msra.mxu0 0
        %2293 = vmatprep.subr.bf16.mxu0 0
        %2294 = vmatpush1.bf16.msra.mxu0 0
        %2295 = vmatprep.subr.bf16.mxu0 0
        %2296 = vmatpush1.bf16.msra.mxu0 0
        %2297 = vmatprep.subr.bf16.mxu0 0
        %2298 = vmatpush1.bf16.msra.mxu0 0
        %2299 = vmatprep.subr.bf16.mxu0 0
        %2300 = vmatpush1.bf16.msra.mxu0 0
        %2301 = vmatprep.subr.bf16.mxu0 0
        %2302 = vmatpush1.bf16.msra.mxu0 0
        %2303 = vmatprep.subr.bf16.mxu0 0
        %2304 = vmatpush1.bf16.msra.mxu0 0
        %2305 = vmatprep.subr.bf16.mxu0 0
        %2306 = vmatpush1.bf16.msra.mxu0 0
        %2307 = vmatprep.subr.bf16.mxu0 0
        %2308 = vmatpush1.bf16.msra.mxu0 0
        %2309 = vmatprep.subr.bf16.mxu0 0
        %2310 = vmatpush1.bf16.msra.mxu0 0
        %2311 = vmatprep.subr.bf16.mxu0 0
        %2312 = vmatpush1.bf16.msra.mxu0 0
        %2313 = vmatprep.mubr.bf16.mxu0 0
        %2314 = vmatmul.mubr.bf16.gmra.mrb[0].mxu0 %v2233
        %v2315 = vpop.f32.mrb[0].mxu0
        %v2316 = vadd.f32 0.0, %v2315
        %v2317 = vpop.f32.mrb[0].mxu0
        %v2318 = vpop.f32.mrb[0].mxu0
        %v2319 = vpop.f32.mrb[0].mxu0
        %2320 = vdwg.mxu0
        %v2321 = vpack.c.bf16 %v2219, %v2219
        %v2322 = vpack.c.bf16 %v2270, %v2270
        %v2323 = vpack.c.bf16 %v2316, %v2316
        %v2325 = vsel %vm1138, %v2321, 0
        %v2328 = vsel %vm1138, %v2322, 0
        %2330 = vmatprep.subr.bf16.mxu0 0
        %2331 = vmatpush1.bf16.xpose.msra.mxu0 %v2328
        %2332 = vmatprep.subr.bf16.mxu0 0
        %2333 = vmatpush1.bf16.xpose.msra.mxu0 0
        %2334 = vmatprep.subr.bf16.mxu0 0
        %2335 = vmatpush1.bf16.xpose.msra.mxu0 0
        %2336 = vmatprep.subr.bf16.mxu0 0
        %2337 = vmatpush1.bf16.xpose.msra.mxu0 0
        %2338 = vmatprep.subr.bf16.mxu0 0
        %2339 = vmatpush1.bf16.xpose.msra.mxu0 0
        %2340 = vmatprep.subr.bf16.mxu0 0
        %2341 = vmatpush1.bf16.xpose.msra.mxu0 0
        %2342 = vmatprep.subr.bf16.mxu0 0
        %2343 = vmatpush1.bf16.xpose.msra.mxu0 0
        %2344 = vmatprep.subr.bf16.mxu0 0
        %2345 = vmatpush1.bf16.xpose.msra.mxu0 0
        %2346 = vmatprep.subr.bf16.mxu0 0
        %2347 = vmatpush1.bf16.xpose.msra.mxu0 0
        %2348 = vmatprep.subr.bf16.mxu0 0
        %2349 = vmatpush1.bf16.xpose.msra.mxu0 0
        %2350 = vmatprep.subr.bf16.mxu0 0
        %2351 = vmatpush1.bf16.xpose.msra.mxu0 0
        %2352 = vmatprep.subr.bf16.mxu0 0
        %2353 = vmatpush1.bf16.xpose.msra.mxu0 0
        %2354 = vmatprep.subr.bf16.mxu0 0
        %2355 = vmatpush1.bf16.xpose.msra.mxu0 0
        %2356 = vmatprep.subr.bf16.mxu0 0
        %2357 = vmatpush1.bf16.xpose.msra.mxu0 0
        %2358 = vmatprep.subr.bf16.mxu0 0
        %2359 = vmatpush1.bf16.xpose.msra.mxu0 0
        %2360 = vmatprep.subr.bf16.mxu0 0
        %2361 = vmatpush1.bf16.xpose.msra.mxu0 0
        %2362 = vmatprep.mubr.bf16.mxu0 0
        %2363 = vmatmul.mubr.bf16.gmra.mrb[0].mxu0 %v2325
        %v2364 = vpop.f32.mrb[0].mxu0
        %v2365 = vadd.f32 0.0, %v2364
        %v2366 = vpop.f32.mrb[0].mxu0
        %v2367 = vpop.f32.mrb[0].mxu0
        %v2368 = vpop.f32.mrb[0].mxu0
        %2369 = vdwg.mxu0
        %v2370 = vsel %vm1185, %v2365, -inf
        %2371 = vmax.xlane.f32.xlu0 %v2370
        %v2372 = vpop.xlane.xlu0 %2371
        %v2373 = vsub.f32 %v2365, %v2372
        %v2374 = vmul.f32 %v2373, 1.442695
        %v2375 = vpow.pop %v2374
        %v2376 = vsel %vm1185, %v2375, 0.0
        %2377 = vadd.xlane.f32.xlu0 %v2376
        %v2378 = vpop.xlane.xlu0 %2377
        %v2379 = vpack.c.bf16 %v2375, %v2375
        %v2381 = vsel %vm1185, %v2379, 0
        %v2384 = vsel %vm1199, %v2323, 0
        %2386 = vmatprep.subr.bf16.mxu0 0
        %2387 = vmatpush1.bf16.msra.mxu0 %v2384
        %2388 = vmatprep.subr.bf16.mxu0 0
        %2389 = vmatpush1.bf16.msra.mxu0 0
        %2390 = vmatprep.subr.bf16.mxu0 0
        %2391 = vmatpush1.bf16.msra.mxu0 0
        %2392 = vmatprep.subr.bf16.mxu0 0
        %2393 = vmatpush1.bf16.msra.mxu0 0
        %2394 = vmatprep.subr.bf16.mxu0 0
        %2395 = vmatpush1.bf16.msra.mxu0 0
        %2396 = vmatprep.subr.bf16.mxu0 0
        %2397 = vmatpush1.bf16.msra.mxu0 0
        %2398 = vmatprep.subr.bf16.mxu0 0
        %2399 = vmatpush1.bf16.msra.mxu0 0
        %2400 = vmatprep.subr.bf16.mxu0 0
        %2401 = vmatpush1.bf16.msra.mxu0 0
        %2402 = vmatprep.subr.bf16.mxu0 0
        %2403 = vmatpush1.bf16.msra.mxu0 0
        %2404 = vmatprep.subr.bf16.mxu0 0
        %2405 = vmatpush1.bf16.msra.mxu0 0
        %2406 = vmatprep.subr.bf16.mxu0 0
        %2407 = vmatpush1.bf16.msra.mxu0 0
        %2408 = vmatprep.subr.bf16.mxu0 0
        %2409 = vmatpush1.bf16.msra.mxu0 0
        %2410 = vmatprep.subr.bf16.mxu0 0
        %2411 = vmatpush1.bf16.msra.mxu0 0
        %2412 = vmatprep.subr.bf16.mxu0 0
        %2413 = vmatpush1.bf16.msra.mxu0 0
        %2414 = vmatprep.subr.bf16.mxu0 0
        %2415 = vmatpush1.bf16.msra.mxu0 0
        %2416 = vmatprep.subr.bf16.mxu0 0
        %2417 = vmatpush1.bf16.msra.mxu0 0
        %2418 = vmatprep.mubr.bf16.mxu0 0
        %2419 = vmatmul.mubr.bf16.gmra.mrb[0].mxu0 %v2381
        %v2420 = vpop.f32.mrb[0].mxu0
        %v2421 = vadd.f32 0.0, %v2420
        %v2422 = vpop.f32.mrb[0].mxu0
        %v2423 = vpop.f32.mrb[0].mxu0
        %v2424 = vpop.f32.mrb[0].mxu0
        %2425 = vdwg.mxu0
        %v2426 = vrcp.pop %v2378
        %v2427 = vmul.f32 %v2421, %v2426
        %2428 = vst.msk [vmem:[#allocation2] sm:$0xff] %vm1138, %v2427
        %2430 = vrot.lane.b32.xlu0 %v2321, 124
        %v2431 = vpop.permute.xlu0 %2430
        %2433 = vrot.lane.b32.xlu0 %v2322, 124
        %v2434 = vpop.permute.xlu0 %2433
        %v2436 = vsel %vm1138, %v2431, 0
        %v2439 = vsel %vm1138, %v2434, 0
        %2441 = vmatprep.subr.bf16.mxu0 0
        %2442 = vmatpush1.bf16.xpose.msra.mxu0 %v2439
        %2443 = vmatprep.subr.bf16.mxu0 0
        %2444 = vmatpush1.bf16.xpose.msra.mxu0 0
        %2445 = vmatprep.subr.bf16.mxu0 0
        %2446 = vmatpush1.bf16.xpose.msra.mxu0 0
        %2447 = vmatprep.subr.bf16.mxu0 0
        %2448 = vmatpush1.bf16.xpose.msra.mxu0 0
        %2449 = vmatprep.subr.bf16.mxu0 0
        %2450 = vmatpush1.bf16.xpose.msra.mxu0 0
        %2451 = vmatprep.subr.bf16.mxu0 0
        %2452 = vmatpush1.bf16.xpose.msra.mxu0 0
        %2453 = vmatprep.subr.bf16.mxu0 0
        %2454 = vmatpush1.bf16.xpose.msra.mxu0 0
        %2455 = vmatprep.subr.bf16.mxu0 0
        %2456 = vmatpush1.bf16.xpose.msra.mxu0 0
        %2457 = vmatprep.subr.bf16.mxu0 0
        %2458 = vmatpush1.bf16.xpose.msra.mxu0 0
        %2459 = vmatprep.subr.bf16.mxu0 0
        %2460 = vmatpush1.bf16.xpose.msra.mxu0 0
        %2461 = vmatprep.subr.bf16.mxu0 0
        %2462 = vmatpush1.bf16.xpose.msra.mxu0 0
        %2463 = vmatprep.subr.bf16.mxu0 0
        %2464 = vmatpush1.bf16.xpose.msra.mxu0 0
        %2465 = vmatprep.subr.bf16.mxu0 0
        %2466 = vmatpush1.bf16.xpose.msra.mxu0 0
        %2467 = vmatprep.subr.bf16.mxu0 0
        %2468 = vmatpush1.bf16.xpose.msra.mxu0 0
        %2469 = vmatprep.subr.bf16.mxu0 0
        %2470 = vmatpush1.bf16.xpose.msra.mxu0 0
        %2471 = vmatprep.subr.bf16.mxu0 0
        %2472 = vmatpush1.bf16.xpose.msra.mxu0 0
        %2473 = vmatprep.mubr.bf16.mxu0 0
        %2474 = vmatmul.mubr.bf16.gmra.mrb[0].mxu0 %v2436
        %v2475 = vpop.f32.mrb[0].mxu0
        %v2476 = vadd.f32 0.0, %v2475
        %v2477 = vpop.f32.mrb[0].mxu0
        %v2478 = vpop.f32.mrb[0].mxu0
        %v2479 = vpop.f32.mrb[0].mxu0
        %2480 = vdwg.mxu0
        %v2481 = vsel %vm1185, %v2476, -inf
        %2482 = vmax.xlane.f32.xlu0 %v2481
        %v2483 = vpop.xlane.xlu0 %2482
        %v2484 = vsub.f32 %v2476, %v2483
        %v2485 = vmul.f32 %v2484, 1.442695
        %v2486 = vpow.pop %v2485
        %v2487 = vsel %vm1185, %v2486, 0.0
        %2488 = vadd.xlane.f32.xlu0 %v2487
        %v2489 = vpop.xlane.xlu0 %2488
        %v2490 = vpack.c.bf16 %v2486, %v2486
        %2492 = vrot.lane.b32.xlu0 %v2323, 124
        %v2493 = vpop.permute.xlu0 %2492
        %v2495 = vsel %vm1185, %v2490, 0
        %v2498 = vsel %vm1199, %v2493, 0
        %2500 = vmatprep.subr.bf16.mxu0 0
        %2501 = vmatpush1.bf16.msra.mxu0 %v2498
        %2502 = vmatprep.subr.bf16.mxu0 0
        %2503 = vmatpush1.bf16.msra.mxu0 0
        %2504 = vmatprep.subr.bf16.mxu0 0
        %2505 = vmatpush1.bf16.msra.mxu0 0
        %2506 = vmatprep.subr.bf16.mxu0 0
        %2507 = vmatpush1.bf16.msra.mxu0 0
        %2508 = vmatprep.subr.bf16.mxu0 0
        %2509 = vmatpush1.bf16.msra.mxu0 0
        %2510 = vmatprep.subr.bf16.mxu0 0
        %2511 = vmatpush1.bf16.msra.mxu0 0
        %2512 = vmatprep.subr.bf16.mxu0 0
        %2513 = vmatpush1.bf16.msra.mxu0 0
        %2514 = vmatprep.subr.bf16.mxu0 0
        %2515 = vmatpush1.bf16.msra.mxu0 0
        %2516 = vmatprep.subr.bf16.mxu0 0
        %2517 = vmatpush1.bf16.msra.mxu0 0
        %2518 = vmatprep.subr.bf16.mxu0 0
        %2519 = vmatpush1.bf16.msra.mxu0 0
        %2520 = vmatprep.subr.bf16.mxu0 0
        %2521 = vmatpush1.bf16.msra.mxu0 0
        %2522 = vmatprep.subr.bf16.mxu0 0
        %2523 = vmatpush1.bf16.msra.mxu0 0
        %2524 = vmatprep.subr.bf16.mxu0 0
        %2525 = vmatpush1.bf16.msra.mxu0 0
        %2526 = vmatprep.subr.bf16.mxu0 0
        %2527 = vmatpush1.bf16.msra.mxu0 0
        %2528 = vmatprep.subr.bf16.mxu0 0
        %2529 = vmatpush1.bf16.msra.mxu0 0
        %2530 = vmatprep.subr.bf16.mxu0 0
        %2531 = vmatpush1.bf16.msra.mxu0 0
        %2532 = vmatprep.mubr.bf16.mxu0 0
        %2533 = vmatmul.mubr.bf16.gmra.mrb[0].mxu0 %v2495
        %v2534 = vpop.f32.mrb[0].mxu0
        %v2535 = vadd.f32 0.0, %v2534
        %v2536 = vpop.f32.mrb[0].mxu0
        %v2537 = vpop.f32.mrb[0].mxu0
        %v2538 = vpop.f32.mrb[0].mxu0
        %2539 = vdwg.mxu0
        %v2540 = vrcp.pop %v2489
        %v2541 = vmul.f32 %v2535, %v2540
        %2543 = vrot.lane.b32.xlu0 %v2541, 4
        %v2544 = vpop.permute.xlu0 %2543
        %2546 = vst.msk [vmem:[#allocation2] sm:$0xff] %vm1363, %v2544
        %2547 = vrot.lane.b32.xlu0 %v2321, 120
        %v2548 = vpop.permute.xlu0 %2547
        %2549 = vrot.lane.b32.xlu0 %v2322, 120
        %v2550 = vpop.permute.xlu0 %2549
        %v2552 = vsel %vm1138, %v2548, 0
        %v2555 = vsel %vm1138, %v2550, 0
        %2557 = vmatprep.subr.bf16.mxu0 0
        %2558 = vmatpush1.bf16.xpose.msra.mxu0 %v2555
        %2559 = vmatprep.subr.bf16.mxu0 0
        %2560 = vmatpush1.bf16.xpose.msra.mxu0 0
        %2561 = vmatprep.subr.bf16.mxu0 0
        %2562 = vmatpush1.bf16.xpose.msra.mxu0 0
        %2563 = vmatprep.subr.bf16.mxu0 0
        %2564 = vmatpush1.bf16.xpose.msra.mxu0 0
        %2565 = vmatprep.subr.bf16.mxu0 0
        %2566 = vmatpush1.bf16.xpose.msra.mxu0 0
        %2567 = vmatprep.subr.bf16.mxu0 0
        %2568 = vmatpush1.bf16.xpose.msra.mxu0 0
        %2569 = vmatprep.subr.bf16.mxu0 0
        %2570 = vmatpush1.bf16.xpose.msra.mxu0 0
        %2571 = vmatprep.subr.bf16.mxu0 0
        %2572 = vmatpush1.bf16.xpose.msra.mxu0 0
        %2573 = vmatprep.subr.bf16.mxu0 0
        %2574 = vmatpush1.bf16.xpose.msra.mxu0 0
        %2575 = vmatprep.subr.bf16.mxu0 0
        %2576 = vmatpush1.bf16.xpose.msra.mxu0 0
        %2577 = vmatprep.subr.bf16.mxu0 0
        %2578 = vmatpush1.bf16.xpose.msra.mxu0 0
        %2579 = vmatprep.subr.bf16.mxu0 0
        %2580 = vmatpush1.bf16.xpose.msra.mxu0 0
        %2581 = vmatprep.subr.bf16.mxu0 0
        %2582 = vmatpush1.bf16.xpose.msra.mxu0 0
        %2583 = vmatprep.subr.bf16.mxu0 0
        %2584 = vmatpush1.bf16.xpose.msra.mxu0 0
        %2585 = vmatprep.subr.bf16.mxu0 0
        %2586 = vmatpush1.bf16.xpose.msra.mxu0 0
        %2587 = vmatprep.subr.bf16.mxu0 0
        %2588 = vmatpush1.bf16.xpose.msra.mxu0 0
        %2589 = vmatprep.mubr.bf16.mxu0 0
        %2590 = vmatmul.mubr.bf16.gmra.mrb[0].mxu0 %v2552
        %v2591 = vpop.f32.mrb[0].mxu0
        %v2592 = vadd.f32 0.0, %v2591
        %v2593 = vpop.f32.mrb[0].mxu0
        %v2594 = vpop.f32.mrb[0].mxu0
        %v2595 = vpop.f32.mrb[0].mxu0
        %2596 = vdwg.mxu0
        %v2597 = vsel %vm1185, %v2592, -inf
        %2598 = vmax.xlane.f32.xlu0 %v2597
        %v2599 = vpop.xlane.xlu0 %2598
        %v2600 = vsub.f32 %v2592, %v2599
        %v2601 = vmul.f32 %v2600, 1.442695
        %v2602 = vpow.pop %v2601
        %v2603 = vsel %vm1185, %v2602, 0.0
        %2604 = vadd.xlane.f32.xlu0 %v2603
        %v2605 = vpop.xlane.xlu0 %2604
        %v2606 = vpack.c.bf16 %v2602, %v2602
        %2607 = vrot.lane.b32.xlu0 %v2323, 120
        %v2608 = vpop.permute.xlu0 %2607
        %v2610 = vsel %vm1185, %v2606, 0
        %v2613 = vsel %vm1199, %v2608, 0
        %2615 = vmatprep.subr.bf16.mxu0 0
        %2616 = vmatpush1.bf16.msra.mxu0 %v2613
        %2617 = vmatprep.subr.bf16.mxu0 0
        %2618 = vmatpush1.bf16.msra.mxu0 0
        %2619 = vmatprep.subr.bf16.mxu0 0
        %2620 = vmatpush1.bf16.msra.mxu0 0
        %2621 = vmatprep.subr.bf16.mxu0 0
        %2622 = vmatpush1.bf16.msra.mxu0 0
        %2623 = vmatprep.subr.bf16.mxu0 0
        %2624 = vmatpush1.bf16.msra.mxu0 0
        %2625 = vmatprep.subr.bf16.mxu0 0
        %2626 = vmatpush1.bf16.msra.mxu0 0
        %2627 = vmatprep.subr.bf16.mxu0 0
        %2628 = vmatpush1.bf16.msra.mxu0 0
        %2629 = vmatprep.subr.bf16.mxu0 0
        %2630 = vmatpush1.bf16.msra.mxu0 0
        %2631 = vmatprep.subr.bf16.mxu0 0
        %2632 = vmatpush1.bf16.msra.mxu0 0
        %2633 = vmatprep.subr.bf16.mxu0 0
        %2634 = vmatpush1.bf16.msra.mxu0 0
        %2635 = vmatprep.subr.bf16.mxu0 0
        %2636 = vmatpush1.bf16.msra.mxu0 0
        %2637 = vmatprep.subr.bf16.mxu0 0
        %2638 = vmatpush1.bf16.msra.mxu0 0
        %2639 = vmatprep.subr.bf16.mxu0 0
        %2640 = vmatpush1.bf16.msra.mxu0 0
        %2641 = vmatprep.subr.bf16.mxu0 0
        %2642 = vmatpush1.bf16.msra.mxu0 0
        %2643 = vmatprep.subr.bf16.mxu0 0
        %2644 = vmatpush1.bf16.msra.mxu0 0
        %2645 = vmatprep.subr.bf16.mxu0 0
        %2646 = vmatpush1.bf16.msra.mxu0 0
        %2647 = vmatprep.mubr.bf16.mxu0 0
        %2648 = vmatmul.mubr.bf16.gmra.mrb[0].mxu0 %v2610
        %v2649 = vpop.f32.mrb[0].mxu0
        %v2650 = vadd.f32 0.0, %v2649
        %v2651 = vpop.f32.mrb[0].mxu0
        %v2652 = vpop.f32.mrb[0].mxu0
        %v2653 = vpop.f32.mrb[0].mxu0
        %2654 = vdwg.mxu0
        %v2655 = vrcp.pop %v2605
        %v2656 = vmul.f32 %v2650, %v2655
        %2658 = vrot.lane.b32.xlu0 %v2656, 8
        %v2659 = vpop.permute.xlu0 %2658
        %2661 = vst.msk [vmem:[#allocation2] sm:$0xff] %vm1479, %v2659
        %2662 = vrot.lane.b32.xlu0 %v2321, 116
        %v2663 = vpop.permute.xlu0 %2662
        %2664 = vrot.lane.b32.xlu0 %v2322, 116
        %v2665 = vpop.permute.xlu0 %2664
        %v2667 = vsel %vm1138, %v2663, 0
        %v2670 = vsel %vm1138, %v2665, 0
        %2672 = vmatprep.subr.bf16.mxu0 0
        %2673 = vmatpush1.bf16.xpose.msra.mxu0 %v2670
        %2674 = vmatprep.subr.bf16.mxu0 0
        %2675 = vmatpush1.bf16.xpose.msra.mxu0 0
        %2676 = vmatprep.subr.bf16.mxu0 0
        %2677 = vmatpush1.bf16.xpose.msra.mxu0 0
        %2678 = vmatprep.subr.bf16.mxu0 0
        %2679 = vmatpush1.bf16.xpose.msra.mxu0 0
        %2680 = vmatprep.subr.bf16.mxu0 0
        %2681 = vmatpush1.bf16.xpose.msra.mxu0 0
        %2682 = vmatprep.subr.bf16.mxu0 0
        %2683 = vmatpush1.bf16.xpose.msra.mxu0 0
        %2684 = vmatprep.subr.bf16.mxu0 0
        %2685 = vmatpush1.bf16.xpose.msra.mxu0 0
        %2686 = vmatprep.subr.bf16.mxu0 0
        %2687 = vmatpush1.bf16.xpose.msra.mxu0 0
        %2688 = vmatprep.subr.bf16.mxu0 0
        %2689 = vmatpush1.bf16.xpose.msra.mxu0 0
        %2690 = vmatprep.subr.bf16.mxu0 0
        %2691 = vmatpush1.bf16.xpose.msra.mxu0 0
        %2692 = vmatprep.subr.bf16.mxu0 0
        %2693 = vmatpush1.bf16.xpose.msra.mxu0 0
        %2694 = vmatprep.subr.bf16.mxu0 0
        %2695 = vmatpush1.bf16.xpose.msra.mxu0 0
        %2696 = vmatprep.subr.bf16.mxu0 0
        %2697 = vmatpush1.bf16.xpose.msra.mxu0 0
        %2698 = vmatprep.subr.bf16.mxu0 0
        %2699 = vmatpush1.bf16.xpose.msra.mxu0 0
        %2700 = vmatprep.subr.bf16.mxu0 0
        %2701 = vmatpush1.bf16.xpose.msra.mxu0 0
        %2702 = vmatprep.subr.bf16.mxu0 0
        %2703 = vmatpush1.bf16.xpose.msra.mxu0 0
        %2704 = vmatprep.mubr.bf16.mxu0 0
        %2705 = vmatmul.mubr.bf16.gmra.mrb[0].mxu0 %v2667
        %v2706 = vpop.f32.mrb[0].mxu0
        %v2707 = vadd.f32 0.0, %v2706
        %v2708 = vpop.f32.mrb[0].mxu0
        %v2709 = vpop.f32.mrb[0].mxu0
        %v2710 = vpop.f32.mrb[0].mxu0
        %2711 = vdwg.mxu0
        %v2712 = vsel %vm1185, %v2707, -inf
        %2713 = vmax.xlane.f32.xlu0 %v2712
        %v2714 = vpop.xlane.xlu0 %2713
        %v2715 = vsub.f32 %v2707, %v2714
        %v2716 = vmul.f32 %v2715, 1.442695
        %v2717 = vpow.pop %v2716
        %v2718 = vsel %vm1185, %v2717, 0.0
        %2719 = vadd.xlane.f32.xlu0 %v2718
        %v2720 = vpop.xlane.xlu0 %2719
        %v2721 = vpack.c.bf16 %v2717, %v2717
        %2722 = vrot.lane.b32.xlu0 %v2323, 116
        %v2723 = vpop.permute.xlu0 %2722
        %v2725 = vsel %vm1185, %v2721, 0
        %v2728 = vsel %vm1199, %v2723, 0
        %2730 = vmatprep.subr.bf16.mxu0 0
        %2731 = vmatpush1.bf16.msra.mxu0 %v2728
        %2732 = vmatprep.subr.bf16.mxu0 0
        %2733 = vmatpush1.bf16.msra.mxu0 0
        %2734 = vmatprep.subr.bf16.mxu0 0
        %2735 = vmatpush1.bf16.msra.mxu0 0
        %2736 = vmatprep.subr.bf16.mxu0 0
        %2737 = vmatpush1.bf16.msra.mxu0 0
        %2738 = vmatprep.subr.bf16.mxu0 0
        %2739 = vmatpush1.bf16.msra.mxu0 0
        %2740 = vmatprep.subr.bf16.mxu0 0
        %2741 = vmatpush1.bf16.msra.mxu0 0
        %2742 = vmatprep.subr.bf16.mxu0 0
        %2743 = vmatpush1.bf16.msra.mxu0 0
        %2744 = vmatprep.subr.bf16.mxu0 0
        %2745 = vmatpush1.bf16.msra.mxu0 0
        %2746 = vmatprep.subr.bf16.mxu0 0
        %2747 = vmatpush1.bf16.msra.mxu0 0
        %2748 = vmatprep.subr.bf16.mxu0 0
        %2749 = vmatpush1.bf16.msra.mxu0 0
        %2750 = vmatprep.subr.bf16.mxu0 0
        %2751 = vmatpush1.bf16.msra.mxu0 0
        %2752 = vmatprep.subr.bf16.mxu0 0
        %2753 = vmatpush1.bf16.msra.mxu0 0
        %2754 = vmatprep.subr.bf16.mxu0 0
        %2755 = vmatpush1.bf16.msra.mxu0 0
        %2756 = vmatprep.subr.bf16.mxu0 0
        %2757 = vmatpush1.bf16.msra.mxu0 0
        %2758 = vmatprep.subr.bf16.mxu0 0
        %2759 = vmatpush1.bf16.msra.mxu0 0
        %2760 = vmatprep.subr.bf16.mxu0 0
        %2761 = vmatpush1.bf16.msra.mxu0 0
        %2762 = vmatprep.mubr.bf16.mxu0 0
        %2763 = vmatmul.mubr.bf16.gmra.mrb[0].mxu0 %v2725
        %v2764 = vpop.f32.mrb[0].mxu0
        %v2765 = vadd.f32 0.0, %v2764
        %v2766 = vpop.f32.mrb[0].mxu0
        %v2767 = vpop.f32.mrb[0].mxu0
        %v2768 = vpop.f32.mrb[0].mxu0
        %2769 = vdwg.mxu0
        %v2770 = vrcp.pop %v2720
        %v2771 = vmul.f32 %v2765, %v2770
        %2773 = vrot.lane.b32.xlu0 %v2771, 12
        %v2774 = vpop.permute.xlu0 %2773
        %2776 = vst.msk [vmem:[#allocation2] sm:$0xff] %vm1595, %v2774
        %2777 = vrot.lane.b32.xlu0 %v2321, 112
        %v2778 = vpop.permute.xlu0 %2777
        %2779 = vrot.lane.b32.xlu0 %v2322, 112
        %v2780 = vpop.permute.xlu0 %2779
        %v2782 = vsel %vm1138, %v2778, 0
        %v2785 = vsel %vm1138, %v2780, 0
        %2787 = vmatprep.subr.bf16.mxu0 0
        %2788 = vmatpush1.bf16.xpose.msra.mxu0 %v2785
        %2789 = vmatprep.subr.bf16.mxu0 0
        %2790 = vmatpush1.bf16.xpose.msra.mxu0 0
        %2791 = vmatprep.subr.bf16.mxu0 0
        %2792 = vmatpush1.bf16.xpose.msra.mxu0 0
        %2793 = vmatprep.subr.bf16.mxu0 0
        %2794 = vmatpush1.bf16.xpose.msra.mxu0 0
        %2795 = vmatprep.subr.bf16.mxu0 0
        %2796 = vmatpush1.bf16.xpose.msra.mxu0 0
        %2797 = vmatprep.subr.bf16.mxu0 0
        %2798 = vmatpush1.bf16.xpose.msra.mxu0 0
        %2799 = vmatprep.subr.bf16.mxu0 0
        %2800 = vmatpush1.bf16.xpose.msra.mxu0 0
        %2801 = vmatprep.subr.bf16.mxu0 0
        %2802 = vmatpush1.bf16.xpose.msra.mxu0 0
        %2803 = vmatprep.subr.bf16.mxu0 0
        %2804 = vmatpush1.bf16.xpose.msra.mxu0 0
        %2805 = vmatprep.subr.bf16.mxu0 0
        %2806 = vmatpush1.bf16.xpose.msra.mxu0 0
        %2807 = vmatprep.subr.bf16.mxu0 0
        %2808 = vmatpush1.bf16.xpose.msra.mxu0 0
        %2809 = vmatprep.subr.bf16.mxu0 0
        %2810 = vmatpush1.bf16.xpose.msra.mxu0 0
        %2811 = vmatprep.subr.bf16.mxu0 0
        %2812 = vmatpush1.bf16.xpose.msra.mxu0 0
        %2813 = vmatprep.subr.bf16.mxu0 0
        %2814 = vmatpush1.bf16.xpose.msra.mxu0 0
        %2815 = vmatprep.subr.bf16.mxu0 0
        %2816 = vmatpush1.bf16.xpose.msra.mxu0 0
        %2817 = vmatprep.subr.bf16.mxu0 0
        %2818 = vmatpush1.bf16.xpose.msra.mxu0 0
        %2819 = vmatprep.mubr.bf16.mxu0 0
        %2820 = vmatmul.mubr.bf16.gmra.mrb[0].mxu0 %v2782
        %v2821 = vpop.f32.mrb[0].mxu0
        %v2822 = vadd.f32 0.0, %v2821
        %v2823 = vpop.f32.mrb[0].mxu0
        %v2824 = vpop.f32.mrb[0].mxu0
        %v2825 = vpop.f32.mrb[0].mxu0
        %2826 = vdwg.mxu0
        %v2827 = vsel %vm1185, %v2822, -inf
        %2828 = vmax.xlane.f32.xlu0 %v2827
        %v2829 = vpop.xlane.xlu0 %2828
        %v2830 = vsub.f32 %v2822, %v2829
        %v2831 = vmul.f32 %v2830, 1.442695
        %v2832 = vpow.pop %v2831
        %v2833 = vsel %vm1185, %v2832, 0.0
        %2834 = vadd.xlane.f32.xlu0 %v2833
        %v2835 = vpop.xlane.xlu0 %2834
        %v2836 = vpack.c.bf16 %v2832, %v2832
        %2837 = vrot.lane.b32.xlu0 %v2323, 112
        %v2838 = vpop.permute.xlu0 %2837
        %v2840 = vsel %vm1185, %v2836, 0
        %v2843 = vsel %vm1199, %v2838, 0
        %2845 = vmatprep.subr.bf16.mxu0 0
        %2846 = vmatpush1.bf16.msra.mxu0 %v2843
        %2847 = vmatprep.subr.bf16.mxu0 0
        %2848 = vmatpush1.bf16.msra.mxu0 0
        %2849 = vmatprep.subr.bf16.mxu0 0
        %2850 = vmatpush1.bf16.msra.mxu0 0
        %2851 = vmatprep.subr.bf16.mxu0 0
        %2852 = vmatpush1.bf16.msra.mxu0 0
        %2853 = vmatprep.subr.bf16.mxu0 0
        %2854 = vmatpush1.bf16.msra.mxu0 0
        %2855 = vmatprep.subr.bf16.mxu0 0
        %2856 = vmatpush1.bf16.msra.mxu0 0
        %2857 = vmatprep.subr.bf16.mxu0 0
        %2858 = vmatpush1.bf16.msra.mxu0 0
        %2859 = vmatprep.subr.bf16.mxu0 0
        %2860 = vmatpush1.bf16.msra.mxu0 0
        %2861 = vmatprep.subr.bf16.mxu0 0
        %2862 = vmatpush1.bf16.msra.mxu0 0
        %2863 = vmatprep.subr.bf16.mxu0 0
        %2864 = vmatpush1.bf16.msra.mxu0 0
        %2865 = vmatprep.subr.bf16.mxu0 0
        %2866 = vmatpush1.bf16.msra.mxu0 0
        %2867 = vmatprep.subr.bf16.mxu0 0
        %2868 = vmatpush1.bf16.msra.mxu0 0
        %2869 = vmatprep.subr.bf16.mxu0 0
        %2870 = vmatpush1.bf16.msra.mxu0 0
        %2871 = vmatprep.subr.bf16.mxu0 0
        %2872 = vmatpush1.bf16.msra.mxu0 0
        %2873 = vmatprep.subr.bf16.mxu0 0
        %2874 = vmatpush1.bf16.msra.mxu0 0
        %2875 = vmatprep.subr.bf16.mxu0 0
        %2876 = vmatpush1.bf16.msra.mxu0 0
        %2877 = vmatprep.mubr.bf16.mxu0 0
        %2878 = vmatmul.mubr.bf16.gmra.mrb[0].mxu0 %v2840
        %v2879 = vpop.f32.mrb[0].mxu0
        %v2880 = vadd.f32 0.0, %v2879
        %v2881 = vpop.f32.mrb[0].mxu0
        %v2882 = vpop.f32.mrb[0].mxu0
        %v2883 = vpop.f32.mrb[0].mxu0
        %2884 = vdwg.mxu0
        %v2885 = vrcp.pop %v2835
        %v2886 = vmul.f32 %v2880, %v2885
        %2888 = vrot.lane.b32.xlu0 %v2886, 16
        %v2889 = vpop.permute.xlu0 %2888
        %2891 = vst.msk [vmem:[#allocation2] sm:$0xff] %vm1711, %v2889
        %2892 = vrot.lane.b32.xlu0 %v2321, 108
        %v2893 = vpop.permute.xlu0 %2892
        %2894 = vrot.lane.b32.xlu0 %v2322, 108
        %v2895 = vpop.permute.xlu0 %2894
        %v2897 = vsel %vm1138, %v2893, 0
        %v2900 = vsel %vm1138, %v2895, 0
        %2902 = vmatprep.subr.bf16.mxu0 0
        %2903 = vmatpush1.bf16.xpose.msra.mxu0 %v2900
        %2904 = vmatprep.subr.bf16.mxu0 0
        %2905 = vmatpush1.bf16.xpose.msra.mxu0 0
        %2906 = vmatprep.subr.bf16.mxu0 0
        %2907 = vmatpush1.bf16.xpose.msra.mxu0 0
        %2908 = vmatprep.subr.bf16.mxu0 0
        %2909 = vmatpush1.bf16.xpose.msra.mxu0 0
        %2910 = vmatprep.subr.bf16.mxu0 0
        %2911 = vmatpush1.bf16.xpose.msra.mxu0 0
        %2912 = vmatprep.subr.bf16.mxu0 0
        %2913 = vmatpush1.bf16.xpose.msra.mxu0 0
        %2914 = vmatprep.subr.bf16.mxu0 0
        %2915 = vmatpush1.bf16.xpose.msra.mxu0 0
        %2916 = vmatprep.subr.bf16.mxu0 0
        %2917 = vmatpush1.bf16.xpose.msra.mxu0 0
        %2918 = vmatprep.subr.bf16.mxu0 0
        %2919 = vmatpush1.bf16.xpose.msra.mxu0 0
        %2920 = vmatprep.subr.bf16.mxu0 0
        %2921 = vmatpush1.bf16.xpose.msra.mxu0 0
        %2922 = vmatprep.subr.bf16.mxu0 0
        %2923 = vmatpush1.bf16.xpose.msra.mxu0 0
        %2924 = vmatprep.subr.bf16.mxu0 0
        %2925 = vmatpush1.bf16.xpose.msra.mxu0 0
        %2926 = vmatprep.subr.bf16.mxu0 0
        %2927 = vmatpush1.bf16.xpose.msra.mxu0 0
        %2928 = vmatprep.subr.bf16.mxu0 0
        %2929 = vmatpush1.bf16.xpose.msra.mxu0 0
        %2930 = vmatprep.subr.bf16.mxu0 0
        %2931 = vmatpush1.bf16.xpose.msra.mxu0 0
        %2932 = vmatprep.subr.bf16.mxu0 0
        %2933 = vmatpush1.bf16.xpose.msra.mxu0 0
        %2934 = vmatprep.mubr.bf16.mxu0 0
        %2935 = vmatmul.mubr.bf16.gmra.mrb[0].mxu0 %v2897
        %v2936 = vpop.f32.mrb[0].mxu0
        %v2937 = vadd.f32 0.0, %v2936
        %v2938 = vpop.f32.mrb[0].mxu0
        %v2939 = vpop.f32.mrb[0].mxu0
        %v2940 = vpop.f32.mrb[0].mxu0
        %2941 = vdwg.mxu0
        %v2942 = vsel %vm1185, %v2937, -inf
        %2943 = vmax.xlane.f32.xlu0 %v2942
        %v2944 = vpop.xlane.xlu0 %2943
        %v2945 = vsub.f32 %v2937, %v2944
        %v2946 = vmul.f32 %v2945, 1.442695
        %v2947 = vpow.pop %v2946
        %v2948 = vsel %vm1185, %v2947, 0.0
        %2949 = vadd.xlane.f32.xlu0 %v2948
        %v2950 = vpop.xlane.xlu0 %2949
        %v2951 = vpack.c.bf16 %v2947, %v2947
        %2952 = vrot.lane.b32.xlu0 %v2323, 108
        %v2953 = vpop.permute.xlu0 %2952
        %v2955 = vsel %vm1185, %v2951, 0
        %v2958 = vsel %vm1199, %v2953, 0
        %2960 = vmatprep.subr.bf16.mxu0 0
        %2961 = vmatpush1.bf16.msra.mxu0 %v2958
        %2962 = vmatprep.subr.bf16.mxu0 0
        %2963 = vmatpush1.bf16.msra.mxu0 0
        %2964 = vmatprep.subr.bf16.mxu0 0
        %2965 = vmatpush1.bf16.msra.mxu0 0
        %2966 = vmatprep.subr.bf16.mxu0 0
        %2967 = vmatpush1.bf16.msra.mxu0 0
        %2968 = vmatprep.subr.bf16.mxu0 0
        %2969 = vmatpush1.bf16.msra.mxu0 0
        %2970 = vmatprep.subr.bf16.mxu0 0
        %2971 = vmatpush1.bf16.msra.mxu0 0
        %2972 = vmatprep.subr.bf16.mxu0 0
        %2973 = vmatpush1.bf16.msra.mxu0 0
        %2974 = vmatprep.subr.bf16.mxu0 0
        %2975 = vmatpush1.bf16.msra.mxu0 0
        %2976 = vmatprep.subr.bf16.mxu0 0
        %2977 = vmatpush1.bf16.msra.mxu0 0
        %2978 = vmatprep.subr.bf16.mxu0 0
        %2979 = vmatpush1.bf16.msra.mxu0 0
        %2980 = vmatprep.subr.bf16.mxu0 0
        %2981 = vmatpush1.bf16.msra.mxu0 0
        %2982 = vmatprep.subr.bf16.mxu0 0
        %2983 = vmatpush1.bf16.msra.mxu0 0
        %2984 = vmatprep.subr.bf16.mxu0 0
        %2985 = vmatpush1.bf16.msra.mxu0 0
        %2986 = vmatprep.subr.bf16.mxu0 0
        %2987 = vmatpush1.bf16.msra.mxu0 0
        %2988 = vmatprep.subr.bf16.mxu0 0
        %2989 = vmatpush1.bf16.msra.mxu0 0
        %2990 = vmatprep.subr.bf16.mxu0 0
        %2991 = vmatpush1.bf16.msra.mxu0 0
        %2992 = vmatprep.mubr.bf16.mxu0 0
        %2993 = vmatmul.mubr.bf16.gmra.mrb[0].mxu0 %v2955
        %v2994 = vpop.f32.mrb[0].mxu0
        %v2995 = vadd.f32 0.0, %v2994
        %v2996 = vpop.f32.mrb[0].mxu0
        %v2997 = vpop.f32.mrb[0].mxu0
        %v2998 = vpop.f32.mrb[0].mxu0
        %2999 = vdwg.mxu0
        %v3000 = vrcp.pop %v2950
        %v3001 = vmul.f32 %v2995, %v3000
        %3003 = vrot.lane.b32.xlu0 %v3001, 20
        %v3004 = vpop.permute.xlu0 %3003
        %3006 = vst.msk [vmem:[#allocation2] sm:$0xff] %vm1827, %v3004
        %3007 = vrot.lane.b32.xlu0 %v2321, 104
        %v3008 = vpop.permute.xlu0 %3007
        %3009 = vrot.lane.b32.xlu0 %v2322, 104
        %v3010 = vpop.permute.xlu0 %3009
        %v3012 = vsel %vm1138, %v3008, 0
        %v3015 = vsel %vm1138, %v3010, 0
        %3017 = vmatprep.subr.bf16.mxu0 0
        %3018 = vmatpush1.bf16.xpose.msra.mxu0 %v3015
        %3019 = vmatprep.subr.bf16.mxu0 0
        %3020 = vmatpush1.bf16.xpose.msra.mxu0 0
        %3021 = vmatprep.subr.bf16.mxu0 0
        %3022 = vmatpush1.bf16.xpose.msra.mxu0 0
        %3023 = vmatprep.subr.bf16.mxu0 0
        %3024 = vmatpush1.bf16.xpose.msra.mxu0 0
        %3025 = vmatprep.subr.bf16.mxu0 0
        %3026 = vmatpush1.bf16.xpose.msra.mxu0 0
        %3027 = vmatprep.subr.bf16.mxu0 0
        %3028 = vmatpush1.bf16.xpose.msra.mxu0 0
        %3029 = vmatprep.subr.bf16.mxu0 0
        %3030 = vmatpush1.bf16.xpose.msra.mxu0 0
        %3031 = vmatprep.subr.bf16.mxu0 0
        %3032 = vmatpush1.bf16.xpose.msra.mxu0 0
        %3033 = vmatprep.subr.bf16.mxu0 0
        %3034 = vmatpush1.bf16.xpose.msra.mxu0 0
        %3035 = vmatprep.subr.bf16.mxu0 0
        %3036 = vmatpush1.bf16.xpose.msra.mxu0 0
        %3037 = vmatprep.subr.bf16.mxu0 0
        %3038 = vmatpush1.bf16.xpose.msra.mxu0 0
        %3039 = vmatprep.subr.bf16.mxu0 0
        %3040 = vmatpush1.bf16.xpose.msra.mxu0 0
        %3041 = vmatprep.subr.bf16.mxu0 0
        %3042 = vmatpush1.bf16.xpose.msra.mxu0 0
        %3043 = vmatprep.subr.bf16.mxu0 0
        %3044 = vmatpush1.bf16.xpose.msra.mxu0 0
        %3045 = vmatprep.subr.bf16.mxu0 0
        %3046 = vmatpush1.bf16.xpose.msra.mxu0 0
        %3047 = vmatprep.subr.bf16.mxu0 0
        %3048 = vmatpush1.bf16.xpose.msra.mxu0 0
        %3049 = vmatprep.mubr.bf16.mxu0 0
        %3050 = vmatmul.mubr.bf16.gmra.mrb[0].mxu0 %v3012
        %v3051 = vpop.f32.mrb[0].mxu0
        %v3052 = vadd.f32 0.0, %v3051
        %v3053 = vpop.f32.mrb[0].mxu0
        %v3054 = vpop.f32.mrb[0].mxu0
        %v3055 = vpop.f32.mrb[0].mxu0
        %3056 = vdwg.mxu0
        %v3057 = vsel %vm1185, %v3052, -inf
        %3058 = vmax.xlane.f32.xlu0 %v3057
        %v3059 = vpop.xlane.xlu0 %3058
        %v3060 = vsub.f32 %v3052, %v3059
        %v3061 = vmul.f32 %v3060, 1.442695
        %v3062 = vpow.pop %v3061
        %v3063 = vsel %vm1185, %v3062, 0.0
        %3064 = vadd.xlane.f32.xlu0 %v3063
        %v3065 = vpop.xlane.xlu0 %3064
        %v3066 = vpack.c.bf16 %v3062, %v3062
        %3067 = vrot.lane.b32.xlu0 %v2323, 104
        %v3068 = vpop.permute.xlu0 %3067
        %v3070 = vsel %vm1185, %v3066, 0
        %v3073 = vsel %vm1199, %v3068, 0
        %3075 = vmatprep.subr.bf16.mxu0 0
        %3076 = vmatpush1.bf16.msra.mxu0 %v3073
        %3077 = vmatprep.subr.bf16.mxu0 0
        %3078 = vmatpush1.bf16.msra.mxu0 0
        %3079 = vmatprep.subr.bf16.mxu0 0
        %3080 = vmatpush1.bf16.msra.mxu0 0
        %3081 = vmatprep.subr.bf16.mxu0 0
        %3082 = vmatpush1.bf16.msra.mxu0 0
        %3083 = vmatprep.subr.bf16.mxu0 0
        %3084 = vmatpush1.bf16.msra.mxu0 0
        %3085 = vmatprep.subr.bf16.mxu0 0
        %3086 = vmatpush1.bf16.msra.mxu0 0
        %3087 = vmatprep.subr.bf16.mxu0 0
        %3088 = vmatpush1.bf16.msra.mxu0 0
        %3089 = vmatprep.subr.bf16.mxu0 0
        %3090 = vmatpush1.bf16.msra.mxu0 0
        %3091 = vmatprep.subr.bf16.mxu0 0
        %3092 = vmatpush1.bf16.msra.mxu0 0
        %3093 = vmatprep.subr.bf16.mxu0 0
        %3094 = vmatpush1.bf16.msra.mxu0 0
        %3095 = vmatprep.subr.bf16.mxu0 0
        %3096 = vmatpush1.bf16.msra.mxu0 0
        %3097 = vmatprep.subr.bf16.mxu0 0
        %3098 = vmatpush1.bf16.msra.mxu0 0
        %3099 = vmatprep.subr.bf16.mxu0 0
        %3100 = vmatpush1.bf16.msra.mxu0 0
        %3101 = vmatprep.subr.bf16.mxu0 0
        %3102 = vmatpush1.bf16.msra.mxu0 0
        %3103 = vmatprep.subr.bf16.mxu0 0
        %3104 = vmatpush1.bf16.msra.mxu0 0
        %3105 = vmatprep.subr.bf16.mxu0 0
        %3106 = vmatpush1.bf16.msra.mxu0 0
        %3107 = vmatprep.mubr.bf16.mxu0 0
        %3108 = vmatmul.mubr.bf16.gmra.mrb[0].mxu0 %v3070
        %v3109 = vpop.f32.mrb[0].mxu0
        %v3110 = vadd.f32 0.0, %v3109
        %v3111 = vpop.f32.mrb[0].mxu0
        %v3112 = vpop.f32.mrb[0].mxu0
        %v3113 = vpop.f32.mrb[0].mxu0
        %3114 = vdwg.mxu0
        %v3115 = vrcp.pop %v3065
        %v3116 = vmul.f32 %v3110, %v3115
        %3118 = vrot.lane.b32.xlu0 %v3116, 24
        %v3119 = vpop.permute.xlu0 %3118
        %3121 = vst.msk [vmem:[#allocation2] sm:$0xff] %vm1943, %v3119
        %3122 = vrot.lane.b32.xlu0 %v2321, 100
        %v3123 = vpop.permute.xlu0 %3122
        %3124 = vrot.lane.b32.xlu0 %v2322, 100
        %v3125 = vpop.permute.xlu0 %3124
        %v3127 = vsel %vm1138, %v3123, 0
        %v3130 = vsel %vm1138, %v3125, 0
        %3132 = vmatprep.subr.bf16.mxu0 0
        %3133 = vmatpush1.bf16.xpose.msra.mxu0 %v3130
        %3134 = vmatprep.subr.bf16.mxu0 0
        %3135 = vmatpush1.bf16.xpose.msra.mxu0 0
        %3136 = vmatprep.subr.bf16.mxu0 0
        %3137 = vmatpush1.bf16.xpose.msra.mxu0 0
        %3138 = vmatprep.subr.bf16.mxu0 0
        %3139 = vmatpush1.bf16.xpose.msra.mxu0 0
        %3140 = vmatprep.subr.bf16.mxu0 0
        %3141 = vmatpush1.bf16.xpose.msra.mxu0 0
        %3142 = vmatprep.subr.bf16.mxu0 0
        %3143 = vmatpush1.bf16.xpose.msra.mxu0 0
        %3144 = vmatprep.subr.bf16.mxu0 0
        %3145 = vmatpush1.bf16.xpose.msra.mxu0 0
        %3146 = vmatprep.subr.bf16.mxu0 0
        %3147 = vmatpush1.bf16.xpose.msra.mxu0 0
        %3148 = vmatprep.subr.bf16.mxu0 0
        %3149 = vmatpush1.bf16.xpose.msra.mxu0 0
        %3150 = vmatprep.subr.bf16.mxu0 0
        %3151 = vmatpush1.bf16.xpose.msra.mxu0 0
        %3152 = vmatprep.subr.bf16.mxu0 0
        %3153 = vmatpush1.bf16.xpose.msra.mxu0 0
        %3154 = vmatprep.subr.bf16.mxu0 0
        %3155 = vmatpush1.bf16.xpose.msra.mxu0 0
        %3156 = vmatprep.subr.bf16.mxu0 0
        %3157 = vmatpush1.bf16.xpose.msra.mxu0 0
        %3158 = vmatprep.subr.bf16.mxu0 0
        %3159 = vmatpush1.bf16.xpose.msra.mxu0 0
        %3160 = vmatprep.subr.bf16.mxu0 0
        %3161 = vmatpush1.bf16.xpose.msra.mxu0 0
        %3162 = vmatprep.subr.bf16.mxu0 0
        %3163 = vmatpush1.bf16.xpose.msra.mxu0 0
        %3164 = vmatprep.mubr.bf16.mxu0 0
        %3165 = vmatmul.mubr.bf16.gmra.mrb[0].mxu0 %v3127
        %v3166 = vpop.f32.mrb[0].mxu0
        %v3167 = vadd.f32 0.0, %v3166
        %v3168 = vpop.f32.mrb[0].mxu0
        %v3169 = vpop.f32.mrb[0].mxu0
        %v3170 = vpop.f32.mrb[0].mxu0
        %3171 = vdwg.mxu0
        %v3172 = vsel %vm1185, %v3167, -inf
        %3173 = vmax.xlane.f32.xlu0 %v3172
        %v3174 = vpop.xlane.xlu0 %3173
        %v3175 = vsub.f32 %v3167, %v3174
        %v3176 = vmul.f32 %v3175, 1.442695
        %v3177 = vpow.pop %v3176
        %v3178 = vsel %vm1185, %v3177, 0.0
        %3179 = vadd.xlane.f32.xlu0 %v3178
        %v3180 = vpop.xlane.xlu0 %3179
        %v3181 = vpack.c.bf16 %v3177, %v3177
        %3182 = vrot.lane.b32.xlu0 %v2323, 100
        %v3183 = vpop.permute.xlu0 %3182
        %v3185 = vsel %vm1185, %v3181, 0
        %v3188 = vsel %vm1199, %v3183, 0
        %3190 = vmatprep.subr.bf16.mxu0 0
        %3191 = vmatpush1.bf16.msra.mxu0 %v3188
        %3192 = vmatprep.subr.bf16.mxu0 0
        %3193 = vmatpush1.bf16.msra.mxu0 0
        %3194 = vmatprep.subr.bf16.mxu0 0
        %3195 = vmatpush1.bf16.msra.mxu0 0
        %3196 = vmatprep.subr.bf16.mxu0 0
        %3197 = vmatpush1.bf16.msra.mxu0 0
        %3198 = vmatprep.subr.bf16.mxu0 0
        %3199 = vmatpush1.bf16.msra.mxu0 0
        %3200 = vmatprep.subr.bf16.mxu0 0
        %3201 = vmatpush1.bf16.msra.mxu0 0
        %3202 = vmatprep.subr.bf16.mxu0 0
        %3203 = vmatpush1.bf16.msra.mxu0 0
        %3204 = vmatprep.subr.bf16.mxu0 0
        %3205 = vmatpush1.bf16.msra.mxu0 0
        %3206 = vmatprep.subr.bf16.mxu0 0
        %3207 = vmatpush1.bf16.msra.mxu0 0
        %3208 = vmatprep.subr.bf16.mxu0 0
        %3209 = vmatpush1.bf16.msra.mxu0 0
        %3210 = vmatprep.subr.bf16.mxu0 0
        %3211 = vmatpush1.bf16.msra.mxu0 0
        %3212 = vmatprep.subr.bf16.mxu0 0
        %3213 = vmatpush1.bf16.msra.mxu0 0
        %3214 = vmatprep.subr.bf16.mxu0 0
        %3215 = vmatpush1.bf16.msra.mxu0 0
        %3216 = vmatprep.subr.bf16.mxu0 0
        %3217 = vmatpush1.bf16.msra.mxu0 0
        %3218 = vmatprep.subr.bf16.mxu0 0
        %3219 = vmatpush1.bf16.msra.mxu0 0
        %3220 = vmatprep.subr.bf16.mxu0 0
        %3221 = vmatpush1.bf16.msra.mxu0 0
        %3222 = vmatprep.mubr.bf16.mxu0 0
        %3223 = vmatmul.mubr.bf16.gmra.mrb[0].mxu0 %v3185
        %v3224 = vpop.f32.mrb[0].mxu0
        %v3225 = vadd.f32 0.0, %v3224
        %v3226 = vpop.f32.mrb[0].mxu0
        %v3227 = vpop.f32.mrb[0].mxu0
        %v3228 = vpop.f32.mrb[0].mxu0
        %3229 = vdwg.mxu0
        %v3230 = vrcp.pop %v3180
        %v3231 = vmul.f32 %v3225, %v3230
        %3233 = vrot.lane.b32.xlu0 %v3231, 28
        %v3234 = vpop.permute.xlu0 %3233
        %3236 = vst.msk [vmem:[#allocation2] sm:$0xff] %vm2059, %v3234
        %v3237 = vld [vmem:[#allocation2] sm:$0xff]
        %v3238 = vpack.c.bf16 %v3237, %v3237
        %v3240 = vlaneseq
        %v3241 = vshrl.u32 %v3240, 7
        %v3242 = vsub.s32 0, %v3241
        %v3243 = vrot.slane %v2166, %v3242
        %v3249 = vunpack.c.l.b16 %v2162
        %v3250 = vunpack.c.l.b16 %v2163
        %v3251 = vunpack.c.l.b16 %v2164
        %v3252 = vunpack.c.l.b16 %v2165
        %v3253 = vpack.c.b16 %v3250, %v3249
        %v3254 = vpack.c.b16 %v3252, %v3251
        %v3258 = vsel %vm909, %v3238, 0
        %3260 = vmatprep.subr.bf16.mxu0 0
        %3261 = vmatpush1.bf16.msra.mxu0 %v3253
        %3262 = vmatprep.subr.bf16.mxu0 0
        %3263 = vmatpush1.bf16.msra.mxu0 %v3254
        %3264 = vmatprep.subr.bf16.mxu0 0
        %3265 = vmatpush1.bf16.msra.mxu0 0
        %3266 = vmatprep.subr.bf16.mxu0 0
        %3267 = vmatpush1.bf16.msra.mxu0 0
        %3268 = vmatprep.subr.bf16.mxu0 0
        %3269 = vmatpush1.bf16.msra.mxu0 0
        %3270 = vmatprep.subr.bf16.mxu0 0
        %3271 = vmatpush1.bf16.msra.mxu0 0
        %3272 = vmatprep.subr.bf16.mxu0 0
        %3273 = vmatpush1.bf16.msra.mxu0 0
        %3274 = vmatprep.subr.bf16.mxu0 0
        %3275 = vmatpush1.bf16.msra.mxu0 0
        %3276 = vmatprep.subr.bf16.mxu0 0
        %3277 = vmatpush1.bf16.msra.mxu0 0
        %3278 = vmatprep.subr.bf16.mxu0 0
        %3279 = vmatpush1.bf16.msra.mxu0 0
        %3280 = vmatprep.subr.bf16.mxu0 0
        %3281 = vmatpush1.bf16.msra.mxu0 0
        %3282 = vmatprep.subr.bf16.mxu0 0
        %3283 = vmatpush1.bf16.msra.mxu0 0
        %3284 = vmatprep.subr.bf16.mxu0 0
        %3285 = vmatpush1.bf16.msra.mxu0 0
        %3286 = vmatprep.subr.bf16.mxu0 0
        %3287 = vmatpush1.bf16.msra.mxu0 0
        %3288 = vmatprep.subr.bf16.mxu0 0
        %3289 = vmatpush1.bf16.msra.mxu0 0
        %3290 = vmatprep.subr.bf16.mxu0 0
        %3291 = vmatpush1.bf16.msra.mxu0 0
        %3292 = vmatprep.mubr.bf16.mxu0 0
        %3293 = vmatmul.mubr.bf16.gmra.mrb[0].mxu0 %v3258
        %v3294 = vpop.f32.mrb[0].mxu0
        %v3295 = vadd.f32 %v3243, %v3294
        %v3296 = vpop.f32.mrb[0].mxu0
        %v3297 = vpop.f32.mrb[0].mxu0
        %v3298 = vpop.f32.mrb[0].mxu0
        %3299 = vdwg.mxu0
        %v3300 = vadd.f32 %v2124, %v3295
        %v3301 = vld [vmem:[%s17] sm:$0x1]
        %v3302 = vld [vmem:[%s18] sm:$0x1]
        %v3303 = vsel %vm909, %v3300, 0.0
        %3304 = vadd.xlane.f32.xlu0 %v3303
        %v3305 = vpop.xlane.xlu0 %3304
        %v3306 = vmul.f32 %v3305, %v913
        %v3307 = vsub.f32 %v3300, %v3306
        %v3308 = vmul.f32 %v3307, %v3307
        %v3309 = vsel %vm909, %v3308, 0.0
        %3310 = vadd.xlane.f32.xlu0 %v3309
        %v3311 = vpop.xlane.xlu0 %3310
        %v3312 = vmul.f32 %v3311, %v913
        %v3313 = vadd.f32 %v3312, 1e-05
        %v3314 = vrsqrt.pop %v3313
        %v3315 = vmul.f32 %v3307, %v3314
        %v3317 = vlaneseq
        %v3318 = vshrl.u32 %v3317, 7
        %v3319 = vsub.s32 0, %v3318
        %v3320 = vrot.slane %v3301, %v3319
        %v3322 = vmul.f32 %v3315, %v3320
        %v3324 = vlaneseq
        %v3325 = vshrl.u32 %v3324, 7
        %v3326 = vsub.s32 0, %v3325
        %v3327 = vrot.slane %v3302, %v3326
        %v3329 = vadd.f32 %v3322, %v3327
        %v3330 = vpack.c.bf16 %v3329, %v3329
        %v3331 = vld [vmem:[%s19] sm:$0xff]
        %v3332 = vld [vmem:[%s19 + $0x8] sm:$0xff]
        %v3333 = vld [vmem:[%s19 + $0x10] sm:$0xff]
        %v3334 = vld [vmem:[%s19 + $0x18] sm:$0xff]
        %v3335 = vld [vmem:[%s20] sm:$0x3]
        %v3337 = vlaneseq
        %v3338 = vshrl.u32 %v3337, 7
        %v3339 = vsub.s32 0, %v3338
        %v3340 = vrot.slane %v3335, %v3339
        %v3341 = vlaneseq
        %v3342 = vshrl.u32 %v3341, 7
        %v3343 = vsub.s32 1, %v3342
        %v3344 = vrot.slane %v3335, %v3343
        %v3351 = vunpack.c.l.b16 %v3331
        %v3352 = vunpack.c.h.b16 %v3331
        %v3353 = vunpack.c.l.b16 %v3332
        %v3354 = vunpack.c.h.b16 %v3332
        %v3355 = vunpack.c.l.b16 %v3333
        %v3356 = vunpack.c.h.b16 %v3333
        %v3357 = vunpack.c.l.b16 %v3334
        %v3358 = vunpack.c.h.b16 %v3334
        %v3359 = vpack.c.b16 %v3353, %v3351
        %v3360 = vpack.c.b16 %v3354, %v3352
        %v3361 = vpack.c.b16 %v3357, %v3355
        %v3362 = vpack.c.b16 %v3358, %v3356
        %v3368 = vsel %vm909, %v3330, 0
        %3370 = vmatprep.subr.bf16.mxu0 %v3360
        %3371 = vmatpush1.bf16.msra.mxu0 %v3359
        %3372 = vmatprep.subr.bf16.mxu0 %v3362
        %3373 = vmatpush1.bf16.msra.mxu0 %v3361
        %3374 = vmatprep.subr.bf16.mxu0 0
        %3375 = vmatpush1.bf16.msra.mxu0 0
        %3376 = vmatprep.subr.bf16.mxu0 0
        %3377 = vmatpush1.bf16.msra.mxu0 0
        %3378 = vmatprep.subr.bf16.mxu0 0
        %3379 = vmatpush1.bf16.msra.mxu0 0
        %3380 = vmatprep.subr.bf16.mxu0 0
        %3381 = vmatpush1.bf16.msra.mxu0 0
        %3382 = vmatprep.subr.bf16.mxu0 0
        %3383 = vmatpush1.bf16.msra.mxu0 0
        %3384 = vmatprep.subr.bf16.mxu0 0
        %3385 = vmatpush1.bf16.msra.mxu0 0
        %3386 = vmatprep.subr.bf16.mxu0 0
        %3387 = vmatpush1.bf16.msra.mxu0 0
        %3388 = vmatprep.subr.bf16.mxu0 0
        %3389 = vmatpush1.bf16.msra.mxu0 0
        %3390 = vmatprep.subr.bf16.mxu0 0
        %3391 = vmatpush1.bf16.msra.mxu0 0
        %3392 = vmatprep.subr.bf16.mxu0 0
        %3393 = vmatpush1.bf16.msra.mxu0 0
        %3394 = vmatprep.subr.bf16.mxu0 0
        %3395 = vmatpush1.bf16.msra.mxu0 0
        %3396 = vmatprep.subr.bf16.mxu0 0
        %3397 = vmatpush1.bf16.msra.mxu0 0
        %3398 = vmatprep.subr.bf16.mxu0 0
        %3399 = vmatpush1.bf16.msra.mxu0 0
        %3400 = vmatprep.subr.bf16.mxu0 0
        %3401 = vmatpush1.bf16.msra.mxu0 0
        %3402 = vmatprep.mubr.bf16.mxu0 0
        %3403 = vmatmul.mubr.bf16.gmra.mrb[0].mxu0 %v3368
        %v3404 = vpop.f32.mrb[0].mxu0
        %v3405 = vadd.f32 %v3340, %v3404
        %v3406 = vpop.f32.mrb[0].mxu0
        %v3407 = vadd.f32 %v3344, %v3406
        %v3408 = vpop.f32.mrb[0].mxu0
        %v3409 = vpop.f32.mrb[0].mxu0
        %3410 = vdwg.mxu0
        %v3411 = vmul.f32 %v3407, 0.5
        %v3412 = vmul.f32 %v3407, 0.70710677
        %v3413 = verf.f32.pop %v3412
        %v3414 = vadd.f32 %v3413, 1.0
        %v3415 = vmul.f32 %v3411, %v3414
        %v3416 = vmul.f32 %v3405, %v3415
        %v3417 = vpack.c.bf16 %v3416, %v3416
        %v3418 = vld [vmem:[%s21] sm:$0xf]
        %v3419 = vld [vmem:[%s21 + $0x4] sm:$0xf]
        %v3420 = vld [vmem:[%s21 + $0x8] sm:$0xf]
        %v3421 = vld [vmem:[%s21 + $0xc] sm:$0xf]
        %v3422 = vld [vmem:[%s21 + $0x10] sm:$0xf]
        %v3423 = vld [vmem:[%s21 + $0x14] sm:$0xf]
        %v3424 = vld [vmem:[%s21 + $0x18] sm:$0xf]
        %v3425 = vld [vmem:[%s21 + $0x1c] sm:$0xf]
        %v3426 = vld [vmem:[%s21 + $0x20] sm:$0xf]
        %v3427 = vld [vmem:[%s21 + $0x24] sm:$0xf]
        %v3428 = vld [vmem:[%s21 + $0x28] sm:$0xf]
        %v3429 = vld [vmem:[%s21 + $0x2c] sm:$0xf]
        %v3430 = vld [vmem:[%s21 + $0x30] sm:$0xf]
        %v3431 = vld [vmem:[%s21 + $0x34] sm:$0xf]
        %v3432 = vld [vmem:[%s21 + $0x38] sm:$0xf]
        %v3433 = vld [vmem:[%s21 + $0x3c] sm:$0xf]
        %v3450 = vunpack.c.l.b16 %v3418
        %v3451 = vunpack.c.l.b16 %v3419
        %v3452 = vunpack.c.l.b16 %v3420
        %v3453 = vunpack.c.l.b16 %v3421
        %v3454 = vunpack.c.l.b16 %v3422
        %v3455 = vunpack.c.l.b16 %v3423
        %v3456 = vunpack.c.l.b16 %v3424
        %v3457 = vunpack.c.l.b16 %v3425
        %v3458 = vunpack.c.l.b16 %v3426
        %v3459 = vunpack.c.l.b16 %v3427
        %v3460 = vunpack.c.l.b16 %v3428
        %v3461 = vunpack.c.l.b16 %v3429
        %v3462 = vunpack.c.l.b16 %v3430
        %v3463 = vunpack.c.l.b16 %v3431
        %v3464 = vunpack.c.l.b16 %v3432
        %v3465 = vunpack.c.l.b16 %v3433
        %v3466 = vpack.c.b16 %v3451, %v3450
        %v3467 = vpack.c.b16 %v3453, %v3452
        %v3468 = vpack.c.b16 %v3455, %v3454
        %v3469 = vpack.c.b16 %v3457, %v3456
        %v3470 = vpack.c.b16 %v3459, %v3458
        %v3471 = vpack.c.b16 %v3461, %v3460
        %v3472 = vpack.c.b16 %v3463, %v3462
        %v3473 = vpack.c.b16 %v3465, %v3464
        %3482 = vmatprep.subr.bf16.mxu0 0
        %3483 = vmatpush1.bf16.msra.mxu0 %v3466
        %3484 = vmatprep.subr.bf16.mxu0 0
        %3485 = vmatpush1.bf16.msra.mxu0 %v3467
        %3486 = vmatprep.subr.bf16.mxu0 0
        %3487 = vmatpush1.bf16.msra.mxu0 %v3468
        %3488 = vmatprep.subr.bf16.mxu0 0
        %3489 = vmatpush1.bf16.msra.mxu0 %v3469
        %3490 = vmatprep.subr.bf16.mxu0 0
        %3491 = vmatpush1.bf16.msra.mxu0 %v3470
        %3492 = vmatprep.subr.bf16.mxu0 0
        %3493 = vmatpush1.bf16.msra.mxu0 %v3471
        %3494 = vmatprep.subr.bf16.mxu0 0
        %3495 = vmatpush1.bf16.msra.mxu0 %v3472
        %3496 = vmatprep.subr.bf16.mxu0 0
        %3497 = vmatpush1.bf16.msra.mxu0 %v3473
        %3498 = vmatprep.subr.bf16.mxu0 0
        %3499 = vmatpush1.bf16.msra.mxu0 0
        %3500 = vmatprep.subr.bf16.mxu0 0
        %3501 = vmatpush1.bf16.msra.mxu0 0
        %3502 = vmatprep.subr.bf16.mxu0 0
        %3503 = vmatpush1.bf16.msra.mxu0 0
        %3504 = vmatprep.subr.bf16.mxu0 0
        %3505 = vmatpush1.bf16.msra.mxu0 0
        %3506 = vmatprep.subr.bf16.mxu0 0
        %3507 = vmatpush1.bf16.msra.mxu0 0
        %3508 = vmatprep.subr.bf16.mxu0 0
        %3509 = vmatpush1.bf16.msra.mxu0 0
        %3510 = vmatprep.subr.bf16.mxu0 0
        %3511 = vmatpush1.bf16.msra.mxu0 0
        %3512 = vmatprep.subr.bf16.mxu0 0
        %3513 = vmatpush1.bf16.msra.mxu0 0
        %3514 = vmatprep.mubr.bf16.mxu0 0
        %3515 = vmatmul.mubr.bf16.gmra.mrb[0].mxu0 %v3417
        %v3516 = vpop.f32.mrb[0].mxu0
        %v3517 = vadd.f32 0.0, %v3516
        %v3518 = vpop.f32.mrb[0].mxu0
        %v3519 = vpop.f32.mrb[0].mxu0
        %v3520 = vpop.f32.mrb[0].mxu0
        %3521 = vdwg.mxu0
        %v3522 = vadd.f32 %v3300, %v3517
        %v3523 = vld [vmem:[%s22] sm:$0x1]
        %v3525 = vlaneseq
        %v3526 = vshrl.u32 %v3525, 7
        %v3527 = vsub.s32 0, %v3526
        %v3528 = vrot.slane %v3523, %v3527
        %v3530 = vadd.f32 %v3522, %v3528
        %3531 = vst.msk [vmem:[%s887] sm:$0xff] %vm909, %v3530
        %s3532 = sand.u32 %s565, 1
        %s3533 = scalar_lea.sflag [#allocation5], %s3532
        %s3534 = sand.u32 %s565, 1
        %s3535 = smul.addr %s3534, 8
        %s3536 = scalar_lea.vmem [#allocation20], %s3535
        // Predicated region
        $region153: #{tpu_custom_call.1} parent=111 // pred_check
          %p3537 = pneg %p575
        $region154: #{tpu_custom_call.1} parent=111 // pred_check_branch
          %3539 = sbr.rel (%p3537) target = $region156
        $region155: #{tpu_custom_call.1} parent=111 // pred_region
          %s3541 = ssub.s32 128, 128
          %3542 = vsyncadd %s3533, %s3541
          %s3543 = sadd.s32 %s48, %s47
          %s3544 = smul.addr %s3543, 128
          %s3545 = scalar_lea.hbm %s23, %s3544
          %s3547 = sshll.u32 %s3536, 4
          %s3548 = int_to_ptr.vmem [resolvable:$true] %s3547
          %3550 = dma.vmem_to_hbm [thread:$0]  %s3548, 128, %s3545, %s3533
        $region156: #{tpu_custom_call.1} parent=111 // pred_fallthru
          _
      $region112: #{tpu_custom_call.1} parent=5 // pred_fallthru
        _
      %p3551 = scmp.le.s32.totalorder 2, %s38
      // Predicated region
      $region157: #{tpu_custom_call.1} parent=5 // pred_check
        %p3552 = pneg %p3551
      $region158: #{tpu_custom_call.1} parent=5 // pred_check_branch
        %3554 = sbr.rel (%p3552) target = $region160
      $region159: #{tpu_custom_call.1} parent=5 // pred_region
        %s3555 = ssub.s32 %s38, 2
        // Predicated region
        $region161: #{tpu_custom_call.1} parent=159 // pred_check
          %p3556 = pneg %p581
        $region162: #{tpu_custom_call.1} parent=159 // pred_check_branch
          %3558 = sbr.rel (%p3556) target = $region164
        $region163: #{tpu_custom_call.1} parent=159 // pred_region
          %s3559 = sand.u32 %s566, 1
          %s3560 = scalar_lea.sflag [#allocation5], %s3559
          %s3561 = sand.u32 %s566, 1
          %s3562 = smul.addr %s3561, 8
          %s3563 = scalar_lea.vmem [#allocation20], %s3562
          %3564 = dma.done %s3560, 128
        $region164: #{tpu_custom_call.1} parent=159 // pred_fallthru
          _
      $region160: #{tpu_custom_call.1} parent=5 // pred_fallthru
        _
    $region6: #{tpu_custom_call.1} parent=1 // loop_footer
      %s42 = sadd.s32 1, %s38
    $region7: #{tpu_custom_call.1} parent=1 // loop_footer_branch
      %37 = sbr.rel target = $region3
    $region8: #{tpu_custom_call.1} parent=1 // loop_exit
      _
    %3565 = vsyncpa [#allocation4], 1
    %s3566 = scalar_lea.sflag [#allocation4], 1
    %3567 = vsyncpa %s3566, 1
    %3568 = vsyncpa [#allocation7], 1
    %3569 = vsyncpa [#allocation10], 1
    %3570 = vsyncpa [#allocation13], 1
    %3571 = vsyncpa [#allocation16], 1
    %3572 = vsyncpa [#allocation19], 1
    %3573 = vsyncpa [#allocation5], 1
    %s3574 = scalar_lea.sflag [#allocation5], 1
    %3575 = vsyncpa %s3574, 1

</llo_original>
